<compile_context>
chip_gen: v6e
topology: v6e:2x2x1
jax: 0.10.0
libtpu: 0.0.40
codegen_flags: <defaults>
</compile_context>

<pallas_src>
import math
import functools

import jax
import jax.numpy as jnp
from jax.experimental import pallas as pl
from jax.experimental.pallas import tpu as pltpu

D_MODEL = 32
HEADS = 4
D_K = D_MODEL // HEADS
D_FF = 2048          # FeedForward default d_ff=2048
EPS = 1e-6


def _norm_torchstyle(x, alpha, bias):
    # torch Norm: alpha * (x - mean) / (std_unbiased + eps) + bias
    n = x.shape[-1]
    mean = jnp.mean(x, axis=-1, keepdims=True)
    var = jnp.sum((x - mean) ** 2, axis=-1, keepdims=True) * (1.0 / (n - 1))  # unbiased
    inv = pl.reciprocal(jnp.sqrt(var) + EPS, approx=False)
    return alpha * (x - mean) * inv + bias


def decoder_layer_kernel(x_ref, bias_ref,
                         wqkv_ref, bqkv_ref, wo_ref, bo_ref,
                         a1_ref, c1_ref, a2_ref, c2_ref,
                         w1_ref, bf1_ref, w2_ref, bf2_ref,
                         out_ref, *, B, S):
    x = x_ref[...]                      # (B*S, D) flattened rows
    bias = bias_ref[...]                # (B, S, S) additive attention-mask bias (f32)
    wo = wo_ref[...]                    # hoisted; sliced per head below

    # ---- norm_1 ----
    x2 = _norm_torchstyle(x, a1_ref[...], c1_ref[...])

    # ---- fused QKV projection (Wq/bq pre-scaled by 1/sqrt(d_k) in the wrapper) ----
    qkv = jnp.dot(x2, wqkv_ref[...], preferred_element_type=jnp.float32) + bqkv_ref[...]
    q = qkv[:, 0 * D_MODEL:1 * D_MODEL].reshape(B, S, D_MODEL)
    k = qkv[:, 1 * D_MODEL:2 * D_MODEL].reshape(B, S, D_MODEL)
    v = qkv[:, 2 * D_MODEL:3 * D_MODEL].reshape(B, S, D_MODEL)

    # ---- multi-head self-attention ----
    # TODO(synk): fully batching the heads (one B*H-batched contraction pair + a single
    # softmax pass) needs a (B,S,H,Dk)->(B*H,S,Dk) restack whose Mosaic relayout at
    # Dk=8 is not guaranteed to lower; attention is ~3% of layer FLOPs, so the static
    # H=4 loop over batched-over-B contractions is kept for robustness.
    attn = None
    for h in range(HEADS):
        lo = h * D_K
        qh = q[:, :, lo:lo + D_K]
        kh = k[:, :, lo:lo + D_K]
        vh = v[:, :, lo:lo + D_K]
        s = jnp.einsum("bqd,bkd->bqk", qh, kh,
                       preferred_element_type=jnp.float32) + bias
        s = s - jnp.max(s, axis=-1, keepdims=True)
        p = jnp.exp(s)
        p = p * pl.reciprocal(jnp.sum(p, axis=-1, keepdims=True), approx=False)
        oh = jnp.einsum("bqk,bkd->bqd", p, vh,
                        preferred_element_type=jnp.float32).reshape(B * S, D_K)
        # WO folded per head: no lane-axis concat of head outputs, same MXU pass count.
        contrib = jnp.dot(oh, wo[lo:lo + D_K, :], preferred_element_type=jnp.float32)
        attn = contrib if attn is None else attn + contrib
    attn = attn + bo_ref[...]

    # dropout_1 / dropout_2 are identity (inference semantics)
    x = x + attn

    # ---- norm_2 + feed-forward ----
    x2 = _norm_torchstyle(x, a2_ref[...], c2_ref[...])
    h1 = jnp.maximum(
        jnp.dot(x2, w1_ref[...], preferred_element_type=jnp.float32) + bf1_ref[...], 0.0)
    ff = jnp.dot(h1, w2_ref[...], preferred_element_type=jnp.float32) + bf2_ref[...]

    out_ref[...] = x + ff


def decoder_layer(x, mask, params):
    B, S, D = x.shape
    scale = 1.0 / math.sqrt(D_K)
    # Fuse QKV weights; fold the attention scale into the Q projection.
    wqkv = jnp.concatenate([params["wq"] * scale, params["wk"], params["wv"]], axis=1)
    bqkv = jnp.concatenate([params["bq"] * scale, params["bk"], params["bv"]], axis=1)
    # Additive attention-mask bias precomputed outside the kernel: one f32 operand,
    # no in-kernel int compare or per-head select.
    mask_bias = jnp.where(mask == 0, jnp.float32(-10000.0), jnp.float32(0.0))
    weights = (wqkv, bqkv, params["wo"], params["bo"],
               params["a1"], params["c1"], params["a2"], params["c2"],
               params["w1"], params["bf1"], params["w2"], params["bf2"])

    # Single gridless invocation: every operand is a whole-array VMEM block, so weights
    # are fetched once, matmul M = B*S, and there is no per-step pipeline overhead --
    # the right structure while the kernel is launch/weight-DMA bound at this shape.
    # TODO(synk): the dominant wall-clock cost at B*S=16 is weight HBM traffic + fixed
    # per-call overhead; amortizing it needs context above a single DecoderLayer
    # (fuse several layers / token micro-batches into one pallas_call, or a cross-call
    # weight prefetch via a semaphore+VMEM-ref output consumed by the next call).
    # TODO(synk): when B*S scales, add a leading row-block grid axis marked "parallel"
    # (v7x dual TensorCore), tile D_FF with an f32 accumulator, size tiles 128-aligned
    # (v5e) / 256-aligned (v6e/v7x) and within v7x's 64 MiB VMEM / v5e's 16 MiB scoped
    # default, and present a lane-dense (multiple-of-128 last dim) output slab.
    out2d = pl.pallas_call(
        functools.partial(decoder_layer_kernel, B=B, S=S),
        out_shape=jax.ShapeDtypeStruct((B * S, D), jnp.float32),
        compiler_params=pltpu.CompilerParams(vmem_limit_bytes=32 * 1024 * 1024),
    )(x.reshape(B * S, D), mask_bias, *weights)
    return out2d.reshape(B, S, D)


def init_params(key):
    ks = jax.random.split(key, 6)

    def lin(k, din, dout):
        kw, kb = jax.random.split(k)
        w = jax.random.normal(kw, (din, dout), jnp.float32) * 0.02
        b = jax.random.normal(kb, (1, dout), jnp.float32) * 0.02
        return w, b

    wq, bq = lin(ks[0], D_MODEL, D_MODEL)
    wk, bk = lin(ks[1], D_MODEL, D_MODEL)
    wv, bv = lin(ks[2], D_MODEL, D_MODEL)
    wo, bo = lin(ks[3], D_MODEL, D_MODEL)
    w1, bf1 = lin(ks[4], D_MODEL, D_FF)
    w2, bf2 = lin(ks[5], D_FF, D_MODEL)
    return {
        "wq": wq, "bq": bq, "wk": wk, "bk": bk, "wv": wv, "bv": bv,
        "wo": wo, "bo": bo,
        "a1": jnp.ones((1, D_MODEL), jnp.float32),
        "c1": jnp.zeros((1, D_MODEL), jnp.float32),
        "a2": jnp.ones((1, D_MODEL), jnp.float32),
        "c2": jnp.zeros((1, D_MODEL), jnp.float32),
        "w1": w1, "bf1": bf1, "w2": w2, "bf2": bf2,
    }


def reference(x, mask, p):
    """Pure-JAX mirror of the PyTorch forward (dropout = identity)."""
    B, S, D = x.shape

    def norm(x, a, b):
        mean = jnp.mean(x, axis=-1, keepdims=True)
        var = jnp.sum((x - mean) ** 2, axis=-1, keepdims=True) / (D - 1)
        return a * (x - mean) / (jnp.sqrt(var) + EPS) + b

    x2 = norm(x, p["a1"], p["c1"])
    q = (x2 @ p["wq"] + p["bq"]).reshape(B, S, HEADS, D_K).transpose(0, 2, 1, 3)
    k = (x2 @ p["wk"] + p["bk"]).reshape(B, S, HEADS, D_K).transpose(0, 2, 1, 3)
    v = (x2 @ p["wv"] + p["bv"]).reshape(B, S, HEADS, D_K).transpose(0, 2, 1, 3)
    scores = jnp.einsum("bhqd,bhkd->bhqk", q, k) / math.sqrt(D_K)
    scores = jnp.where(mask[:, None] == 0, -10000.0, scores)
    scores = jax.nn.softmax(scores, axis=-1)
    out = jnp.einsum("bhqk,bhkd->bhqd", scores, v)
    out = out.transpose(0, 2, 1, 3).reshape(B, S, D)
    attn = out @ p["wo"] + p["bo"]
    x = x + attn
    x2 = norm(x, p["a2"], p["c2"])
    ff = jnp.maximum(x2 @ p["w1"] + p["bf1"], 0.0) @ p["w2"] + p["bf2"]
    return x + ff


if __name__ == "__main__":
    key = jax.random.PRNGKey(0)
    kx, kp = jax.random.split(key)
    B, S = 2, 8
    x = jax.random.normal(kx, (B, S, D_MODEL), jnp.float32)
    mask = jnp.broadcast_to(jnp.tril(jnp.ones((S, S), jnp.int32)), (B, S, S))
    params = init_params(kp)

    out = decoder_layer(x, mask, params)
    jax.block_until_ready(out)

    ref = reference(x, mask, params)
    assert out.shape == (B, S, D_MODEL)
    assert jnp.allclose(out, ref, rtol=1e-4, atol=1e-4), "Pallas output mismatch vs reference"
    print("KERNEL_OK")
</pallas_src>

<mosaic_0001>
module attributes {stable_mosaic.version = 11 : i64} {
  func.func @decoder_layer_kernel(%arg0: memref<16x32xf32, #tpu.memory_space<vmem>>, %arg1: memref<2x8x8xf32, #tpu.memory_space<vmem>>, %arg2: memref<32x96xf32, #tpu.memory_space<vmem>>, %arg3: memref<1x96xf32, #tpu.memory_space<vmem>>, %arg4: memref<32x32xf32, #tpu.memory_space<vmem>>, %arg5: memref<1x32xf32, #tpu.memory_space<vmem>>, %arg6: memref<1x32xf32, #tpu.memory_space<vmem>>, %arg7: memref<1x32xf32, #tpu.memory_space<vmem>>, %arg8: memref<1x32xf32, #tpu.memory_space<vmem>>, %arg9: memref<1x32xf32, #tpu.memory_space<vmem>>, %arg10: memref<32x2048xf32, #tpu.memory_space<vmem>>, %arg11: memref<1x2048xf32, #tpu.memory_space<vmem>>, %arg12: memref<2048x32xf32, #tpu.memory_space<vmem>>, %arg13: memref<1x32xf32, #tpu.memory_space<vmem>>, %arg14: memref<16x32xf32, #tpu.memory_space<vmem>>) attributes {dimension_semantics = [], scalar_prefetch = 0 : i64, scratch_operands = 0 : i64, tpu.core_type = #tpu.core_type<tc>} {
    %c0 = arith.constant 0 : index
    %c0_0 = arith.constant 0 : index
    %0 = vector.load %arg0[%c0, %c0_0] : memref<16x32xf32, #tpu.memory_space<vmem>>, vector<16x32xf32>
    %c0_1 = arith.constant 0 : index
    %c0_2 = arith.constant 0 : index
    %c0_3 = arith.constant 0 : index
    %1 = vector.load %arg1[%c0_1, %c0_2, %c0_3] : memref<2x8x8xf32, #tpu.memory_space<vmem>>, vector<2x8x8xf32>
    %c0_4 = arith.constant 0 : index
    %c0_5 = arith.constant 0 : index
    %2 = vector.load %arg4[%c0_4, %c0_5] : memref<32x32xf32, #tpu.memory_space<vmem>>, vector<32x32xf32>
    %c0_6 = arith.constant 0 : index
    %c0_7 = arith.constant 0 : index
    %3 = vector.load %arg6[%c0_6, %c0_7] : memref<1x32xf32, #tpu.memory_space<vmem>>, vector<1x32xf32>
    %c0_8 = arith.constant 0 : index
    %c0_9 = arith.constant 0 : index
    %4 = vector.load %arg7[%c0_8, %c0_9] : memref<1x32xf32, #tpu.memory_space<vmem>>, vector<1x32xf32>
    %cst = arith.constant dense<0.000000e+00> : vector<16xf32>
    %5 = vector.multi_reduction <add>, %0, %cst [1] : vector<16x32xf32> to vector<16xf32>
    %6 = vector.shape_cast %5 : vector<16xf32> to vector<16x1xf32>
    %cst_10 = arith.constant 3.200000e+01 : f32
    %7 = vector.broadcast %cst_10 : f32 to vector<16x1xf32>
    %8 = arith.divf %6, %7 : vector<16x1xf32>
    %9 = vector.broadcast %8 : vector<16x1xf32> to vector<16x32xf32>
    %10 = arith.subf %0, %9 : vector<16x32xf32>
    %11 = arith.mulf %10, %10 : vector<16x32xf32>
    %cst_11 = arith.constant dense<0.000000e+00> : vector<16xf32>
    %12 = vector.multi_reduction <add>, %11, %cst_11 [1] : vector<16x32xf32> to vector<16xf32>
    %13 = vector.shape_cast %12 : vector<16xf32> to vector<16x1xf32>
    %cst_12 = arith.constant 0.0322580636 : f32
    %14 = vector.broadcast %cst_12 : f32 to vector<16x1xf32>
    %15 = arith.mulf %13, %14 : vector<16x1xf32>
    %16 = math.sqrt %15 : vector<16x1xf32>
    %cst_13 = arith.constant 9.99999997E-7 : f32
    %17 = vector.broadcast %cst_13 : f32 to vector<16x1xf32>
    %18 = arith.addf %16, %17 : vector<16x1xf32>
    %19 = tpu.reciprocal %18 : vector<16x1xf32> -> vector<16x1xf32>
    %20 = vector.broadcast %8 : vector<16x1xf32> to vector<16x32xf32>
    %21 = arith.subf %0, %20 : vector<16x32xf32>
    %22 = vector.broadcast %3 : vector<1x32xf32> to vector<16x32xf32>
    %23 = arith.mulf %22, %21 : vector<16x32xf32>
    %24 = vector.broadcast %19 : vector<16x1xf32> to vector<16x32xf32>
    %25 = arith.mulf %23, %24 : vector<16x32xf32>
    %26 = vector.broadcast %4 : vector<1x32xf32> to vector<16x32xf32>
    %27 = arith.addf %25, %26 : vector<16x32xf32>
    %c0_14 = arith.constant 0 : index
    %c0_15 = arith.constant 0 : index
    %28 = vector.load %arg2[%c0_14, %c0_15] : memref<32x96xf32, #tpu.memory_space<vmem>>, vector<32x96xf32>
    %cst_16 = arith.constant dense<0.000000e+00> : vector<16x96xf32>
    %29 = tpu.matmul %27, %28, %cst_16 {dimension_numbers = #tpu.dot_dimension_numbers<[1], [0], [0], [1], [0, 0, 1, 1], [], []>} : vector<16x32xf32>, vector<32x96xf32>, vector<16x96xf32> -> vector<16x96xf32>
    %c0_17 = arith.constant 0 : index
    %c0_18 = arith.constant 0 : index
    %30 = vector.load %arg3[%c0_17, %c0_18] : memref<1x96xf32, #tpu.memory_space<vmem>>, vector<1x96xf32>
    %31 = vector.broadcast %30 : vector<1x96xf32> to vector<16x96xf32>
    %32 = arith.addf %29, %31 : vector<16x96xf32>
    %33 = vector.extract_strided_slice %32 {offsets = [0, 0], sizes = [16, 32], strides = [1, 1]} : vector<16x96xf32> to vector<16x32xf32>
    %34 = vector.shape_cast %33 : vector<16x32xf32> to vector<2x8x32xf32>
    %35 = vector.extract_strided_slice %32 {offsets = [0, 32], sizes = [16, 32], strides = [1, 1]} : vector<16x96xf32> to vector<16x32xf32>
    %36 = vector.shape_cast %35 : vector<16x32xf32> to vector<2x8x32xf32>
    %37 = vector.extract_strided_slice %32 {offsets = [0, 64], sizes = [16, 32], strides = [1, 1]} : vector<16x96xf32> to vector<16x32xf32>
    %38 = vector.shape_cast %37 : vector<16x32xf32> to vector<2x8x32xf32>
    %39 = vector.extract_strided_slice %34 {offsets = [0, 0, 0], sizes = [2, 8, 8], strides = [1, 1, 1]} : vector<2x8x32xf32> to vector<2x8x8xf32>
    %40 = vector.extract_strided_slice %36 {offsets = [0, 0, 0], sizes = [2, 8, 8], strides = [1, 1, 1]} : vector<2x8x32xf32> to vector<2x8x8xf32>
    %41 = vector.extract_strided_slice %38 {offsets = [0, 0, 0], sizes = [2, 8, 8], strides = [1, 1, 1]} : vector<2x8x32xf32> to vector<2x8x8xf32>
    "tpu.trace_start"() <{level = 10 : i32, message = "bqd,bkd->bqk"}> : () -> ()
    %cst_19 = arith.constant dense<0.000000e+00> : vector<2x8x8xf32>
    %42 = tpu.matmul %39, %40, %cst_19 {dimension_numbers = #tpu.dot_dimension_numbers<[2], [2], [1], [1], [0, 0, 0, 1, 1, 1], [0], [0]>} : vector<2x8x8xf32>, vector<2x8x8xf32>, vector<2x8x8xf32> -> vector<2x8x8xf32>
    "tpu.trace_stop"() : () -> ()
    %43 = arith.addf %42, %1 : vector<2x8x8xf32>
    %cst_20 = arith.constant dense<0xFF800000> : vector<2x8xf32>
    %44 = vector.multi_reduction <maximumf>, %43, %cst_20 [2] : vector<2x8x8xf32> to vector<2x8xf32>
    %45 = vector.shape_cast %44 : vector<2x8xf32> to vector<2x8x1xf32>
    %46 = vector.broadcast %45 : vector<2x8x1xf32> to vector<2x8x8xf32>
    %47 = arith.subf %43, %46 : vector<2x8x8xf32>
    %48 = math.exp %47 : vector<2x8x8xf32>
    %cst_21 = arith.constant dense<0.000000e+00> : vector<2x8xf32>
    %49 = vector.multi_reduction <add>, %48, %cst_21 [2] : vector<2x8x8xf32> to vector<2x8xf32>
    %50 = vector.shape_cast %49 : vector<2x8xf32> to vector<2x8x1xf32>
    %51 = tpu.reciprocal %50 : vector<2x8x1xf32> -> vector<2x8x1xf32>
    %52 = vector.broadcast %51 : vector<2x8x1xf32> to vector<2x8x8xf32>
    %53 = arith.mulf %48, %52 : vector<2x8x8xf32>
    "tpu.trace_start"() <{level = 10 : i32, message = "bqk,bkd->bqd"}> : () -> ()
    %cst_22 = arith.constant dense<0.000000e+00> : vector<2x8x8xf32>
    %54 = tpu.matmul %53, %41, %cst_22 {dimension_numbers = #tpu.dot_dimension_numbers<[2], [1], [1], [2], [0, 0, 0, 1, 1, 2], [0], [0]>} : vector<2x8x8xf32>, vector<2x8x8xf32>, vector<2x8x8xf32> -> vector<2x8x8xf32>
    "tpu.trace_stop"() : () -> ()
    %55 = vector.shape_cast %54 : vector<2x8x8xf32> to vector<16x8xf32>
    %56 = vector.extract_strided_slice %2 {offsets = [0, 0], sizes = [8, 32], strides = [1, 1]} : vector<32x32xf32> to vector<8x32xf32>
    %cst_23 = arith.constant dense<0.000000e+00> : vector<16x32xf32>
    %57 = tpu.matmul %55, %56, %cst_23 {dimension_numbers = #tpu.dot_dimension_numbers<[1], [0], [0], [1], [0, 0, 1, 1], [], []>} : vector<16x8xf32>, vector<8x32xf32>, vector<16x32xf32> -> vector<16x32xf32>
    %58 = vector.extract_strided_slice %34 {offsets = [0, 0, 8], sizes = [2, 8, 8], strides = [1, 1, 1]} : vector<2x8x32xf32> to vector<2x8x8xf32>
    %59 = vector.extract_strided_slice %36 {offsets = [0, 0, 8], sizes = [2, 8, 8], strides = [1, 1, 1]} : vector<2x8x32xf32> to vector<2x8x8xf32>
    %60 = vector.extract_strided_slice %38 {offsets = [0, 0, 8], sizes = [2, 8, 8], strides = [1, 1, 1]} : vector<2x8x32xf32> to vector<2x8x8xf32>
    "tpu.trace_start"() <{level = 10 : i32, message = "bqd,bkd->bqk"}> : () -> ()
    %cst_24 = arith.constant dense<0.000000e+00> : vector<2x8x8xf32>
    %61 = tpu.matmul %58, %59, %cst_24 {dimension_numbers = #tpu.dot_dimension_numbers<[2], [2], [1], [1], [0, 0, 0, 1, 1, 1], [0], [0]>} : vector<2x8x8xf32>, vector<2x8x8xf32>, vector<2x8x8xf32> -> vector<2x8x8xf32>
    "tpu.trace_stop"() : () -> ()
    %62 = arith.addf %61, %1 : vector<2x8x8xf32>
    %cst_25 = arith.constant dense<0xFF800000> : vector<2x8xf32>
    %63 = vector.multi_reduction <maximumf>, %62, %cst_25 [2] : vector<2x8x8xf32> to vector<2x8xf32>
    %64 = vector.shape_cast %63 : vector<2x8xf32> to vector<2x8x1xf32>
    %65 = vector.broadcast %64 : vector<2x8x1xf32> to vector<2x8x8xf32>
    %66 = arith.subf %62, %65 : vector<2x8x8xf32>
    %67 = math.exp %66 : vector<2x8x8xf32>
    %cst_26 = arith.constant dense<0.000000e+00> : vector<2x8xf32>
    %68 = vector.multi_reduction <add>, %67, %cst_26 [2] : vector<2x8x8xf32> to vector<2x8xf32>
    %69 = vector.shape_cast %68 : vector<2x8xf32> to vector<2x8x1xf32>
    %70 = tpu.reciprocal %69 : vector<2x8x1xf32> -> vector<2x8x1xf32>
    %71 = vector.broadcast %70 : vector<2x8x1xf32> to vector<2x8x8xf32>
    %72 = arith.mulf %67, %71 : vector<2x8x8xf32>
    "tpu.trace_start"() <{level = 10 : i32, message = "bqk,bkd->bqd"}> : () -> ()
    %cst_27 = arith.constant dense<0.000000e+00> : vector<2x8x8xf32>
    %73 = tpu.matmul %72, %60, %cst_27 {dimension_numbers = #tpu.dot_dimension_numbers<[2], [1], [1], [2], [0, 0, 0, 1, 1, 2], [0], [0]>} : vector<2x8x8xf32>, vector<2x8x8xf32>, vector<2x8x8xf32> -> vector<2x8x8xf32>
    "tpu.trace_stop"() : () -> ()
    %74 = vector.shape_cast %73 : vector<2x8x8xf32> to vector<16x8xf32>
    %75 = vector.extract_strided_slice %2 {offsets = [8, 0], sizes = [8, 32], strides = [1, 1]} : vector<32x32xf32> to vector<8x32xf32>
    %cst_28 = arith.constant dense<0.000000e+00> : vector<16x32xf32>
    %76 = tpu.matmul %74, %75, %cst_28 {dimension_numbers = #tpu.dot_dimension_numbers<[1], [0], [0], [1], [0, 0, 1, 1], [], []>} : vector<16x8xf32>, vector<8x32xf32>, vector<16x32xf32> -> vector<16x32xf32>
    %77 = arith.addf %57, %76 : vector<16x32xf32>
    %78 = vector.extract_strided_slice %34 {offsets = [0, 0, 16], sizes = [2, 8, 8], strides = [1, 1, 1]} : vector<2x8x32xf32> to vector<2x8x8xf32>
    %79 = vector.extract_strided_slice %36 {offsets = [0, 0, 16], sizes = [2, 8, 8], strides = [1, 1, 1]} : vector<2x8x32xf32> to vector<2x8x8xf32>
    %80 = vector.extract_strided_slice %38 {offsets = [0, 0, 16], sizes = [2, 8, 8], strides = [1, 1, 1]} : vector<2x8x32xf32> to vector<2x8x8xf32>
    "tpu.trace_start"() <{level = 10 : i32, message = "bqd,bkd->bqk"}> : () -> ()
    %cst_29 = arith.constant dense<0.000000e+00> : vector<2x8x8xf32>
    %81 = tpu.matmul %78, %79, %cst_29 {dimension_numbers = #tpu.dot_dimension_numbers<[2], [2], [1], [1], [0, 0, 0, 1, 1, 1], [0], [0]>} : vector<2x8x8xf32>, vector<2x8x8xf32>, vector<2x8x8xf32> -> vector<2x8x8xf32>
    "tpu.trace_stop"() : () -> ()
    %82 = arith.addf %81, %1 : vector<2x8x8xf32>
    %cst_30 = arith.constant dense<0xFF800000> : vector<2x8xf32>
    %83 = vector.multi_reduction <maximumf>, %82, %cst_30 [2] : vector<2x8x8xf32> to vector<2x8xf32>
    %84 = vector.shape_cast %83 : vector<2x8xf32> to vector<2x8x1xf32>
    %85 = vector.broadcast %84 : vector<2x8x1xf32> to vector<2x8x8xf32>
    %86 = arith.subf %82, %85 : vector<2x8x8xf32>
    %87 = math.exp %86 : vector<2x8x8xf32>
    %cst_31 = arith.constant dense<0.000000e+00> : vector<2x8xf32>
    %88 = vector.multi_reduction <add>, %87, %cst_31 [2] : vector<2x8x8xf32> to vector<2x8xf32>
    %89 = vector.shape_cast %88 : vector<2x8xf32> to vector<2x8x1xf32>
    %90 = tpu.reciprocal %89 : vector<2x8x1xf32> -> vector<2x8x1xf32>
    %91 = vector.broadcast %90 : vector<2x8x1xf32> to vector<2x8x8xf32>
    %92 = arith.mulf %87, %91 : vector<2x8x8xf32>
    "tpu.trace_start"() <{level = 10 : i32, message = "bqk,bkd->bqd"}> : () -> ()
    %cst_32 = arith.constant dense<0.000000e+00> : vector<2x8x8xf32>
    %93 = tpu.matmul %92, %80, %cst_32 {dimension_numbers = #tpu.dot_dimension_numbers<[2], [1], [1], [2], [0, 0, 0, 1, 1, 2], [0], [0]>} : vector<2x8x8xf32>, vector<2x8x8xf32>, vector<2x8x8xf32> -> vector<2x8x8xf32>
    "tpu.trace_stop"() : () -> ()
    %94 = vector.shape_cast %93 : vector<2x8x8xf32> to vector<16x8xf32>
    %95 = vector.extract_strided_slice %2 {offsets = [16, 0], sizes = [8, 32], strides = [1, 1]} : vector<32x32xf32> to vector<8x32xf32>
    %cst_33 = arith.constant dense<0.000000e+00> : vector<16x32xf32>
    %96 = tpu.matmul %94, %95, %cst_33 {dimension_numbers = #tpu.dot_dimension_numbers<[1], [0], [0], [1], [0, 0, 1, 1], [], []>} : vector<16x8xf32>, vector<8x32xf32>, vector<16x32xf32> -> vector<16x32xf32>
    %97 = arith.addf %77, %96 : vector<16x32xf32>
    %98 = vector.extract_strided_slice %34 {offsets = [0, 0, 24], sizes = [2, 8, 8], strides = [1, 1, 1]} : vector<2x8x32xf32> to vector<2x8x8xf32>
    %99 = vector.extract_strided_slice %36 {offsets = [0, 0, 24], sizes = [2, 8, 8], strides = [1, 1, 1]} : vector<2x8x32xf32> to vector<2x8x8xf32>
    %100 = vector.extract_strided_slice %38 {offsets = [0, 0, 24], sizes = [2, 8, 8], strides = [1, 1, 1]} : vector<2x8x32xf32> to vector<2x8x8xf32>
    "tpu.trace_start"() <{level = 10 : i32, message = "bqd,bkd->bqk"}> : () -> ()
    %cst_34 = arith.constant dense<0.000000e+00> : vector<2x8x8xf32>
    %101 = tpu.matmul %98, %99, %cst_34 {dimension_numbers = #tpu.dot_dimension_numbers<[2], [2], [1], [1], [0, 0, 0, 1, 1, 1], [0], [0]>} : vector<2x8x8xf32>, vector<2x8x8xf32>, vector<2x8x8xf32> -> vector<2x8x8xf32>
    "tpu.trace_stop"() : () -> ()
    %102 = arith.addf %101, %1 : vector<2x8x8xf32>
    %cst_35 = arith.constant dense<0xFF800000> : vector<2x8xf32>
    %103 = vector.multi_reduction <maximumf>, %102, %cst_35 [2] : vector<2x8x8xf32> to vector<2x8xf32>
    %104 = vector.shape_cast %103 : vector<2x8xf32> to vector<2x8x1xf32>
    %105 = vector.broadcast %104 : vector<2x8x1xf32> to vector<2x8x8xf32>
    %106 = arith.subf %102, %105 : vector<2x8x8xf32>
    %107 = math.exp %106 : vector<2x8x8xf32>
    %cst_36 = arith.constant dense<0.000000e+00> : vector<2x8xf32>
    %108 = vector.multi_reduction <add>, %107, %cst_36 [2] : vector<2x8x8xf32> to vector<2x8xf32>
    %109 = vector.shape_cast %108 : vector<2x8xf32> to vector<2x8x1xf32>
    %110 = tpu.reciprocal %109 : vector<2x8x1xf32> -> vector<2x8x1xf32>
    %111 = vector.broadcast %110 : vector<2x8x1xf32> to vector<2x8x8xf32>
    %112 = arith.mulf %107, %111 : vector<2x8x8xf32>
    "tpu.trace_start"() <{level = 10 : i32, message = "bqk,bkd->bqd"}> : () -> ()
    %cst_37 = arith.constant dense<0.000000e+00> : vector<2x8x8xf32>
    %113 = tpu.matmul %112, %100, %cst_37 {dimension_numbers = #tpu.dot_dimension_numbers<[2], [1], [1], [2], [0, 0, 0, 1, 1, 2], [0], [0]>} : vector<2x8x8xf32>, vector<2x8x8xf32>, vector<2x8x8xf32> -> vector<2x8x8xf32>
    "tpu.trace_stop"() : () -> ()
    %114 = vector.shape_cast %113 : vector<2x8x8xf32> to vector<16x8xf32>
    %115 = vector.extract_strided_slice %2 {offsets = [24, 0], sizes = [8, 32], strides = [1, 1]} : vector<32x32xf32> to vector<8x32xf32>
    %cst_38 = arith.constant dense<0.000000e+00> : vector<16x32xf32>
    %116 = tpu.matmul %114, %115, %cst_38 {dimension_numbers = #tpu.dot_dimension_numbers<[1], [0], [0], [1], [0, 0, 1, 1], [], []>} : vector<16x8xf32>, vector<8x32xf32>, vector<16x32xf32> -> vector<16x32xf32>
    %117 = arith.addf %97, %116 : vector<16x32xf32>
    %c0_39 = arith.constant 0 : index
    %c0_40 = arith.constant 0 : index
    %118 = vector.load %arg5[%c0_39, %c0_40] : memref<1x32xf32, #tpu.memory_space<vmem>>, vector<1x32xf32>
    %119 = vector.broadcast %118 : vector<1x32xf32> to vector<16x32xf32>
    %120 = arith.addf %117, %119 : vector<16x32xf32>
    %121 = arith.addf %0, %120 : vector<16x32xf32>
    %c0_41 = arith.constant 0 : index
    %c0_42 = arith.constant 0 : index
    %122 = vector.load %arg8[%c0_41, %c0_42] : memref<1x32xf32, #tpu.memory_space<vmem>>, vector<1x32xf32>
    %c0_43 = arith.constant 0 : index
    %c0_44 = arith.constant 0 : index
    %123 = vector.load %arg9[%c0_43, %c0_44] : memref<1x32xf32, #tpu.memory_space<vmem>>, vector<1x32xf32>
    %cst_45 = arith.constant dense<0.000000e+00> : vector<16xf32>
    %124 = vector.multi_reduction <add>, %121, %cst_45 [1] : vector<16x32xf32> to vector<16xf32>
    %125 = vector.shape_cast %124 : vector<16xf32> to vector<16x1xf32>
    %cst_46 = arith.constant 3.200000e+01 : f32
    %126 = vector.broadcast %cst_46 : f32 to vector<16x1xf32>
    %127 = arith.divf %125, %126 : vector<16x1xf32>
    %128 = vector.broadcast %127 : vector<16x1xf32> to vector<16x32xf32>
    %129 = arith.subf %121, %128 : vector<16x32xf32>
    %130 = arith.mulf %129, %129 : vector<16x32xf32>
    %cst_47 = arith.constant dense<0.000000e+00> : vector<16xf32>
    %131 = vector.multi_reduction <add>, %130, %cst_47 [1] : vector<16x32xf32> to vector<16xf32>
    %132 = vector.shape_cast %131 : vector<16xf32> to vector<16x1xf32>
    %cst_48 = arith.constant 0.0322580636 : f32
    %133 = vector.broadcast %cst_48 : f32 to vector<16x1xf32>
    %134 = arith.mulf %132, %133 : vector<16x1xf32>
    %135 = math.sqrt %134 : vector<16x1xf32>
    %cst_49 = arith.constant 9.99999997E-7 : f32
    %136 = vector.broadcast %cst_49 : f32 to vector<16x1xf32>
    %137 = arith.addf %135, %136 : vector<16x1xf32>
    %138 = tpu.reciprocal %137 : vector<16x1xf32> -> vector<16x1xf32>
    %139 = vector.broadcast %127 : vector<16x1xf32> to vector<16x32xf32>
    %140 = arith.subf %121, %139 : vector<16x32xf32>
    %141 = vector.broadcast %122 : vector<1x32xf32> to vector<16x32xf32>
    %142 = arith.mulf %141, %140 : vector<16x32xf32>
    %143 = vector.broadcast %138 : vector<16x1xf32> to vector<16x32xf32>
    %144 = arith.mulf %142, %143 : vector<16x32xf32>
    %145 = vector.broadcast %123 : vector<1x32xf32> to vector<16x32xf32>
    %146 = arith.addf %144, %145 : vector<16x32xf32>
    %c0_50 = arith.constant 0 : index
    %c0_51 = arith.constant 0 : index
    %147 = vector.load %arg10[%c0_50, %c0_51] : memref<32x2048xf32, #tpu.memory_space<vmem>>, vector<32x2048xf32>
    %cst_52 = arith.constant dense<0.000000e+00> : vector<16x2048xf32>
    %148 = tpu.matmul %146, %147, %cst_52 {dimension_numbers = #tpu.dot_dimension_numbers<[1], [0], [0], [1], [0, 0, 1, 1], [], []>} : vector<16x32xf32>, vector<32x2048xf32>, vector<16x2048xf32> -> vector<16x2048xf32>
    %c0_53 = arith.constant 0 : index
    %c0_54 = arith.constant 0 : index
    %149 = vector.load %arg11[%c0_53, %c0_54] : memref<1x2048xf32, #tpu.memory_space<vmem>>, vector<1x2048xf32>
    %150 = vector.broadcast %149 : vector<1x2048xf32> to vector<16x2048xf32>
    %151 = arith.addf %148, %150 : vector<16x2048xf32>
    %cst_55 = arith.constant 0.000000e+00 : f32
    %152 = vector.broadcast %cst_55 : f32 to vector<16x2048xf32>
    %153 = arith.maximumf %151, %152 : vector<16x2048xf32>
    %c0_56 = arith.constant 0 : index
    %c0_57 = arith.constant 0 : index
    %154 = vector.load %arg12[%c0_56, %c0_57] : memref<2048x32xf32, #tpu.memory_space<vmem>>, vector<2048x32xf32>
    %cst_58 = arith.constant dense<0.000000e+00> : vector<16x32xf32>
    %155 = tpu.matmul %153, %154, %cst_58 {dimension_numbers = #tpu.dot_dimension_numbers<[1], [0], [0], [1], [0, 0, 1, 1], [], []>} : vector<16x2048xf32>, vector<2048x32xf32>, vector<16x32xf32> -> vector<16x32xf32>
    %c0_59 = arith.constant 0 : index
    %c0_60 = arith.constant 0 : index
    %156 = vector.load %arg13[%c0_59, %c0_60] : memref<1x32xf32, #tpu.memory_space<vmem>>, vector<1x32xf32>
    %157 = vector.broadcast %156 : vector<1x32xf32> to vector<16x32xf32>
    %158 = arith.addf %155, %157 : vector<16x32xf32>
    %159 = arith.addf %121, %158 : vector<16x32xf32>
    %c0_61 = arith.constant 0 : index
    %c0_62 = arith.constant 0 : index
    %160 = vector.load %arg14[%c0_61, %c0_62] : memref<16x32xf32, #tpu.memory_space<vmem>>, vector<16x32xf32>
    tpu.vector_store %arg14[%c0_61, %c0_62], %159 {strides = array<i32>} : memref<16x32xf32, #tpu.memory_space<vmem>>, vector<16x32xf32>,
    return
  }
}

</mosaic_0001>

<llo_original>
// kernel: tpu_custom_call.1
$region0: #{tpu_custom_call.1}
  #allocation0 [shape = 'u32[]', space=smem, size = 0x4, offset = 0x4, fixed_abs, tag = 'smem constant byte address 0x4 - core index']
  #allocation1 [shape = 'u32[144,128]{1,0:T(1,128)}', space=vmem, size = 0x12000, scoped, tag = 'internal scratch']
  %s0 = inlined_call_operand.vmem [shape: f32[16,32], index: 0, kind: input, shape index: {}]
  %s1 = inlined_call_operand.vmem [shape: f32[2,8,8], index: 1, kind: input, shape index: {}]
  %s2 = inlined_call_operand.vmem [shape: f32[32,96], index: 2, kind: input, shape index: {}]
  %s3 = inlined_call_operand.vmem [shape: f32[1,96], index: 3, kind: input, shape index: {}]
  %s4 = inlined_call_operand.vmem [shape: f32[32,32], index: 4, kind: input, shape index: {}]
  %s5 = inlined_call_operand.vmem [shape: f32[1,32], index: 5, kind: input, shape index: {}]
  %s6 = inlined_call_operand.vmem [shape: f32[1,32], index: 6, kind: input, shape index: {}]
  %s7 = inlined_call_operand.vmem [shape: f32[1,32], index: 7, kind: input, shape index: {}]
  %s8 = inlined_call_operand.vmem [shape: f32[1,32], index: 8, kind: input, shape index: {}]
  %s9 = inlined_call_operand.vmem [shape: f32[1,32], index: 9, kind: input, shape index: {}]
  %s10 = inlined_call_operand.vmem [shape: f32[32,2048], index: 10, kind: input, shape index: {}]
  %s11 = inlined_call_operand.vmem [shape: f32[1,2048], index: 11, kind: input, shape index: {}]
  %s12 = inlined_call_operand.vmem [shape: f32[2048,32], index: 12, kind: input, shape index: {}]
  %s13 = inlined_call_operand.vmem [shape: f32[1,32], index: 13, kind: input, shape index: {}]
  %s14 = inlined_call_operand.hbm [shape: f32[16,32], index: 14, kind: output, shape index: {}]
  %s15 = sld [smem:[#allocation0]]
  $region66: #{tpu_custom_call.1} parent=0
    _
  %s17 = ssub.s32 1, %s15
  %s18 = scalar_select 0, %s17, %s15
  $region1: #{tpu_custom_call.1} parent=0
    #allocation2 [shape = 'u8[8192]{0}', space=vmem, size = 0x2000, scoped, tag = 'output window, operand 0, single buffered']
    #allocation3 [shape = 's32[1]{0}', space=sflag, size = 0x4, scoped, tag = 'scoped memory for tpu_custom_call.1']
    %19 = vsyncpa [#allocation3], 0
    // Predicated region
    $region2: #{tpu_custom_call.1} parent=1 // pred_check
      _
    $region3: #{tpu_custom_call.1} parent=1 // pred_check_branch
      %21 = sbr.rel (0) target = $region5
    $region4: #{tpu_custom_call.1} parent=1 // pred_region
      _
    $region5: #{tpu_custom_call.1} parent=1 // pred_fallthru
      _
    // Predicated region
    $region6: #{tpu_custom_call.1} parent=1 // pred_check
      _
    $region7: #{tpu_custom_call.1} parent=1 // pred_check_branch
      %23 = sbr.rel (0) target = $region9
    $region8: #{tpu_custom_call.1} parent=1 // pred_region
      _
    $region9: #{tpu_custom_call.1} parent=1 // pred_fallthru
      _
    // Predicated region
    $region10: #{tpu_custom_call.1} parent=1 // pred_check
      _
    $region11: #{tpu_custom_call.1} parent=1 // pred_check_branch
      %25 = sbr.rel (0) target = $region13
    $region12: #{tpu_custom_call.1} parent=1 // pred_region
      _
    $region13: #{tpu_custom_call.1} parent=1 // pred_fallthru
      _
    // Predicated region
    $region14: #{tpu_custom_call.1} parent=1 // pred_check
      _
    $region15: #{tpu_custom_call.1} parent=1 // pred_check_branch
      %27 = sbr.rel (0) target = $region17
    $region16: #{tpu_custom_call.1} parent=1 // pred_region
      _
    $region17: #{tpu_custom_call.1} parent=1 // pred_fallthru
      _
    // Predicated region
    $region18: #{tpu_custom_call.1} parent=1 // pred_check
      _
    $region19: #{tpu_custom_call.1} parent=1 // pred_check_branch
      %29 = sbr.rel (0) target = $region21
    $region20: #{tpu_custom_call.1} parent=1 // pred_region
      _
    $region21: #{tpu_custom_call.1} parent=1 // pred_fallthru
      _
    // Predicated region
    $region22: #{tpu_custom_call.1} parent=1 // pred_check
      _
    $region23: #{tpu_custom_call.1} parent=1 // pred_check_branch
      %31 = sbr.rel (0) target = $region25
    $region24: #{tpu_custom_call.1} parent=1 // pred_region
      _
    $region25: #{tpu_custom_call.1} parent=1 // pred_fallthru
      _
    // Predicated region
    $region26: #{tpu_custom_call.1} parent=1 // pred_check
      _
    $region27: #{tpu_custom_call.1} parent=1 // pred_check_branch
      %33 = sbr.rel (0) target = $region29
    $region28: #{tpu_custom_call.1} parent=1 // pred_region
      _
    $region29: #{tpu_custom_call.1} parent=1 // pred_fallthru
      _
    // Predicated region
    $region30: #{tpu_custom_call.1} parent=1 // pred_check
      _
    $region31: #{tpu_custom_call.1} parent=1 // pred_check_branch
      %35 = sbr.rel (0) target = $region33
    $region32: #{tpu_custom_call.1} parent=1 // pred_region
      _
    $region33: #{tpu_custom_call.1} parent=1 // pred_fallthru
      _
    // Predicated region
    $region34: #{tpu_custom_call.1} parent=1 // pred_check
      _
    $region35: #{tpu_custom_call.1} parent=1 // pred_check_branch
      %37 = sbr.rel (0) target = $region37
    $region36: #{tpu_custom_call.1} parent=1 // pred_region
      _
    $region37: #{tpu_custom_call.1} parent=1 // pred_fallthru
      _
    // Predicated region
    $region38: #{tpu_custom_call.1} parent=1 // pred_check
      _
    $region39: #{tpu_custom_call.1} parent=1 // pred_check_branch
      %39 = sbr.rel (0) target = $region41
    $region40: #{tpu_custom_call.1} parent=1 // pred_region
      _
    $region41: #{tpu_custom_call.1} parent=1 // pred_fallthru
      _
    // Predicated region
    $region42: #{tpu_custom_call.1} parent=1 // pred_check
      _
    $region43: #{tpu_custom_call.1} parent=1 // pred_check_branch
      %41 = sbr.rel (0) target = $region45
    $region44: #{tpu_custom_call.1} parent=1 // pred_region
      _
    $region45: #{tpu_custom_call.1} parent=1 // pred_fallthru
      _
    // Predicated region
    $region46: #{tpu_custom_call.1} parent=1 // pred_check
      _
    $region47: #{tpu_custom_call.1} parent=1 // pred_check_branch
      %43 = sbr.rel (0) target = $region49
    $region48: #{tpu_custom_call.1} parent=1 // pred_region
      _
    $region49: #{tpu_custom_call.1} parent=1 // pred_fallthru
      _
    // Predicated region
    $region50: #{tpu_custom_call.1} parent=1 // pred_check
      _
    $region51: #{tpu_custom_call.1} parent=1 // pred_check_branch
      %45 = sbr.rel (0) target = $region53
    $region52: #{tpu_custom_call.1} parent=1 // pred_region
      _
    $region53: #{tpu_custom_call.1} parent=1 // pred_fallthru
      _
    // Predicated region
    $region54: #{tpu_custom_call.1} parent=1 // pred_check
      _
    $region55: #{tpu_custom_call.1} parent=1 // pred_check_branch
      %47 = sbr.rel (0) target = $region57
    $region56: #{tpu_custom_call.1} parent=1 // pred_region
      _
    $region57: #{tpu_custom_call.1} parent=1 // pred_fallthru
      _
    %v48 = vld [vmem:[%s0] sm:$0xff]
    %v49 = vld [vmem:[%s0 + $0x8] sm:$0xff]
    %v50 = vld [vmem:[%s1] sm:$0xff]
    %v51 = vld [vmem:[%s1 + $0x8] sm:$0xff]
    %v52 = vld [vmem:[%s4] sm:$0xff]
    %v53 = vld [vmem:[%s4 + $0x8] sm:$0xff]
    %v54 = vld [vmem:[%s4 + $0x10] sm:$0xff]
    %v55 = vld [vmem:[%s4 + $0x18] sm:$0xff]
    %v56 = vld [vmem:[%s6] sm:$0x1]
    %v57 = vld [vmem:[%s7] sm:$0x1]
    %vm58 = vcmask 261120
    %v59 = vsel %vm58, %v48, 0.0
    %60 = vadd.xlane.f32.xlu0 %v59
    %v61 = vpop.xlane.xlu0 %60
    %v62 = vsel %vm58, %v49, 0.0
    %63 = vadd.xlane.f32.xlu0 %v62
    %v64 = vpop.xlane.xlu0 %63
    %v65 = vrcp.pop 32.0
    %v66 = vmul.f32 %v61, %v65
    %v67 = vmul.f32 %v64, %v65
    %v68 = vsub.f32 %v48, %v66
    %v69 = vsub.f32 %v49, %v67
    %v70 = vmul.f32 %v68, %v68
    %v71 = vmul.f32 %v69, %v69
    %v72 = vsel %vm58, %v70, 0.0
    %73 = vadd.xlane.f32.xlu0 %v72
    %v74 = vpop.xlane.xlu0 %73
    %v75 = vsel %vm58, %v71, 0.0
    %76 = vadd.xlane.f32.xlu0 %v75
    %v77 = vpop.xlane.xlu0 %76
    %v78 = vmul.f32 %v74, 0.032258064
    %v79 = vmul.f32 %v77, 0.032258064
    %v80 = vrsqrt.pop %v78
    %v81 = vmul.f32 %v78, %v80
    %vm82 = vcmp.eq.f32.partialorder %v78, inf
    %v83 = vsel %vm82, %v78, %v81
    %vm84 = vcmp.eq.f32.partialorder %v78, 0.0
    %v85 = vand.u32 %v78, 2147483648
    %v86 = vsel %vm84, %v85, %v83
    %v87 = vrsqrt.pop %v79
    %v88 = vmul.f32 %v79, %v87
    %vm89 = vcmp.eq.f32.partialorder %v79, inf
    %v90 = vsel %vm89, %v79, %v88
    %vm91 = vcmp.eq.f32.partialorder %v79, 0.0
    %v92 = vand.u32 %v79, 2147483648
    %v93 = vsel %vm91, %v92, %v90
    %v94 = vadd.f32 %v86, 1e-06
    %v95 = vadd.f32 %v93, 1e-06
    %v96 = vrcp.pop %v94
    %v97 = vrcp.pop %v95
    %v99 = vlaneseq
    %v100 = vshrl.u32 %v99, 7
    %v101 = vsub.s32 0, %v100
    %v102 = vrot.slane %v56, %v101
    %v104 = vmul.f32 %v102, %v68
    %v105 = vmul.f32 %v102, %v69
    %v106 = vmul.f32 %v104, %v96
    %v107 = vmul.f32 %v105, %v97
    %v109 = vlaneseq
    %v110 = vshrl.u32 %v109, 7
    %v111 = vsub.s32 0, %v110
    %v112 = vrot.slane %v57, %v111
    %v114 = vadd.f32 %v106, %v112
    %v115 = vadd.f32 %v107, %v112
    %v116 = vld [vmem:[%s2] sm:$0xff]
    %v117 = vld [vmem:[%s2 + $0x8] sm:$0xff]
    %v118 = vld [vmem:[%s2 + $0x10] sm:$0xff]
    %v119 = vld [vmem:[%s2 + $0x18] sm:$0xff]
    %v120 = vld [vmem:[%s3] sm:$0x1]
    %v122 = vlaneseq
    %v123 = vshrl.u32 %v122, 7
    %v124 = vsub.s32 0, %v123
    %v125 = vrot.slane %v120, %v124
    %v128 = vsel %vm58, %v114, 0
    %v131 = vsel %vm58, %v115, 0
    %133 = vmatprep.subr.mxu0 0.0
    %134 = vmatpush1.msra.mxu0 0.0
    %135 = vmatprep.subr.mxu0 0.0
    %136 = vmatpush1.msra.mxu0 0.0
    %137 = vmatprep.subr.mxu0 0.0
    %138 = vmatpush1.msra.mxu0 0.0
    %139 = vmatprep.subr.mxu0 0.0
    %140 = vmatpush1.msra.mxu0 0.0
    %141 = vmatprep.subr.mxu0 0.0
    %142 = vmatpush1.msra.mxu0 0.0
    %143 = vmatprep.subr.mxu0 0.0
    %144 = vmatpush1.msra.mxu0 0.0
    %145 = vmatprep.subr.mxu0 0.0
    %146 = vmatpush1.msra.mxu0 0.0
    %147 = vmatprep.subr.mxu0 0.0
    %148 = vmatpush1.msra.mxu0 0.0
    %149 = vmatprep.subr.mxu0 0.0
    %150 = vmatpush1.msra.mxu0 0.0
    %151 = vmatprep.subr.mxu0 0.0
    %152 = vmatpush1.msra.mxu0 0.0
    %153 = vmatprep.subr.mxu0 0.0
    %154 = vmatpush1.msra.mxu0 0.0
    %155 = vmatprep.subr.mxu0 0.0
    %156 = vmatpush1.msra.mxu0 0.0
    %157 = vmatprep.subr.mxu0 0.0
    %158 = vmatpush1.msra.mxu0 %v119
    %159 = vmatprep.subr.mxu0 0.0
    %160 = vmatpush1.msra.mxu0 %v118
    %161 = vmatprep.subr.mxu0 0.0
    %162 = vmatpush1.msra.mxu0 %v117
    %163 = vmatprep.subr.mxu0 0.0
    %164 = vmatpush1.msra.mxu0 %v116
    %165 = vmatprep.subr.mxu0 0.0
    %166 = vmatpush2.msra.mxu0 0.0
    %167 = vmatprep.subr.mxu0 0.0
    %168 = vmatpush2.msra.mxu0 0.0
    %169 = vmatprep.subr.mxu0 0.0
    %170 = vmatpush2.msra.mxu0 0.0
    %171 = vmatprep.subr.mxu0 0.0
    %172 = vmatpush2.msra.mxu0 0.0
    %173 = vmatprep.subr.mxu0 0.0
    %174 = vmatpush2.msra.mxu0 0.0
    %175 = vmatprep.subr.mxu0 0.0
    %176 = vmatpush2.msra.mxu0 0.0
    %177 = vmatprep.subr.mxu0 0.0
    %178 = vmatpush2.msra.mxu0 0.0
    %179 = vmatprep.subr.mxu0 0.0
    %180 = vmatpush2.msra.mxu0 0.0
    %181 = vmatprep.subr.mxu0 0.0
    %182 = vmatpush2.msra.mxu0 0.0
    %183 = vmatprep.subr.mxu0 0.0
    %184 = vmatpush2.msra.mxu0 0.0
    %185 = vmatprep.subr.mxu0 0.0
    %186 = vmatpush2.msra.mxu0 0.0
    %187 = vmatprep.subr.mxu0 0.0
    %188 = vmatpush2.msra.mxu0 0.0
    %189 = vmatprep.subr.mxu0 0.0
    %190 = vmatpush2.msra.mxu0 0.0
    %191 = vmatprep.subr.mxu0 0.0
    %192 = vmatpush2.msra.mxu0 0.0
    %193 = vmatprep.subr.mxu0 0.0
    %194 = vmatpush2.msra.mxu0 0.0
    %195 = vmatprep.subr.mxu0 0.0
    %196 = vmatpush2.msra.mxu0 0.0
    %197 = vmatprep.mubr.f32.mxu0 0.0
    %198 = vmatmul.mubr.f32.gmra.mxu0 %v128
    %v199 = vpop.f32.mrf.mxu0
    %v200 = vadd.f32 %v125, %v199
    %v201 = vpop.f32.mrf.mxu0
    %202 = vmatprep.mubr.f32.mxu0 0.0
    %203 = vmatmul.mubr.f32.gmra.mxu0 %v131
    %v204 = vpop.f32.mrf.mxu0
    %v205 = vadd.f32 %v125, %v204
    %v206 = vpop.f32.mrf.mxu0
    %207 = vdwg.mxu0
    %209 = vrot.lane.b32.xlu0 %v200, 96
    %v210 = vpop.permute.xlu0 %209
    %vm211 = vcmask 64512
    %v212 = vsel %vm211, %v200, 0
    %v214 = vsel %vm211, %v210, 0
    %216 = vmatprep.subr.mxu0 0.0
    %217 = vmatpush1.xpose.msra.mxu0 0.0
    %218 = vmatprep.subr.mxu0 0.0
    %219 = vmatpush1.xpose.msra.mxu0 0.0
    %220 = vmatprep.subr.mxu0 0.0
    %221 = vmatpush1.xpose.msra.mxu0 0.0
    %222 = vmatprep.subr.mxu0 0.0
    %223 = vmatpush1.xpose.msra.mxu0 0.0
    %224 = vmatprep.subr.mxu0 0.0
    %225 = vmatpush1.xpose.msra.mxu0 0.0
    %226 = vmatprep.subr.mxu0 0.0
    %227 = vmatpush1.xpose.msra.mxu0 0.0
    %228 = vmatprep.subr.mxu0 0.0
    %229 = vmatpush1.xpose.msra.mxu0 0.0
    %230 = vmatprep.subr.mxu0 0.0
    %231 = vmatpush1.xpose.msra.mxu0 0.0
    %232 = vmatprep.subr.mxu0 0.0
    %233 = vmatpush1.xpose.msra.mxu0 0.0
    %234 = vmatprep.subr.mxu0 0.0
    %235 = vmatpush1.xpose.msra.mxu0 0.0
    %236 = vmatprep.subr.mxu0 0.0
    %237 = vmatpush1.xpose.msra.mxu0 0.0
    %238 = vmatprep.subr.mxu0 0.0
    %239 = vmatpush1.xpose.msra.mxu0 0.0
    %240 = vmatprep.subr.mxu0 0.0
    %241 = vmatpush1.xpose.msra.mxu0 0.0
    %242 = vmatprep.subr.mxu0 0.0
    %243 = vmatpush1.xpose.msra.mxu0 0.0
    %244 = vmatprep.subr.mxu0 0.0
    %245 = vmatpush1.xpose.msra.mxu0 0.0
    %246 = vmatprep.subr.mxu0 0.0
    %247 = vmatpush1.xpose.msra.mxu0 %v214
    %248 = vmatprep.subr.mxu0 0.0
    %249 = vmatpush2.xpose.msra.mxu0 0.0
    %250 = vmatprep.subr.mxu0 0.0
    %251 = vmatpush2.xpose.msra.mxu0 0.0
    %252 = vmatprep.subr.mxu0 0.0
    %253 = vmatpush2.xpose.msra.mxu0 0.0
    %254 = vmatprep.subr.mxu0 0.0
    %255 = vmatpush2.xpose.msra.mxu0 0.0
    %256 = vmatprep.subr.mxu0 0.0
    %257 = vmatpush2.xpose.msra.mxu0 0.0
    %258 = vmatprep.subr.mxu0 0.0
    %259 = vmatpush2.xpose.msra.mxu0 0.0
    %260 = vmatprep.subr.mxu0 0.0
    %261 = vmatpush2.xpose.msra.mxu0 0.0
    %262 = vmatprep.subr.mxu0 0.0
    %263 = vmatpush2.xpose.msra.mxu0 0.0
    %264 = vmatprep.subr.mxu0 0.0
    %265 = vmatpush2.xpose.msra.mxu0 0.0
    %266 = vmatprep.subr.mxu0 0.0
    %267 = vmatpush2.xpose.msra.mxu0 0.0
    %268 = vmatprep.subr.mxu0 0.0
    %269 = vmatpush2.xpose.msra.mxu0 0.0
    %270 = vmatprep.subr.mxu0 0.0
    %271 = vmatpush2.xpose.msra.mxu0 0.0
    %272 = vmatprep.subr.mxu0 0.0
    %273 = vmatpush2.xpose.msra.mxu0 0.0
    %274 = vmatprep.subr.mxu0 0.0
    %275 = vmatpush2.xpose.msra.mxu0 0.0
    %276 = vmatprep.subr.mxu0 0.0
    %277 = vmatpush2.xpose.msra.mxu0 0.0
    %278 = vmatprep.subr.mxu0 0.0
    %279 = vmatpush2.xpose.msra.mxu0 0.0
    %280 = vmatprep.mubr.f32.mxu0 0.0
    %281 = vmatmul.mubr.f32.gmra.mxu0 %v212
    %v282 = vpop.f32.mrf.mxu0
    %v283 = vadd.f32 %v50, %v282
    %v284 = vpop.f32.mrf.mxu0
    %285 = vdwg.mxu0
    %287 = vrot.lane.b32.xlu0 %v205, 96
    %v288 = vpop.permute.xlu0 %287
    %v289 = vsel %vm211, %v205, 0
    %v291 = vsel %vm211, %v288, 0
    %293 = vmatprep.subr.mxu0 0.0
    %294 = vmatpush1.xpose.msra.mxu0 0.0
    %295 = vmatprep.subr.mxu0 0.0
    %296 = vmatpush1.xpose.msra.mxu0 0.0
    %297 = vmatprep.subr.mxu0 0.0
    %298 = vmatpush1.xpose.msra.mxu0 0.0
    %299 = vmatprep.subr.mxu0 0.0
    %300 = vmatpush1.xpose.msra.mxu0 0.0
    %301 = vmatprep.subr.mxu0 0.0
    %302 = vmatpush1.xpose.msra.mxu0 0.0
    %303 = vmatprep.subr.mxu0 0.0
    %304 = vmatpush1.xpose.msra.mxu0 0.0
    %305 = vmatprep.subr.mxu0 0.0
    %306 = vmatpush1.xpose.msra.mxu0 0.0
    %307 = vmatprep.subr.mxu0 0.0
    %308 = vmatpush1.xpose.msra.mxu0 0.0
    %309 = vmatprep.subr.mxu0 0.0
    %310 = vmatpush1.xpose.msra.mxu0 0.0
    %311 = vmatprep.subr.mxu0 0.0
    %312 = vmatpush1.xpose.msra.mxu0 0.0
    %313 = vmatprep.subr.mxu0 0.0
    %314 = vmatpush1.xpose.msra.mxu0 0.0
    %315 = vmatprep.subr.mxu0 0.0
    %316 = vmatpush1.xpose.msra.mxu0 0.0
    %317 = vmatprep.subr.mxu0 0.0
    %318 = vmatpush1.xpose.msra.mxu0 0.0
    %319 = vmatprep.subr.mxu0 0.0
    %320 = vmatpush1.xpose.msra.mxu0 0.0
    %321 = vmatprep.subr.mxu0 0.0
    %322 = vmatpush1.xpose.msra.mxu0 0.0
    %323 = vmatprep.subr.mxu0 0.0
    %324 = vmatpush1.xpose.msra.mxu0 %v291
    %325 = vmatprep.subr.mxu0 0.0
    %326 = vmatpush2.xpose.msra.mxu0 0.0
    %327 = vmatprep.subr.mxu0 0.0
    %328 = vmatpush2.xpose.msra.mxu0 0.0
    %329 = vmatprep.subr.mxu0 0.0
    %330 = vmatpush2.xpose.msra.mxu0 0.0
    %331 = vmatprep.subr.mxu0 0.0
    %332 = vmatpush2.xpose.msra.mxu0 0.0
    %333 = vmatprep.subr.mxu0 0.0
    %334 = vmatpush2.xpose.msra.mxu0 0.0
    %335 = vmatprep.subr.mxu0 0.0
    %336 = vmatpush2.xpose.msra.mxu0 0.0
    %337 = vmatprep.subr.mxu0 0.0
    %338 = vmatpush2.xpose.msra.mxu0 0.0
    %339 = vmatprep.subr.mxu0 0.0
    %340 = vmatpush2.xpose.msra.mxu0 0.0
    %341 = vmatprep.subr.mxu0 0.0
    %342 = vmatpush2.xpose.msra.mxu0 0.0
    %343 = vmatprep.subr.mxu0 0.0
    %344 = vmatpush2.xpose.msra.mxu0 0.0
    %345 = vmatprep.subr.mxu0 0.0
    %346 = vmatpush2.xpose.msra.mxu0 0.0
    %347 = vmatprep.subr.mxu0 0.0
    %348 = vmatpush2.xpose.msra.mxu0 0.0
    %349 = vmatprep.subr.mxu0 0.0
    %350 = vmatpush2.xpose.msra.mxu0 0.0
    %351 = vmatprep.subr.mxu0 0.0
    %352 = vmatpush2.xpose.msra.mxu0 0.0
    %353 = vmatprep.subr.mxu0 0.0
    %354 = vmatpush2.xpose.msra.mxu0 0.0
    %355 = vmatprep.subr.mxu0 0.0
    %356 = vmatpush2.xpose.msra.mxu0 0.0
    %357 = vmatprep.mubr.f32.mxu0 0.0
    %358 = vmatmul.mubr.f32.gmra.mxu0 %v289
    %v359 = vpop.f32.mrf.mxu0
    %v360 = vadd.f32 %v51, %v359
    %v361 = vpop.f32.mrf.mxu0
    %362 = vdwg.mxu0
    %v363 = vsel %vm211, %v283, -inf
    %364 = vmax.xlane.f32.xlu0 %v363
    %v365 = vpop.xlane.xlu0 %364
    %v366 = vsel %vm211, %v360, -inf
    %367 = vmax.xlane.f32.xlu0 %v366
    %v368 = vpop.xlane.xlu0 %367
    %v369 = vsub.f32 %v283, %v365
    %v370 = vsub.f32 %v360, %v368
    %v371 = vmul.f32 %v369, 1.442695
    %v372 = vpow.pop %v371
    %v373 = vmul.f32 %v370, 1.442695
    %v374 = vpow.pop %v373
    %v375 = vsel %vm211, %v372, 0.0
    %376 = vadd.xlane.f32.xlu0 %v375
    %v377 = vpop.xlane.xlu0 %376
    %v378 = vsel %vm211, %v374, 0.0
    %379 = vadd.xlane.f32.xlu0 %v378
    %v380 = vpop.xlane.xlu0 %379
    %v381 = vrcp.pop %v377
    %v382 = vrcp.pop %v380
    %v383 = vmul.f32 %v372, %v381
    %v384 = vmul.f32 %v374, %v382
    %385 = vrot.lane.b32.xlu0 %v200, 64
    %v386 = vpop.permute.xlu0 %385
    %v389 = vsel %vm211, %v383, 0
    %391 = vmatprep.subr.mxu0 0.0
    %392 = vmatpush1.msra.mxu0 0.0
    %393 = vmatprep.subr.mxu0 0.0
    %394 = vmatpush1.msra.mxu0 0.0
    %395 = vmatprep.subr.mxu0 0.0
    %396 = vmatpush1.msra.mxu0 0.0
    %397 = vmatprep.subr.mxu0 0.0
    %398 = vmatpush1.msra.mxu0 0.0
    %399 = vmatprep.subr.mxu0 0.0
    %400 = vmatpush1.msra.mxu0 0.0
    %401 = vmatprep.subr.mxu0 0.0
    %402 = vmatpush1.msra.mxu0 0.0
    %403 = vmatprep.subr.mxu0 0.0
    %404 = vmatpush1.msra.mxu0 0.0
    %405 = vmatprep.subr.mxu0 0.0
    %406 = vmatpush1.msra.mxu0 0.0
    %407 = vmatprep.subr.mxu0 0.0
    %408 = vmatpush1.msra.mxu0 0.0
    %409 = vmatprep.subr.mxu0 0.0
    %410 = vmatpush1.msra.mxu0 0.0
    %411 = vmatprep.subr.mxu0 0.0
    %412 = vmatpush1.msra.mxu0 0.0
    %413 = vmatprep.subr.mxu0 0.0
    %414 = vmatpush1.msra.mxu0 0.0
    %415 = vmatprep.subr.mxu0 0.0
    %416 = vmatpush1.msra.mxu0 0.0
    %417 = vmatprep.subr.mxu0 0.0
    %418 = vmatpush1.msra.mxu0 0.0
    %419 = vmatprep.subr.mxu0 0.0
    %420 = vmatpush1.msra.mxu0 0.0
    %421 = vmatprep.subr.mxu0 0.0
    %422 = vmatpush1.msra.mxu0 %v386
    %423 = vmatprep.subr.mxu0 0.0
    %424 = vmatpush2.msra.mxu0 0.0
    %425 = vmatprep.subr.mxu0 0.0
    %426 = vmatpush2.msra.mxu0 0.0
    %427 = vmatprep.subr.mxu0 0.0
    %428 = vmatpush2.msra.mxu0 0.0
    %429 = vmatprep.subr.mxu0 0.0
    %430 = vmatpush2.msra.mxu0 0.0
    %431 = vmatprep.subr.mxu0 0.0
    %432 = vmatpush2.msra.mxu0 0.0
    %433 = vmatprep.subr.mxu0 0.0
    %434 = vmatpush2.msra.mxu0 0.0
    %435 = vmatprep.subr.mxu0 0.0
    %436 = vmatpush2.msra.mxu0 0.0
    %437 = vmatprep.subr.mxu0 0.0
    %438 = vmatpush2.msra.mxu0 0.0
    %439 = vmatprep.subr.mxu0 0.0
    %440 = vmatpush2.msra.mxu0 0.0
    %441 = vmatprep.subr.mxu0 0.0
    %442 = vmatpush2.msra.mxu0 0.0
    %443 = vmatprep.subr.mxu0 0.0
    %444 = vmatpush2.msra.mxu0 0.0
    %445 = vmatprep.subr.mxu0 0.0
    %446 = vmatpush2.msra.mxu0 0.0
    %447 = vmatprep.subr.mxu0 0.0
    %448 = vmatpush2.msra.mxu0 0.0
    %449 = vmatprep.subr.mxu0 0.0
    %450 = vmatpush2.msra.mxu0 0.0
    %451 = vmatprep.subr.mxu0 0.0
    %452 = vmatpush2.msra.mxu0 0.0
    %453 = vmatprep.subr.mxu0 0.0
    %454 = vmatpush2.msra.mxu0 0.0
    %455 = vmatprep.mubr.f32.mxu0 0.0
    %456 = vmatmul.mubr.f32.gmra.mxu0 %v389
    %v457 = vpop.f32.mrf.mxu0
    %v458 = vadd.f32 0.0, %v457
    %v459 = vpop.f32.mrf.mxu0
    %460 = vdwg.mxu0
    %461 = vrot.lane.b32.xlu0 %v205, 64
    %v462 = vpop.permute.xlu0 %461
    %v465 = vsel %vm211, %v384, 0
    %467 = vmatprep.subr.mxu0 0.0
    %468 = vmatpush1.msra.mxu0 0.0
    %469 = vmatprep.subr.mxu0 0.0
    %470 = vmatpush1.msra.mxu0 0.0
    %471 = vmatprep.subr.mxu0 0.0
    %472 = vmatpush1.msra.mxu0 0.0
    %473 = vmatprep.subr.mxu0 0.0
    %474 = vmatpush1.msra.mxu0 0.0
    %475 = vmatprep.subr.mxu0 0.0
    %476 = vmatpush1.msra.mxu0 0.0
    %477 = vmatprep.subr.mxu0 0.0
    %478 = vmatpush1.msra.mxu0 0.0
    %479 = vmatprep.subr.mxu0 0.0
    %480 = vmatpush1.msra.mxu0 0.0
    %481 = vmatprep.subr.mxu0 0.0
    %482 = vmatpush1.msra.mxu0 0.0
    %483 = vmatprep.subr.mxu0 0.0
    %484 = vmatpush1.msra.mxu0 0.0
    %485 = vmatprep.subr.mxu0 0.0
    %486 = vmatpush1.msra.mxu0 0.0
    %487 = vmatprep.subr.mxu0 0.0
    %488 = vmatpush1.msra.mxu0 0.0
    %489 = vmatprep.subr.mxu0 0.0
    %490 = vmatpush1.msra.mxu0 0.0
    %491 = vmatprep.subr.mxu0 0.0
    %492 = vmatpush1.msra.mxu0 0.0
    %493 = vmatprep.subr.mxu0 0.0
    %494 = vmatpush1.msra.mxu0 0.0
    %495 = vmatprep.subr.mxu0 0.0
    %496 = vmatpush1.msra.mxu0 0.0
    %497 = vmatprep.subr.mxu0 0.0
    %498 = vmatpush1.msra.mxu0 %v462
    %499 = vmatprep.subr.mxu0 0.0
    %500 = vmatpush2.msra.mxu0 0.0
    %501 = vmatprep.subr.mxu0 0.0
    %502 = vmatpush2.msra.mxu0 0.0
    %503 = vmatprep.subr.mxu0 0.0
    %504 = vmatpush2.msra.mxu0 0.0
    %505 = vmatprep.subr.mxu0 0.0
    %506 = vmatpush2.msra.mxu0 0.0
    %507 = vmatprep.subr.mxu0 0.0
    %508 = vmatpush2.msra.mxu0 0.0
    %509 = vmatprep.subr.mxu0 0.0
    %510 = vmatpush2.msra.mxu0 0.0
    %511 = vmatprep.subr.mxu0 0.0
    %512 = vmatpush2.msra.mxu0 0.0
    %513 = vmatprep.subr.mxu0 0.0
    %514 = vmatpush2.msra.mxu0 0.0
    %515 = vmatprep.subr.mxu0 0.0
    %516 = vmatpush2.msra.mxu0 0.0
    %517 = vmatprep.subr.mxu0 0.0
    %518 = vmatpush2.msra.mxu0 0.0
    %519 = vmatprep.subr.mxu0 0.0
    %520 = vmatpush2.msra.mxu0 0.0
    %521 = vmatprep.subr.mxu0 0.0
    %522 = vmatpush2.msra.mxu0 0.0
    %523 = vmatprep.subr.mxu0 0.0
    %524 = vmatpush2.msra.mxu0 0.0
    %525 = vmatprep.subr.mxu0 0.0
    %526 = vmatpush2.msra.mxu0 0.0
    %527 = vmatprep.subr.mxu0 0.0
    %528 = vmatpush2.msra.mxu0 0.0
    %529 = vmatprep.subr.mxu0 0.0
    %530 = vmatpush2.msra.mxu0 0.0
    %531 = vmatprep.mubr.f32.mxu0 0.0
    %532 = vmatmul.mubr.f32.gmra.mxu0 %v465
    %v533 = vpop.f32.mrf.mxu0
    %v534 = vadd.f32 0.0, %v533
    %v535 = vpop.f32.mrf.mxu0
    %536 = vdwg.mxu0
    %537 = vrot.lane.b32.xlu0 %v200, 120
    %v538 = vpop.permute.xlu0 %537
    %539 = vrot.lane.b32.xlu0 %v200, 88
    %v540 = vpop.permute.xlu0 %539
    %v541 = vsel %vm211, %v538, 0
    %v543 = vsel %vm211, %v540, 0
    %545 = vmatprep.subr.mxu0 0.0
    %546 = vmatpush1.xpose.msra.mxu0 0.0
    %547 = vmatprep.subr.mxu0 0.0
    %548 = vmatpush1.xpose.msra.mxu0 0.0
    %549 = vmatprep.subr.mxu0 0.0
    %550 = vmatpush1.xpose.msra.mxu0 0.0
    %551 = vmatprep.subr.mxu0 0.0
    %552 = vmatpush1.xpose.msra.mxu0 0.0
    %553 = vmatprep.subr.mxu0 0.0
    %554 = vmatpush1.xpose.msra.mxu0 0.0
    %555 = vmatprep.subr.mxu0 0.0
    %556 = vmatpush1.xpose.msra.mxu0 0.0
    %557 = vmatprep.subr.mxu0 0.0
    %558 = vmatpush1.xpose.msra.mxu0 0.0
    %559 = vmatprep.subr.mxu0 0.0
    %560 = vmatpush1.xpose.msra.mxu0 0.0
    %561 = vmatprep.subr.mxu0 0.0
    %562 = vmatpush1.xpose.msra.mxu0 0.0
    %563 = vmatprep.subr.mxu0 0.0
    %564 = vmatpush1.xpose.msra.mxu0 0.0
    %565 = vmatprep.subr.mxu0 0.0
    %566 = vmatpush1.xpose.msra.mxu0 0.0
    %567 = vmatprep.subr.mxu0 0.0
    %568 = vmatpush1.xpose.msra.mxu0 0.0
    %569 = vmatprep.subr.mxu0 0.0
    %570 = vmatpush1.xpose.msra.mxu0 0.0
    %571 = vmatprep.subr.mxu0 0.0
    %572 = vmatpush1.xpose.msra.mxu0 0.0
    %573 = vmatprep.subr.mxu0 0.0
    %574 = vmatpush1.xpose.msra.mxu0 0.0
    %575 = vmatprep.subr.mxu0 0.0
    %576 = vmatpush1.xpose.msra.mxu0 %v543
    %577 = vmatprep.subr.mxu0 0.0
    %578 = vmatpush2.xpose.msra.mxu0 0.0
    %579 = vmatprep.subr.mxu0 0.0
    %580 = vmatpush2.xpose.msra.mxu0 0.0
    %581 = vmatprep.subr.mxu0 0.0
    %582 = vmatpush2.xpose.msra.mxu0 0.0
    %583 = vmatprep.subr.mxu0 0.0
    %584 = vmatpush2.xpose.msra.mxu0 0.0
    %585 = vmatprep.subr.mxu0 0.0
    %586 = vmatpush2.xpose.msra.mxu0 0.0
    %587 = vmatprep.subr.mxu0 0.0
    %588 = vmatpush2.xpose.msra.mxu0 0.0
    %589 = vmatprep.subr.mxu0 0.0
    %590 = vmatpush2.xpose.msra.mxu0 0.0
    %591 = vmatprep.subr.mxu0 0.0
    %592 = vmatpush2.xpose.msra.mxu0 0.0
    %593 = vmatprep.subr.mxu0 0.0
    %594 = vmatpush2.xpose.msra.mxu0 0.0
    %595 = vmatprep.subr.mxu0 0.0
    %596 = vmatpush2.xpose.msra.mxu0 0.0
    %597 = vmatprep.subr.mxu0 0.0
    %598 = vmatpush2.xpose.msra.mxu0 0.0
    %599 = vmatprep.subr.mxu0 0.0
    %600 = vmatpush2.xpose.msra.mxu0 0.0
    %601 = vmatprep.subr.mxu0 0.0
    %602 = vmatpush2.xpose.msra.mxu0 0.0
    %603 = vmatprep.subr.mxu0 0.0
    %604 = vmatpush2.xpose.msra.mxu0 0.0
    %605 = vmatprep.subr.mxu0 0.0
    %606 = vmatpush2.xpose.msra.mxu0 0.0
    %607 = vmatprep.subr.mxu0 0.0
    %608 = vmatpush2.xpose.msra.mxu0 0.0
    %609 = vmatprep.mubr.f32.mxu0 0.0
    %610 = vmatmul.mubr.f32.gmra.mxu0 %v541
    %v611 = vpop.f32.mrf.mxu0
    %v612 = vadd.f32 %v50, %v611
    %v613 = vpop.f32.mrf.mxu0
    %614 = vdwg.mxu0
    %615 = vrot.lane.b32.xlu0 %v205, 120
    %v616 = vpop.permute.xlu0 %615
    %617 = vrot.lane.b32.xlu0 %v205, 88
    %v618 = vpop.permute.xlu0 %617
    %v619 = vsel %vm211, %v616, 0
    %v621 = vsel %vm211, %v618, 0
    %623 = vmatprep.subr.mxu0 0.0
    %624 = vmatpush1.xpose.msra.mxu0 0.0
    %625 = vmatprep.subr.mxu0 0.0
    %626 = vmatpush1.xpose.msra.mxu0 0.0
    %627 = vmatprep.subr.mxu0 0.0
    %628 = vmatpush1.xpose.msra.mxu0 0.0
    %629 = vmatprep.subr.mxu0 0.0
    %630 = vmatpush1.xpose.msra.mxu0 0.0
    %631 = vmatprep.subr.mxu0 0.0
    %632 = vmatpush1.xpose.msra.mxu0 0.0
    %633 = vmatprep.subr.mxu0 0.0
    %634 = vmatpush1.xpose.msra.mxu0 0.0
    %635 = vmatprep.subr.mxu0 0.0
    %636 = vmatpush1.xpose.msra.mxu0 0.0
    %637 = vmatprep.subr.mxu0 0.0
    %638 = vmatpush1.xpose.msra.mxu0 0.0
    %639 = vmatprep.subr.mxu0 0.0
    %640 = vmatpush1.xpose.msra.mxu0 0.0
    %641 = vmatprep.subr.mxu0 0.0
    %642 = vmatpush1.xpose.msra.mxu0 0.0
    %643 = vmatprep.subr.mxu0 0.0
    %644 = vmatpush1.xpose.msra.mxu0 0.0
    %645 = vmatprep.subr.mxu0 0.0
    %646 = vmatpush1.xpose.msra.mxu0 0.0
    %647 = vmatprep.subr.mxu0 0.0
    %648 = vmatpush1.xpose.msra.mxu0 0.0
    %649 = vmatprep.subr.mxu0 0.0
    %650 = vmatpush1.xpose.msra.mxu0 0.0
    %651 = vmatprep.subr.mxu0 0.0
    %652 = vmatpush1.xpose.msra.mxu0 0.0
    %653 = vmatprep.subr.mxu0 0.0
    %654 = vmatpush1.xpose.msra.mxu0 %v621
    %655 = vmatprep.subr.mxu0 0.0
    %656 = vmatpush2.xpose.msra.mxu0 0.0
    %657 = vmatprep.subr.mxu0 0.0
    %658 = vmatpush2.xpose.msra.mxu0 0.0
    %659 = vmatprep.subr.mxu0 0.0
    %660 = vmatpush2.xpose.msra.mxu0 0.0
    %661 = vmatprep.subr.mxu0 0.0
    %662 = vmatpush2.xpose.msra.mxu0 0.0
    %663 = vmatprep.subr.mxu0 0.0
    %664 = vmatpush2.xpose.msra.mxu0 0.0
    %665 = vmatprep.subr.mxu0 0.0
    %666 = vmatpush2.xpose.msra.mxu0 0.0
    %667 = vmatprep.subr.mxu0 0.0
    %668 = vmatpush2.xpose.msra.mxu0 0.0
    %669 = vmatprep.subr.mxu0 0.0
    %670 = vmatpush2.xpose.msra.mxu0 0.0
    %671 = vmatprep.subr.mxu0 0.0
    %672 = vmatpush2.xpose.msra.mxu0 0.0
    %673 = vmatprep.subr.mxu0 0.0
    %674 = vmatpush2.xpose.msra.mxu0 0.0
    %675 = vmatprep.subr.mxu0 0.0
    %676 = vmatpush2.xpose.msra.mxu0 0.0
    %677 = vmatprep.subr.mxu0 0.0
    %678 = vmatpush2.xpose.msra.mxu0 0.0
    %679 = vmatprep.subr.mxu0 0.0
    %680 = vmatpush2.xpose.msra.mxu0 0.0
    %681 = vmatprep.subr.mxu0 0.0
    %682 = vmatpush2.xpose.msra.mxu0 0.0
    %683 = vmatprep.subr.mxu0 0.0
    %684 = vmatpush2.xpose.msra.mxu0 0.0
    %685 = vmatprep.subr.mxu0 0.0
    %686 = vmatpush2.xpose.msra.mxu0 0.0
    %687 = vmatprep.mubr.f32.mxu0 0.0
    %688 = vmatmul.mubr.f32.gmra.mxu0 %v619
    %v689 = vpop.f32.mrf.mxu0
    %v690 = vadd.f32 %v51, %v689
    %v691 = vpop.f32.mrf.mxu0
    %692 = vdwg.mxu0
    %v693 = vsel %vm211, %v612, -inf
    %694 = vmax.xlane.f32.xlu0 %v693
    %v695 = vpop.xlane.xlu0 %694
    %v696 = vsel %vm211, %v690, -inf
    %697 = vmax.xlane.f32.xlu0 %v696
    %v698 = vpop.xlane.xlu0 %697
    %v699 = vsub.f32 %v612, %v695
    %v700 = vsub.f32 %v690, %v698
    %v701 = vmul.f32 %v699, 1.442695
    %v702 = vpow.pop %v701
    %v703 = vmul.f32 %v700, 1.442695
    %v704 = vpow.pop %v703
    %v705 = vsel %vm211, %v702, 0.0
    %706 = vadd.xlane.f32.xlu0 %v705
    %v707 = vpop.xlane.xlu0 %706
    %v708 = vsel %vm211, %v704, 0.0
    %709 = vadd.xlane.f32.xlu0 %v708
    %v710 = vpop.xlane.xlu0 %709
    %v711 = vrcp.pop %v707
    %v712 = vrcp.pop %v710
    %v713 = vmul.f32 %v702, %v711
    %v714 = vmul.f32 %v704, %v712
    %715 = vrot.lane.b32.xlu0 %v200, 56
    %v716 = vpop.permute.xlu0 %715
    %v719 = vsel %vm211, %v713, 0
    %721 = vmatprep.subr.mxu0 0.0
    %722 = vmatpush1.msra.mxu0 0.0
    %723 = vmatprep.subr.mxu0 0.0
    %724 = vmatpush1.msra.mxu0 0.0
    %725 = vmatprep.subr.mxu0 0.0
    %726 = vmatpush1.msra.mxu0 0.0
    %727 = vmatprep.subr.mxu0 0.0
    %728 = vmatpush1.msra.mxu0 0.0
    %729 = vmatprep.subr.mxu0 0.0
    %730 = vmatpush1.msra.mxu0 0.0
    %731 = vmatprep.subr.mxu0 0.0
    %732 = vmatpush1.msra.mxu0 0.0
    %733 = vmatprep.subr.mxu0 0.0
    %734 = vmatpush1.msra.mxu0 0.0
    %735 = vmatprep.subr.mxu0 0.0
    %736 = vmatpush1.msra.mxu0 0.0
    %737 = vmatprep.subr.mxu0 0.0
    %738 = vmatpush1.msra.mxu0 0.0
    %739 = vmatprep.subr.mxu0 0.0
    %740 = vmatpush1.msra.mxu0 0.0
    %741 = vmatprep.subr.mxu0 0.0
    %742 = vmatpush1.msra.mxu0 0.0
    %743 = vmatprep.subr.mxu0 0.0
    %744 = vmatpush1.msra.mxu0 0.0
    %745 = vmatprep.subr.mxu0 0.0
    %746 = vmatpush1.msra.mxu0 0.0
    %747 = vmatprep.subr.mxu0 0.0
    %748 = vmatpush1.msra.mxu0 0.0
    %749 = vmatprep.subr.mxu0 0.0
    %750 = vmatpush1.msra.mxu0 0.0
    %751 = vmatprep.subr.mxu0 0.0
    %752 = vmatpush1.msra.mxu0 %v716
    %753 = vmatprep.subr.mxu0 0.0
    %754 = vmatpush2.msra.mxu0 0.0
    %755 = vmatprep.subr.mxu0 0.0
    %756 = vmatpush2.msra.mxu0 0.0
    %757 = vmatprep.subr.mxu0 0.0
    %758 = vmatpush2.msra.mxu0 0.0
    %759 = vmatprep.subr.mxu0 0.0
    %760 = vmatpush2.msra.mxu0 0.0
    %761 = vmatprep.subr.mxu0 0.0
    %762 = vmatpush2.msra.mxu0 0.0
    %763 = vmatprep.subr.mxu0 0.0
    %764 = vmatpush2.msra.mxu0 0.0
    %765 = vmatprep.subr.mxu0 0.0
    %766 = vmatpush2.msra.mxu0 0.0
    %767 = vmatprep.subr.mxu0 0.0
    %768 = vmatpush2.msra.mxu0 0.0
    %769 = vmatprep.subr.mxu0 0.0
    %770 = vmatpush2.msra.mxu0 0.0
    %771 = vmatprep.subr.mxu0 0.0
    %772 = vmatpush2.msra.mxu0 0.0
    %773 = vmatprep.subr.mxu0 0.0
    %774 = vmatpush2.msra.mxu0 0.0
    %775 = vmatprep.subr.mxu0 0.0
    %776 = vmatpush2.msra.mxu0 0.0
    %777 = vmatprep.subr.mxu0 0.0
    %778 = vmatpush2.msra.mxu0 0.0
    %779 = vmatprep.subr.mxu0 0.0
    %780 = vmatpush2.msra.mxu0 0.0
    %781 = vmatprep.subr.mxu0 0.0
    %782 = vmatpush2.msra.mxu0 0.0
    %783 = vmatprep.subr.mxu0 0.0
    %784 = vmatpush2.msra.mxu0 0.0
    %785 = vmatprep.mubr.f32.mxu0 0.0
    %786 = vmatmul.mubr.f32.gmra.mxu0 %v719
    %v787 = vpop.f32.mrf.mxu0
    %v788 = vadd.f32 0.0, %v787
    %v789 = vpop.f32.mrf.mxu0
    %790 = vdwg.mxu0
    %791 = vrot.lane.b32.xlu0 %v205, 56
    %v792 = vpop.permute.xlu0 %791
    %v795 = vsel %vm211, %v714, 0
    %797 = vmatprep.subr.mxu0 0.0
    %798 = vmatpush1.msra.mxu0 0.0
    %799 = vmatprep.subr.mxu0 0.0
    %800 = vmatpush1.msra.mxu0 0.0
    %801 = vmatprep.subr.mxu0 0.0
    %802 = vmatpush1.msra.mxu0 0.0
    %803 = vmatprep.subr.mxu0 0.0
    %804 = vmatpush1.msra.mxu0 0.0
    %805 = vmatprep.subr.mxu0 0.0
    %806 = vmatpush1.msra.mxu0 0.0
    %807 = vmatprep.subr.mxu0 0.0
    %808 = vmatpush1.msra.mxu0 0.0
    %809 = vmatprep.subr.mxu0 0.0
    %810 = vmatpush1.msra.mxu0 0.0
    %811 = vmatprep.subr.mxu0 0.0
    %812 = vmatpush1.msra.mxu0 0.0
    %813 = vmatprep.subr.mxu0 0.0
    %814 = vmatpush1.msra.mxu0 0.0
    %815 = vmatprep.subr.mxu0 0.0
    %816 = vmatpush1.msra.mxu0 0.0
    %817 = vmatprep.subr.mxu0 0.0
    %818 = vmatpush1.msra.mxu0 0.0
    %819 = vmatprep.subr.mxu0 0.0
    %820 = vmatpush1.msra.mxu0 0.0
    %821 = vmatprep.subr.mxu0 0.0
    %822 = vmatpush1.msra.mxu0 0.0
    %823 = vmatprep.subr.mxu0 0.0
    %824 = vmatpush1.msra.mxu0 0.0
    %825 = vmatprep.subr.mxu0 0.0
    %826 = vmatpush1.msra.mxu0 0.0
    %827 = vmatprep.subr.mxu0 0.0
    %828 = vmatpush1.msra.mxu0 %v792
    %829 = vmatprep.subr.mxu0 0.0
    %830 = vmatpush2.msra.mxu0 0.0
    %831 = vmatprep.subr.mxu0 0.0
    %832 = vmatpush2.msra.mxu0 0.0
    %833 = vmatprep.subr.mxu0 0.0
    %834 = vmatpush2.msra.mxu0 0.0
    %835 = vmatprep.subr.mxu0 0.0
    %836 = vmatpush2.msra.mxu0 0.0
    %837 = vmatprep.subr.mxu0 0.0
    %838 = vmatpush2.msra.mxu0 0.0
    %839 = vmatprep.subr.mxu0 0.0
    %840 = vmatpush2.msra.mxu0 0.0
    %841 = vmatprep.subr.mxu0 0.0
    %842 = vmatpush2.msra.mxu0 0.0
    %843 = vmatprep.subr.mxu0 0.0
    %844 = vmatpush2.msra.mxu0 0.0
    %845 = vmatprep.subr.mxu0 0.0
    %846 = vmatpush2.msra.mxu0 0.0
    %847 = vmatprep.subr.mxu0 0.0
    %848 = vmatpush2.msra.mxu0 0.0
    %849 = vmatprep.subr.mxu0 0.0
    %850 = vmatpush2.msra.mxu0 0.0
    %851 = vmatprep.subr.mxu0 0.0
    %852 = vmatpush2.msra.mxu0 0.0
    %853 = vmatprep.subr.mxu0 0.0
    %854 = vmatpush2.msra.mxu0 0.0
    %855 = vmatprep.subr.mxu0 0.0
    %856 = vmatpush2.msra.mxu0 0.0
    %857 = vmatprep.subr.mxu0 0.0
    %858 = vmatpush2.msra.mxu0 0.0
    %859 = vmatprep.subr.mxu0 0.0
    %860 = vmatpush2.msra.mxu0 0.0
    %861 = vmatprep.mubr.f32.mxu0 0.0
    %862 = vmatmul.mubr.f32.gmra.mxu0 %v795
    %v863 = vpop.f32.mrf.mxu0
    %v864 = vadd.f32 0.0, %v863
    %v865 = vpop.f32.mrf.mxu0
    %866 = vdwg.mxu0
    %v868 = vsel %vm211, %v788, 0
    %v871 = vsel %vm211, %v864, 0
    %873 = vmatprep.subr.mxu0 0.0
    %874 = vmatpush1.msra.mxu0 0.0
    %875 = vmatprep.subr.mxu0 0.0
    %876 = vmatpush1.msra.mxu0 0.0
    %877 = vmatprep.subr.mxu0 0.0
    %878 = vmatpush1.msra.mxu0 0.0
    %879 = vmatprep.subr.mxu0 0.0
    %880 = vmatpush1.msra.mxu0 0.0
    %881 = vmatprep.subr.mxu0 0.0
    %882 = vmatpush1.msra.mxu0 0.0
    %883 = vmatprep.subr.mxu0 0.0
    %884 = vmatpush1.msra.mxu0 0.0
    %885 = vmatprep.subr.mxu0 0.0
    %886 = vmatpush1.msra.mxu0 0.0
    %887 = vmatprep.subr.mxu0 0.0
    %888 = vmatpush1.msra.mxu0 0.0
    %889 = vmatprep.subr.mxu0 0.0
    %890 = vmatpush1.msra.mxu0 0.0
    %891 = vmatprep.subr.mxu0 0.0
    %892 = vmatpush1.msra.mxu0 0.0
    %893 = vmatprep.subr.mxu0 0.0
    %894 = vmatpush1.msra.mxu0 0.0
    %895 = vmatprep.subr.mxu0 0.0
    %896 = vmatpush1.msra.mxu0 0.0
    %897 = vmatprep.subr.mxu0 0.0
    %898 = vmatpush1.msra.mxu0 0.0
    %899 = vmatprep.subr.mxu0 0.0
    %900 = vmatpush1.msra.mxu0 0.0
    %901 = vmatprep.subr.mxu0 0.0
    %902 = vmatpush1.msra.mxu0 0.0
    %903 = vmatprep.subr.mxu0 0.0
    %904 = vmatpush1.msra.mxu0 %v53
    %905 = vmatprep.subr.mxu0 0.0
    %906 = vmatpush2.msra.mxu0 0.0
    %907 = vmatprep.subr.mxu0 0.0
    %908 = vmatpush2.msra.mxu0 0.0
    %909 = vmatprep.subr.mxu0 0.0
    %910 = vmatpush2.msra.mxu0 0.0
    %911 = vmatprep.subr.mxu0 0.0
    %912 = vmatpush2.msra.mxu0 0.0
    %913 = vmatprep.subr.mxu0 0.0
    %914 = vmatpush2.msra.mxu0 0.0
    %915 = vmatprep.subr.mxu0 0.0
    %916 = vmatpush2.msra.mxu0 0.0
    %917 = vmatprep.subr.mxu0 0.0
    %918 = vmatpush2.msra.mxu0 0.0
    %919 = vmatprep.subr.mxu0 0.0
    %920 = vmatpush2.msra.mxu0 0.0
    %921 = vmatprep.subr.mxu0 0.0
    %922 = vmatpush2.msra.mxu0 0.0
    %923 = vmatprep.subr.mxu0 0.0
    %924 = vmatpush2.msra.mxu0 0.0
    %925 = vmatprep.subr.mxu0 0.0
    %926 = vmatpush2.msra.mxu0 0.0
    %927 = vmatprep.subr.mxu0 0.0
    %928 = vmatpush2.msra.mxu0 0.0
    %929 = vmatprep.subr.mxu0 0.0
    %930 = vmatpush2.msra.mxu0 0.0
    %931 = vmatprep.subr.mxu0 0.0
    %932 = vmatpush2.msra.mxu0 0.0
    %933 = vmatprep.subr.mxu0 0.0
    %934 = vmatpush2.msra.mxu0 0.0
    %935 = vmatprep.subr.mxu0 0.0
    %936 = vmatpush2.msra.mxu0 0.0
    %937 = vmatprep.mubr.f32.mxu0 0.0
    %938 = vmatmul.mubr.f32.gmra.mxu0 %v868
    %v939 = vpop.f32.mrf.mxu0
    %v940 = vadd.f32 0.0, %v939
    %v941 = vpop.f32.mrf.mxu0
    %942 = vmatprep.mubr.f32.mxu0 0.0
    %943 = vmatmul.mubr.f32.gmra.mxu0 %v871
    %v944 = vpop.f32.mrf.mxu0
    %v945 = vadd.f32 0.0, %v944
    %v946 = vpop.f32.mrf.mxu0
    %947 = vdwg.mxu0
    %v949 = vsel %vm211, %v458, 0
    %v952 = vsel %vm211, %v534, 0
    %954 = vmatprep.subr.mxu0 0.0
    %955 = vmatpush1.msra.mxu0 0.0
    %956 = vmatprep.subr.mxu0 0.0
    %957 = vmatpush1.msra.mxu0 0.0
    %958 = vmatprep.subr.mxu0 0.0
    %959 = vmatpush1.msra.mxu0 0.0
    %960 = vmatprep.subr.mxu0 0.0
    %961 = vmatpush1.msra.mxu0 0.0
    %962 = vmatprep.subr.mxu0 0.0
    %963 = vmatpush1.msra.mxu0 0.0
    %964 = vmatprep.subr.mxu0 0.0
    %965 = vmatpush1.msra.mxu0 0.0
    %966 = vmatprep.subr.mxu0 0.0
    %967 = vmatpush1.msra.mxu0 0.0
    %968 = vmatprep.subr.mxu0 0.0
    %969 = vmatpush1.msra.mxu0 0.0
    %970 = vmatprep.subr.mxu0 0.0
    %971 = vmatpush1.msra.mxu0 0.0
    %972 = vmatprep.subr.mxu0 0.0
    %973 = vmatpush1.msra.mxu0 0.0
    %974 = vmatprep.subr.mxu0 0.0
    %975 = vmatpush1.msra.mxu0 0.0
    %976 = vmatprep.subr.mxu0 0.0
    %977 = vmatpush1.msra.mxu0 0.0
    %978 = vmatprep.subr.mxu0 0.0
    %979 = vmatpush1.msra.mxu0 0.0
    %980 = vmatprep.subr.mxu0 0.0
    %981 = vmatpush1.msra.mxu0 0.0
    %982 = vmatprep.subr.mxu0 0.0
    %983 = vmatpush1.msra.mxu0 0.0
    %984 = vmatprep.subr.mxu0 0.0
    %985 = vmatpush1.msra.mxu0 %v52
    %986 = vmatprep.subr.mxu0 0.0
    %987 = vmatpush2.msra.mxu0 0.0
    %988 = vmatprep.subr.mxu0 0.0
    %989 = vmatpush2.msra.mxu0 0.0
    %990 = vmatprep.subr.mxu0 0.0
    %991 = vmatpush2.msra.mxu0 0.0
    %992 = vmatprep.subr.mxu0 0.0
    %993 = vmatpush2.msra.mxu0 0.0
    %994 = vmatprep.subr.mxu0 0.0
    %995 = vmatpush2.msra.mxu0 0.0
    %996 = vmatprep.subr.mxu0 0.0
    %997 = vmatpush2.msra.mxu0 0.0
    %998 = vmatprep.subr.mxu0 0.0
    %999 = vmatpush2.msra.mxu0 0.0
    %1000 = vmatprep.subr.mxu0 0.0
    %1001 = vmatpush2.msra.mxu0 0.0
    %1002 = vmatprep.subr.mxu0 0.0
    %1003 = vmatpush2.msra.mxu0 0.0
    %1004 = vmatprep.subr.mxu0 0.0
    %1005 = vmatpush2.msra.mxu0 0.0
    %1006 = vmatprep.subr.mxu0 0.0
    %1007 = vmatpush2.msra.mxu0 0.0
    %1008 = vmatprep.subr.mxu0 0.0
    %1009 = vmatpush2.msra.mxu0 0.0
    %1010 = vmatprep.subr.mxu0 0.0
    %1011 = vmatpush2.msra.mxu0 0.0
    %1012 = vmatprep.subr.mxu0 0.0
    %1013 = vmatpush2.msra.mxu0 0.0
    %1014 = vmatprep.subr.mxu0 0.0
    %1015 = vmatpush2.msra.mxu0 0.0
    %1016 = vmatprep.subr.mxu0 0.0
    %1017 = vmatpush2.msra.mxu0 0.0
    %1018 = vmatprep.mubr.f32.mxu0 0.0
    %1019 = vmatmul.mubr.f32.gmra.mxu0 %v949
    %v1020 = vpop.f32.mrf.mxu0
    %v1021 = vadd.f32 %v940, %v1020
    %v1022 = vpop.f32.mrf.mxu0
    %1023 = vmatprep.mubr.f32.mxu0 0.0
    %1024 = vmatmul.mubr.f32.gmra.mxu0 %v952
    %v1025 = vpop.f32.mrf.mxu0
    %v1026 = vadd.f32 %v945, %v1025
    %v1027 = vpop.f32.mrf.mxu0
    %1028 = vdwg.mxu0
    %1029 = vrot.lane.b32.xlu0 %v200, 112
    %v1030 = vpop.permute.xlu0 %1029
    %1031 = vrot.lane.b32.xlu0 %v200, 80
    %v1032 = vpop.permute.xlu0 %1031
    %v1033 = vsel %vm211, %v1030, 0
    %v1035 = vsel %vm211, %v1032, 0
    %1037 = vmatprep.subr.mxu0 0.0
    %1038 = vmatpush1.xpose.msra.mxu0 0.0
    %1039 = vmatprep.subr.mxu0 0.0
    %1040 = vmatpush1.xpose.msra.mxu0 0.0
    %1041 = vmatprep.subr.mxu0 0.0
    %1042 = vmatpush1.xpose.msra.mxu0 0.0
    %1043 = vmatprep.subr.mxu0 0.0
    %1044 = vmatpush1.xpose.msra.mxu0 0.0
    %1045 = vmatprep.subr.mxu0 0.0
    %1046 = vmatpush1.xpose.msra.mxu0 0.0
    %1047 = vmatprep.subr.mxu0 0.0
    %1048 = vmatpush1.xpose.msra.mxu0 0.0
    %1049 = vmatprep.subr.mxu0 0.0
    %1050 = vmatpush1.xpose.msra.mxu0 0.0
    %1051 = vmatprep.subr.mxu0 0.0
    %1052 = vmatpush1.xpose.msra.mxu0 0.0
    %1053 = vmatprep.subr.mxu0 0.0
    %1054 = vmatpush1.xpose.msra.mxu0 0.0
    %1055 = vmatprep.subr.mxu0 0.0
    %1056 = vmatpush1.xpose.msra.mxu0 0.0
    %1057 = vmatprep.subr.mxu0 0.0
    %1058 = vmatpush1.xpose.msra.mxu0 0.0
    %1059 = vmatprep.subr.mxu0 0.0
    %1060 = vmatpush1.xpose.msra.mxu0 0.0
    %1061 = vmatprep.subr.mxu0 0.0
    %1062 = vmatpush1.xpose.msra.mxu0 0.0
    %1063 = vmatprep.subr.mxu0 0.0
    %1064 = vmatpush1.xpose.msra.mxu0 0.0
    %1065 = vmatprep.subr.mxu0 0.0
    %1066 = vmatpush1.xpose.msra.mxu0 0.0
    %1067 = vmatprep.subr.mxu0 0.0
    %1068 = vmatpush1.xpose.msra.mxu0 %v1035
    %1069 = vmatprep.subr.mxu0 0.0
    %1070 = vmatpush2.xpose.msra.mxu0 0.0
    %1071 = vmatprep.subr.mxu0 0.0
    %1072 = vmatpush2.xpose.msra.mxu0 0.0
    %1073 = vmatprep.subr.mxu0 0.0
    %1074 = vmatpush2.xpose.msra.mxu0 0.0
    %1075 = vmatprep.subr.mxu0 0.0
    %1076 = vmatpush2.xpose.msra.mxu0 0.0
    %1077 = vmatprep.subr.mxu0 0.0
    %1078 = vmatpush2.xpose.msra.mxu0 0.0
    %1079 = vmatprep.subr.mxu0 0.0
    %1080 = vmatpush2.xpose.msra.mxu0 0.0
    %1081 = vmatprep.subr.mxu0 0.0
    %1082 = vmatpush2.xpose.msra.mxu0 0.0
    %1083 = vmatprep.subr.mxu0 0.0
    %1084 = vmatpush2.xpose.msra.mxu0 0.0
    %1085 = vmatprep.subr.mxu0 0.0
    %1086 = vmatpush2.xpose.msra.mxu0 0.0
    %1087 = vmatprep.subr.mxu0 0.0
    %1088 = vmatpush2.xpose.msra.mxu0 0.0
    %1089 = vmatprep.subr.mxu0 0.0
    %1090 = vmatpush2.xpose.msra.mxu0 0.0
    %1091 = vmatprep.subr.mxu0 0.0
    %1092 = vmatpush2.xpose.msra.mxu0 0.0
    %1093 = vmatprep.subr.mxu0 0.0
    %1094 = vmatpush2.xpose.msra.mxu0 0.0
    %1095 = vmatprep.subr.mxu0 0.0
    %1096 = vmatpush2.xpose.msra.mxu0 0.0
    %1097 = vmatprep.subr.mxu0 0.0
    %1098 = vmatpush2.xpose.msra.mxu0 0.0
    %1099 = vmatprep.subr.mxu0 0.0
    %1100 = vmatpush2.xpose.msra.mxu0 0.0
    %1101 = vmatprep.mubr.f32.mxu0 0.0
    %1102 = vmatmul.mubr.f32.gmra.mxu0 %v1033
    %v1103 = vpop.f32.mrf.mxu0
    %v1104 = vadd.f32 %v50, %v1103
    %v1105 = vpop.f32.mrf.mxu0
    %1106 = vdwg.mxu0
    %1107 = vrot.lane.b32.xlu0 %v205, 112
    %v1108 = vpop.permute.xlu0 %1107
    %1109 = vrot.lane.b32.xlu0 %v205, 80
    %v1110 = vpop.permute.xlu0 %1109
    %v1111 = vsel %vm211, %v1108, 0
    %v1113 = vsel %vm211, %v1110, 0
    %1115 = vmatprep.subr.mxu0 0.0
    %1116 = vmatpush1.xpose.msra.mxu0 0.0
    %1117 = vmatprep.subr.mxu0 0.0
    %1118 = vmatpush1.xpose.msra.mxu0 0.0
    %1119 = vmatprep.subr.mxu0 0.0
    %1120 = vmatpush1.xpose.msra.mxu0 0.0
    %1121 = vmatprep.subr.mxu0 0.0
    %1122 = vmatpush1.xpose.msra.mxu0 0.0
    %1123 = vmatprep.subr.mxu0 0.0
    %1124 = vmatpush1.xpose.msra.mxu0 0.0
    %1125 = vmatprep.subr.mxu0 0.0
    %1126 = vmatpush1.xpose.msra.mxu0 0.0
    %1127 = vmatprep.subr.mxu0 0.0
    %1128 = vmatpush1.xpose.msra.mxu0 0.0
    %1129 = vmatprep.subr.mxu0 0.0
    %1130 = vmatpush1.xpose.msra.mxu0 0.0
    %1131 = vmatprep.subr.mxu0 0.0
    %1132 = vmatpush1.xpose.msra.mxu0 0.0
    %1133 = vmatprep.subr.mxu0 0.0
    %1134 = vmatpush1.xpose.msra.mxu0 0.0
    %1135 = vmatprep.subr.mxu0 0.0
    %1136 = vmatpush1.xpose.msra.mxu0 0.0
    %1137 = vmatprep.subr.mxu0 0.0
    %1138 = vmatpush1.xpose.msra.mxu0 0.0
    %1139 = vmatprep.subr.mxu0 0.0
    %1140 = vmatpush1.xpose.msra.mxu0 0.0
    %1141 = vmatprep.subr.mxu0 0.0
    %1142 = vmatpush1.xpose.msra.mxu0 0.0
    %1143 = vmatprep.subr.mxu0 0.0
    %1144 = vmatpush1.xpose.msra.mxu0 0.0
    %1145 = vmatprep.subr.mxu0 0.0
    %1146 = vmatpush1.xpose.msra.mxu0 %v1113
    %1147 = vmatprep.subr.mxu0 0.0
    %1148 = vmatpush2.xpose.msra.mxu0 0.0
    %1149 = vmatprep.subr.mxu0 0.0
    %1150 = vmatpush2.xpose.msra.mxu0 0.0
    %1151 = vmatprep.subr.mxu0 0.0
    %1152 = vmatpush2.xpose.msra.mxu0 0.0
    %1153 = vmatprep.subr.mxu0 0.0
    %1154 = vmatpush2.xpose.msra.mxu0 0.0
    %1155 = vmatprep.subr.mxu0 0.0
    %1156 = vmatpush2.xpose.msra.mxu0 0.0
    %1157 = vmatprep.subr.mxu0 0.0
    %1158 = vmatpush2.xpose.msra.mxu0 0.0
    %1159 = vmatprep.subr.mxu0 0.0
    %1160 = vmatpush2.xpose.msra.mxu0 0.0
    %1161 = vmatprep.subr.mxu0 0.0
    %1162 = vmatpush2.xpose.msra.mxu0 0.0
    %1163 = vmatprep.subr.mxu0 0.0
    %1164 = vmatpush2.xpose.msra.mxu0 0.0
    %1165 = vmatprep.subr.mxu0 0.0
    %1166 = vmatpush2.xpose.msra.mxu0 0.0
    %1167 = vmatprep.subr.mxu0 0.0
    %1168 = vmatpush2.xpose.msra.mxu0 0.0
    %1169 = vmatprep.subr.mxu0 0.0
    %1170 = vmatpush2.xpose.msra.mxu0 0.0
    %1171 = vmatprep.subr.mxu0 0.0
    %1172 = vmatpush2.xpose.msra.mxu0 0.0
    %1173 = vmatprep.subr.mxu0 0.0
    %1174 = vmatpush2.xpose.msra.mxu0 0.0
    %1175 = vmatprep.subr.mxu0 0.0
    %1176 = vmatpush2.xpose.msra.mxu0 0.0
    %1177 = vmatprep.subr.mxu0 0.0
    %1178 = vmatpush2.xpose.msra.mxu0 0.0
    %1179 = vmatprep.mubr.f32.mxu0 0.0
    %1180 = vmatmul.mubr.f32.gmra.mxu0 %v1111
    %v1181 = vpop.f32.mrf.mxu0
    %v1182 = vadd.f32 %v51, %v1181
    %v1183 = vpop.f32.mrf.mxu0
    %1184 = vdwg.mxu0
    %v1185 = vsel %vm211, %v1104, -inf
    %1186 = vmax.xlane.f32.xlu0 %v1185
    %v1187 = vpop.xlane.xlu0 %1186
    %v1188 = vsel %vm211, %v1182, -inf
    %1189 = vmax.xlane.f32.xlu0 %v1188
    %v1190 = vpop.xlane.xlu0 %1189
    %v1191 = vsub.f32 %v1104, %v1187
    %v1192 = vsub.f32 %v1182, %v1190
    %v1193 = vmul.f32 %v1191, 1.442695
    %v1194 = vpow.pop %v1193
    %v1195 = vmul.f32 %v1192, 1.442695
    %v1196 = vpow.pop %v1195
    %v1197 = vsel %vm211, %v1194, 0.0
    %1198 = vadd.xlane.f32.xlu0 %v1197
    %v1199 = vpop.xlane.xlu0 %1198
    %v1200 = vsel %vm211, %v1196, 0.0
    %1201 = vadd.xlane.f32.xlu0 %v1200
    %v1202 = vpop.xlane.xlu0 %1201
    %v1203 = vrcp.pop %v1199
    %v1204 = vrcp.pop %v1202
    %v1205 = vmul.f32 %v1194, %v1203
    %v1206 = vmul.f32 %v1196, %v1204
    %1207 = vrot.lane.b32.xlu0 %v200, 48
    %v1208 = vpop.permute.xlu0 %1207
    %v1211 = vsel %vm211, %v1205, 0
    %1213 = vmatprep.subr.mxu0 0.0
    %1214 = vmatpush1.msra.mxu0 0.0
    %1215 = vmatprep.subr.mxu0 0.0
    %1216 = vmatpush1.msra.mxu0 0.0
    %1217 = vmatprep.subr.mxu0 0.0
    %1218 = vmatpush1.msra.mxu0 0.0
    %1219 = vmatprep.subr.mxu0 0.0
    %1220 = vmatpush1.msra.mxu0 0.0
    %1221 = vmatprep.subr.mxu0 0.0
    %1222 = vmatpush1.msra.mxu0 0.0
    %1223 = vmatprep.subr.mxu0 0.0
    %1224 = vmatpush1.msra.mxu0 0.0
    %1225 = vmatprep.subr.mxu0 0.0
    %1226 = vmatpush1.msra.mxu0 0.0
    %1227 = vmatprep.subr.mxu0 0.0
    %1228 = vmatpush1.msra.mxu0 0.0
    %1229 = vmatprep.subr.mxu0 0.0
    %1230 = vmatpush1.msra.mxu0 0.0
    %1231 = vmatprep.subr.mxu0 0.0
    %1232 = vmatpush1.msra.mxu0 0.0
    %1233 = vmatprep.subr.mxu0 0.0
    %1234 = vmatpush1.msra.mxu0 0.0
    %1235 = vmatprep.subr.mxu0 0.0
    %1236 = vmatpush1.msra.mxu0 0.0
    %1237 = vmatprep.subr.mxu0 0.0
    %1238 = vmatpush1.msra.mxu0 0.0
    %1239 = vmatprep.subr.mxu0 0.0
    %1240 = vmatpush1.msra.mxu0 0.0
    %1241 = vmatprep.subr.mxu0 0.0
    %1242 = vmatpush1.msra.mxu0 0.0
    %1243 = vmatprep.subr.mxu0 0.0
    %1244 = vmatpush1.msra.mxu0 %v1208
    %1245 = vmatprep.subr.mxu0 0.0
    %1246 = vmatpush2.msra.mxu0 0.0
    %1247 = vmatprep.subr.mxu0 0.0
    %1248 = vmatpush2.msra.mxu0 0.0
    %1249 = vmatprep.subr.mxu0 0.0
    %1250 = vmatpush2.msra.mxu0 0.0
    %1251 = vmatprep.subr.mxu0 0.0
    %1252 = vmatpush2.msra.mxu0 0.0
    %1253 = vmatprep.subr.mxu0 0.0
    %1254 = vmatpush2.msra.mxu0 0.0
    %1255 = vmatprep.subr.mxu0 0.0
    %1256 = vmatpush2.msra.mxu0 0.0
    %1257 = vmatprep.subr.mxu0 0.0
    %1258 = vmatpush2.msra.mxu0 0.0
    %1259 = vmatprep.subr.mxu0 0.0
    %1260 = vmatpush2.msra.mxu0 0.0
    %1261 = vmatprep.subr.mxu0 0.0
    %1262 = vmatpush2.msra.mxu0 0.0
    %1263 = vmatprep.subr.mxu0 0.0
    %1264 = vmatpush2.msra.mxu0 0.0
    %1265 = vmatprep.subr.mxu0 0.0
    %1266 = vmatpush2.msra.mxu0 0.0
    %1267 = vmatprep.subr.mxu0 0.0
    %1268 = vmatpush2.msra.mxu0 0.0
    %1269 = vmatprep.subr.mxu0 0.0
    %1270 = vmatpush2.msra.mxu0 0.0
    %1271 = vmatprep.subr.mxu0 0.0
    %1272 = vmatpush2.msra.mxu0 0.0
    %1273 = vmatprep.subr.mxu0 0.0
    %1274 = vmatpush2.msra.mxu0 0.0
    %1275 = vmatprep.subr.mxu0 0.0
    %1276 = vmatpush2.msra.mxu0 0.0
    %1277 = vmatprep.mubr.f32.mxu0 0.0
    %1278 = vmatmul.mubr.f32.gmra.mxu0 %v1211
    %v1279 = vpop.f32.mrf.mxu0
    %v1280 = vadd.f32 0.0, %v1279
    %v1281 = vpop.f32.mrf.mxu0
    %1282 = vdwg.mxu0
    %1283 = vrot.lane.b32.xlu0 %v205, 48
    %v1284 = vpop.permute.xlu0 %1283
    %v1287 = vsel %vm211, %v1206, 0
    %1289 = vmatprep.subr.mxu0 0.0
    %1290 = vmatpush1.msra.mxu0 0.0
    %1291 = vmatprep.subr.mxu0 0.0
    %1292 = vmatpush1.msra.mxu0 0.0
    %1293 = vmatprep.subr.mxu0 0.0
    %1294 = vmatpush1.msra.mxu0 0.0
    %1295 = vmatprep.subr.mxu0 0.0
    %1296 = vmatpush1.msra.mxu0 0.0
    %1297 = vmatprep.subr.mxu0 0.0
    %1298 = vmatpush1.msra.mxu0 0.0
    %1299 = vmatprep.subr.mxu0 0.0
    %1300 = vmatpush1.msra.mxu0 0.0
    %1301 = vmatprep.subr.mxu0 0.0
    %1302 = vmatpush1.msra.mxu0 0.0
    %1303 = vmatprep.subr.mxu0 0.0
    %1304 = vmatpush1.msra.mxu0 0.0
    %1305 = vmatprep.subr.mxu0 0.0
    %1306 = vmatpush1.msra.mxu0 0.0
    %1307 = vmatprep.subr.mxu0 0.0
    %1308 = vmatpush1.msra.mxu0 0.0
    %1309 = vmatprep.subr.mxu0 0.0
    %1310 = vmatpush1.msra.mxu0 0.0
    %1311 = vmatprep.subr.mxu0 0.0
    %1312 = vmatpush1.msra.mxu0 0.0
    %1313 = vmatprep.subr.mxu0 0.0
    %1314 = vmatpush1.msra.mxu0 0.0
    %1315 = vmatprep.subr.mxu0 0.0
    %1316 = vmatpush1.msra.mxu0 0.0
    %1317 = vmatprep.subr.mxu0 0.0
    %1318 = vmatpush1.msra.mxu0 0.0
    %1319 = vmatprep.subr.mxu0 0.0
    %1320 = vmatpush1.msra.mxu0 %v1284
    %1321 = vmatprep.subr.mxu0 0.0
    %1322 = vmatpush2.msra.mxu0 0.0
    %1323 = vmatprep.subr.mxu0 0.0
    %1324 = vmatpush2.msra.mxu0 0.0
    %1325 = vmatprep.subr.mxu0 0.0
    %1326 = vmatpush2.msra.mxu0 0.0
    %1327 = vmatprep.subr.mxu0 0.0
    %1328 = vmatpush2.msra.mxu0 0.0
    %1329 = vmatprep.subr.mxu0 0.0
    %1330 = vmatpush2.msra.mxu0 0.0
    %1331 = vmatprep.subr.mxu0 0.0
    %1332 = vmatpush2.msra.mxu0 0.0
    %1333 = vmatprep.subr.mxu0 0.0
    %1334 = vmatpush2.msra.mxu0 0.0
    %1335 = vmatprep.subr.mxu0 0.0
    %1336 = vmatpush2.msra.mxu0 0.0
    %1337 = vmatprep.subr.mxu0 0.0
    %1338 = vmatpush2.msra.mxu0 0.0
    %1339 = vmatprep.subr.mxu0 0.0
    %1340 = vmatpush2.msra.mxu0 0.0
    %1341 = vmatprep.subr.mxu0 0.0
    %1342 = vmatpush2.msra.mxu0 0.0
    %1343 = vmatprep.subr.mxu0 0.0
    %1344 = vmatpush2.msra.mxu0 0.0
    %1345 = vmatprep.subr.mxu0 0.0
    %1346 = vmatpush2.msra.mxu0 0.0
    %1347 = vmatprep.subr.mxu0 0.0
    %1348 = vmatpush2.msra.mxu0 0.0
    %1349 = vmatprep.subr.mxu0 0.0
    %1350 = vmatpush2.msra.mxu0 0.0
    %1351 = vmatprep.subr.mxu0 0.0
    %1352 = vmatpush2.msra.mxu0 0.0
    %1353 = vmatprep.mubr.f32.mxu0 0.0
    %1354 = vmatmul.mubr.f32.gmra.mxu0 %v1287
    %v1355 = vpop.f32.mrf.mxu0
    %v1356 = vadd.f32 0.0, %v1355
    %v1357 = vpop.f32.mrf.mxu0
    %1358 = vdwg.mxu0
    %v1360 = vsel %vm211, %v1280, 0
    %v1363 = vsel %vm211, %v1356, 0
    %1365 = vmatprep.subr.mxu0 0.0
    %1366 = vmatpush1.msra.mxu0 0.0
    %1367 = vmatprep.subr.mxu0 0.0
    %1368 = vmatpush1.msra.mxu0 0.0
    %1369 = vmatprep.subr.mxu0 0.0
    %1370 = vmatpush1.msra.mxu0 0.0
    %1371 = vmatprep.subr.mxu0 0.0
    %1372 = vmatpush1.msra.mxu0 0.0
    %1373 = vmatprep.subr.mxu0 0.0
    %1374 = vmatpush1.msra.mxu0 0.0
    %1375 = vmatprep.subr.mxu0 0.0
    %1376 = vmatpush1.msra.mxu0 0.0
    %1377 = vmatprep.subr.mxu0 0.0
    %1378 = vmatpush1.msra.mxu0 0.0
    %1379 = vmatprep.subr.mxu0 0.0
    %1380 = vmatpush1.msra.mxu0 0.0
    %1381 = vmatprep.subr.mxu0 0.0
    %1382 = vmatpush1.msra.mxu0 0.0
    %1383 = vmatprep.subr.mxu0 0.0
    %1384 = vmatpush1.msra.mxu0 0.0
    %1385 = vmatprep.subr.mxu0 0.0
    %1386 = vmatpush1.msra.mxu0 0.0
    %1387 = vmatprep.subr.mxu0 0.0
    %1388 = vmatpush1.msra.mxu0 0.0
    %1389 = vmatprep.subr.mxu0 0.0
    %1390 = vmatpush1.msra.mxu0 0.0
    %1391 = vmatprep.subr.mxu0 0.0
    %1392 = vmatpush1.msra.mxu0 0.0
    %1393 = vmatprep.subr.mxu0 0.0
    %1394 = vmatpush1.msra.mxu0 0.0
    %1395 = vmatprep.subr.mxu0 0.0
    %1396 = vmatpush1.msra.mxu0 %v54
    %1397 = vmatprep.subr.mxu0 0.0
    %1398 = vmatpush2.msra.mxu0 0.0
    %1399 = vmatprep.subr.mxu0 0.0
    %1400 = vmatpush2.msra.mxu0 0.0
    %1401 = vmatprep.subr.mxu0 0.0
    %1402 = vmatpush2.msra.mxu0 0.0
    %1403 = vmatprep.subr.mxu0 0.0
    %1404 = vmatpush2.msra.mxu0 0.0
    %1405 = vmatprep.subr.mxu0 0.0
    %1406 = vmatpush2.msra.mxu0 0.0
    %1407 = vmatprep.subr.mxu0 0.0
    %1408 = vmatpush2.msra.mxu0 0.0
    %1409 = vmatprep.subr.mxu0 0.0
    %1410 = vmatpush2.msra.mxu0 0.0
    %1411 = vmatprep.subr.mxu0 0.0
    %1412 = vmatpush2.msra.mxu0 0.0
    %1413 = vmatprep.subr.mxu0 0.0
    %1414 = vmatpush2.msra.mxu0 0.0
    %1415 = vmatprep.subr.mxu0 0.0
    %1416 = vmatpush2.msra.mxu0 0.0
    %1417 = vmatprep.subr.mxu0 0.0
    %1418 = vmatpush2.msra.mxu0 0.0
    %1419 = vmatprep.subr.mxu0 0.0
    %1420 = vmatpush2.msra.mxu0 0.0
    %1421 = vmatprep.subr.mxu0 0.0
    %1422 = vmatpush2.msra.mxu0 0.0
    %1423 = vmatprep.subr.mxu0 0.0
    %1424 = vmatpush2.msra.mxu0 0.0
    %1425 = vmatprep.subr.mxu0 0.0
    %1426 = vmatpush2.msra.mxu0 0.0
    %1427 = vmatprep.subr.mxu0 0.0
    %1428 = vmatpush2.msra.mxu0 0.0
    %1429 = vmatprep.mubr.f32.mxu0 0.0
    %1430 = vmatmul.mubr.f32.gmra.mxu0 %v1360
    %v1431 = vpop.f32.mrf.mxu0
    %v1432 = vadd.f32 0.0, %v1431
    %v1433 = vpop.f32.mrf.mxu0
    %1434 = vmatprep.mubr.f32.mxu0 0.0
    %1435 = vmatmul.mubr.f32.gmra.mxu0 %v1363
    %v1436 = vpop.f32.mrf.mxu0
    %v1437 = vadd.f32 0.0, %v1436
    %v1438 = vpop.f32.mrf.mxu0
    %1439 = vdwg.mxu0
    %v1440 = vadd.f32 %v1021, %v1432
    %v1441 = vadd.f32 %v1026, %v1437
    %1442 = vrot.lane.b32.xlu0 %v200, 104
    %v1443 = vpop.permute.xlu0 %1442
    %1444 = vrot.lane.b32.xlu0 %v200, 72
    %v1445 = vpop.permute.xlu0 %1444
    %v1446 = vsel %vm211, %v1443, 0
    %v1448 = vsel %vm211, %v1445, 0
    %1450 = vmatprep.subr.mxu0 0.0
    %1451 = vmatpush1.xpose.msra.mxu0 0.0
    %1452 = vmatprep.subr.mxu0 0.0
    %1453 = vmatpush1.xpose.msra.mxu0 0.0
    %1454 = vmatprep.subr.mxu0 0.0
    %1455 = vmatpush1.xpose.msra.mxu0 0.0
    %1456 = vmatprep.subr.mxu0 0.0
    %1457 = vmatpush1.xpose.msra.mxu0 0.0
    %1458 = vmatprep.subr.mxu0 0.0
    %1459 = vmatpush1.xpose.msra.mxu0 0.0
    %1460 = vmatprep.subr.mxu0 0.0
    %1461 = vmatpush1.xpose.msra.mxu0 0.0
    %1462 = vmatprep.subr.mxu0 0.0
    %1463 = vmatpush1.xpose.msra.mxu0 0.0
    %1464 = vmatprep.subr.mxu0 0.0
    %1465 = vmatpush1.xpose.msra.mxu0 0.0
    %1466 = vmatprep.subr.mxu0 0.0
    %1467 = vmatpush1.xpose.msra.mxu0 0.0
    %1468 = vmatprep.subr.mxu0 0.0
    %1469 = vmatpush1.xpose.msra.mxu0 0.0
    %1470 = vmatprep.subr.mxu0 0.0
    %1471 = vmatpush1.xpose.msra.mxu0 0.0
    %1472 = vmatprep.subr.mxu0 0.0
    %1473 = vmatpush1.xpose.msra.mxu0 0.0
    %1474 = vmatprep.subr.mxu0 0.0
    %1475 = vmatpush1.xpose.msra.mxu0 0.0
    %1476 = vmatprep.subr.mxu0 0.0
    %1477 = vmatpush1.xpose.msra.mxu0 0.0
    %1478 = vmatprep.subr.mxu0 0.0
    %1479 = vmatpush1.xpose.msra.mxu0 0.0
    %1480 = vmatprep.subr.mxu0 0.0
    %1481 = vmatpush1.xpose.msra.mxu0 %v1448
    %1482 = vmatprep.subr.mxu0 0.0
    %1483 = vmatpush2.xpose.msra.mxu0 0.0
    %1484 = vmatprep.subr.mxu0 0.0
    %1485 = vmatpush2.xpose.msra.mxu0 0.0
    %1486 = vmatprep.subr.mxu0 0.0
    %1487 = vmatpush2.xpose.msra.mxu0 0.0
    %1488 = vmatprep.subr.mxu0 0.0
    %1489 = vmatpush2.xpose.msra.mxu0 0.0
    %1490 = vmatprep.subr.mxu0 0.0
    %1491 = vmatpush2.xpose.msra.mxu0 0.0
    %1492 = vmatprep.subr.mxu0 0.0
    %1493 = vmatpush2.xpose.msra.mxu0 0.0
    %1494 = vmatprep.subr.mxu0 0.0
    %1495 = vmatpush2.xpose.msra.mxu0 0.0
    %1496 = vmatprep.subr.mxu0 0.0
    %1497 = vmatpush2.xpose.msra.mxu0 0.0
    %1498 = vmatprep.subr.mxu0 0.0
    %1499 = vmatpush2.xpose.msra.mxu0 0.0
    %1500 = vmatprep.subr.mxu0 0.0
    %1501 = vmatpush2.xpose.msra.mxu0 0.0
    %1502 = vmatprep.subr.mxu0 0.0
    %1503 = vmatpush2.xpose.msra.mxu0 0.0
    %1504 = vmatprep.subr.mxu0 0.0
    %1505 = vmatpush2.xpose.msra.mxu0 0.0
    %1506 = vmatprep.subr.mxu0 0.0
    %1507 = vmatpush2.xpose.msra.mxu0 0.0
    %1508 = vmatprep.subr.mxu0 0.0
    %1509 = vmatpush2.xpose.msra.mxu0 0.0
    %1510 = vmatprep.subr.mxu0 0.0
    %1511 = vmatpush2.xpose.msra.mxu0 0.0
    %1512 = vmatprep.subr.mxu0 0.0
    %1513 = vmatpush2.xpose.msra.mxu0 0.0
    %1514 = vmatprep.mubr.f32.mxu0 0.0
    %1515 = vmatmul.mubr.f32.gmra.mxu0 %v1446
    %v1516 = vpop.f32.mrf.mxu0
    %v1517 = vadd.f32 %v50, %v1516
    %v1518 = vpop.f32.mrf.mxu0
    %1519 = vdwg.mxu0
    %1520 = vrot.lane.b32.xlu0 %v205, 104
    %v1521 = vpop.permute.xlu0 %1520
    %1522 = vrot.lane.b32.xlu0 %v205, 72
    %v1523 = vpop.permute.xlu0 %1522
    %v1524 = vsel %vm211, %v1521, 0
    %v1526 = vsel %vm211, %v1523, 0
    %1528 = vmatprep.subr.mxu0 0.0
    %1529 = vmatpush1.xpose.msra.mxu0 0.0
    %1530 = vmatprep.subr.mxu0 0.0
    %1531 = vmatpush1.xpose.msra.mxu0 0.0
    %1532 = vmatprep.subr.mxu0 0.0
    %1533 = vmatpush1.xpose.msra.mxu0 0.0
    %1534 = vmatprep.subr.mxu0 0.0
    %1535 = vmatpush1.xpose.msra.mxu0 0.0
    %1536 = vmatprep.subr.mxu0 0.0
    %1537 = vmatpush1.xpose.msra.mxu0 0.0
    %1538 = vmatprep.subr.mxu0 0.0
    %1539 = vmatpush1.xpose.msra.mxu0 0.0
    %1540 = vmatprep.subr.mxu0 0.0
    %1541 = vmatpush1.xpose.msra.mxu0 0.0
    %1542 = vmatprep.subr.mxu0 0.0
    %1543 = vmatpush1.xpose.msra.mxu0 0.0
    %1544 = vmatprep.subr.mxu0 0.0
    %1545 = vmatpush1.xpose.msra.mxu0 0.0
    %1546 = vmatprep.subr.mxu0 0.0
    %1547 = vmatpush1.xpose.msra.mxu0 0.0
    %1548 = vmatprep.subr.mxu0 0.0
    %1549 = vmatpush1.xpose.msra.mxu0 0.0
    %1550 = vmatprep.subr.mxu0 0.0
    %1551 = vmatpush1.xpose.msra.mxu0 0.0
    %1552 = vmatprep.subr.mxu0 0.0
    %1553 = vmatpush1.xpose.msra.mxu0 0.0
    %1554 = vmatprep.subr.mxu0 0.0
    %1555 = vmatpush1.xpose.msra.mxu0 0.0
    %1556 = vmatprep.subr.mxu0 0.0
    %1557 = vmatpush1.xpose.msra.mxu0 0.0
    %1558 = vmatprep.subr.mxu0 0.0
    %1559 = vmatpush1.xpose.msra.mxu0 %v1526
    %1560 = vmatprep.subr.mxu0 0.0
    %1561 = vmatpush2.xpose.msra.mxu0 0.0
    %1562 = vmatprep.subr.mxu0 0.0
    %1563 = vmatpush2.xpose.msra.mxu0 0.0
    %1564 = vmatprep.subr.mxu0 0.0
    %1565 = vmatpush2.xpose.msra.mxu0 0.0
    %1566 = vmatprep.subr.mxu0 0.0
    %1567 = vmatpush2.xpose.msra.mxu0 0.0
    %1568 = vmatprep.subr.mxu0 0.0
    %1569 = vmatpush2.xpose.msra.mxu0 0.0
    %1570 = vmatprep.subr.mxu0 0.0
    %1571 = vmatpush2.xpose.msra.mxu0 0.0
    %1572 = vmatprep.subr.mxu0 0.0
    %1573 = vmatpush2.xpose.msra.mxu0 0.0
    %1574 = vmatprep.subr.mxu0 0.0
    %1575 = vmatpush2.xpose.msra.mxu0 0.0
    %1576 = vmatprep.subr.mxu0 0.0
    %1577 = vmatpush2.xpose.msra.mxu0 0.0
    %1578 = vmatprep.subr.mxu0 0.0
    %1579 = vmatpush2.xpose.msra.mxu0 0.0
    %1580 = vmatprep.subr.mxu0 0.0
    %1581 = vmatpush2.xpose.msra.mxu0 0.0
    %1582 = vmatprep.subr.mxu0 0.0
    %1583 = vmatpush2.xpose.msra.mxu0 0.0
    %1584 = vmatprep.subr.mxu0 0.0
    %1585 = vmatpush2.xpose.msra.mxu0 0.0
    %1586 = vmatprep.subr.mxu0 0.0
    %1587 = vmatpush2.xpose.msra.mxu0 0.0
    %1588 = vmatprep.subr.mxu0 0.0
    %1589 = vmatpush2.xpose.msra.mxu0 0.0
    %1590 = vmatprep.subr.mxu0 0.0
    %1591 = vmatpush2.xpose.msra.mxu0 0.0
    %1592 = vmatprep.mubr.f32.mxu0 0.0
    %1593 = vmatmul.mubr.f32.gmra.mxu0 %v1524
    %v1594 = vpop.f32.mrf.mxu0
    %v1595 = vadd.f32 %v51, %v1594
    %v1596 = vpop.f32.mrf.mxu0
    %1597 = vdwg.mxu0
    %v1598 = vsel %vm211, %v1517, -inf
    %1599 = vmax.xlane.f32.xlu0 %v1598
    %v1600 = vpop.xlane.xlu0 %1599
    %v1601 = vsel %vm211, %v1595, -inf
    %1602 = vmax.xlane.f32.xlu0 %v1601
    %v1603 = vpop.xlane.xlu0 %1602
    %v1604 = vsub.f32 %v1517, %v1600
    %v1605 = vsub.f32 %v1595, %v1603
    %v1606 = vmul.f32 %v1604, 1.442695
    %v1607 = vpow.pop %v1606
    %v1608 = vmul.f32 %v1605, 1.442695
    %v1609 = vpow.pop %v1608
    %v1610 = vsel %vm211, %v1607, 0.0
    %1611 = vadd.xlane.f32.xlu0 %v1610
    %v1612 = vpop.xlane.xlu0 %1611
    %v1613 = vsel %vm211, %v1609, 0.0
    %1614 = vadd.xlane.f32.xlu0 %v1613
    %v1615 = vpop.xlane.xlu0 %1614
    %v1616 = vrcp.pop %v1612
    %v1617 = vrcp.pop %v1615
    %v1618 = vmul.f32 %v1607, %v1616
    %v1619 = vmul.f32 %v1609, %v1617
    %1620 = vrot.lane.b32.xlu0 %v200, 40
    %v1621 = vpop.permute.xlu0 %1620
    %v1624 = vsel %vm211, %v1618, 0
    %1626 = vmatprep.subr.mxu0 0.0
    %1627 = vmatpush1.msra.mxu0 0.0
    %1628 = vmatprep.subr.mxu0 0.0
    %1629 = vmatpush1.msra.mxu0 0.0
    %1630 = vmatprep.subr.mxu0 0.0
    %1631 = vmatpush1.msra.mxu0 0.0
    %1632 = vmatprep.subr.mxu0 0.0
    %1633 = vmatpush1.msra.mxu0 0.0
    %1634 = vmatprep.subr.mxu0 0.0
    %1635 = vmatpush1.msra.mxu0 0.0
    %1636 = vmatprep.subr.mxu0 0.0
    %1637 = vmatpush1.msra.mxu0 0.0
    %1638 = vmatprep.subr.mxu0 0.0
    %1639 = vmatpush1.msra.mxu0 0.0
    %1640 = vmatprep.subr.mxu0 0.0
    %1641 = vmatpush1.msra.mxu0 0.0
    %1642 = vmatprep.subr.mxu0 0.0
    %1643 = vmatpush1.msra.mxu0 0.0
    %1644 = vmatprep.subr.mxu0 0.0
    %1645 = vmatpush1.msra.mxu0 0.0
    %1646 = vmatprep.subr.mxu0 0.0
    %1647 = vmatpush1.msra.mxu0 0.0
    %1648 = vmatprep.subr.mxu0 0.0
    %1649 = vmatpush1.msra.mxu0 0.0
    %1650 = vmatprep.subr.mxu0 0.0
    %1651 = vmatpush1.msra.mxu0 0.0
    %1652 = vmatprep.subr.mxu0 0.0
    %1653 = vmatpush1.msra.mxu0 0.0
    %1654 = vmatprep.subr.mxu0 0.0
    %1655 = vmatpush1.msra.mxu0 0.0
    %1656 = vmatprep.subr.mxu0 0.0
    %1657 = vmatpush1.msra.mxu0 %v1621
    %1658 = vmatprep.subr.mxu0 0.0
    %1659 = vmatpush2.msra.mxu0 0.0
    %1660 = vmatprep.subr.mxu0 0.0
    %1661 = vmatpush2.msra.mxu0 0.0
    %1662 = vmatprep.subr.mxu0 0.0
    %1663 = vmatpush2.msra.mxu0 0.0
    %1664 = vmatprep.subr.mxu0 0.0
    %1665 = vmatpush2.msra.mxu0 0.0
    %1666 = vmatprep.subr.mxu0 0.0
    %1667 = vmatpush2.msra.mxu0 0.0
    %1668 = vmatprep.subr.mxu0 0.0
    %1669 = vmatpush2.msra.mxu0 0.0
    %1670 = vmatprep.subr.mxu0 0.0
    %1671 = vmatpush2.msra.mxu0 0.0
    %1672 = vmatprep.subr.mxu0 0.0
    %1673 = vmatpush2.msra.mxu0 0.0
    %1674 = vmatprep.subr.mxu0 0.0
    %1675 = vmatpush2.msra.mxu0 0.0
    %1676 = vmatprep.subr.mxu0 0.0
    %1677 = vmatpush2.msra.mxu0 0.0
    %1678 = vmatprep.subr.mxu0 0.0
    %1679 = vmatpush2.msra.mxu0 0.0
    %1680 = vmatprep.subr.mxu0 0.0
    %1681 = vmatpush2.msra.mxu0 0.0
    %1682 = vmatprep.subr.mxu0 0.0
    %1683 = vmatpush2.msra.mxu0 0.0
    %1684 = vmatprep.subr.mxu0 0.0
    %1685 = vmatpush2.msra.mxu0 0.0
    %1686 = vmatprep.subr.mxu0 0.0
    %1687 = vmatpush2.msra.mxu0 0.0
    %1688 = vmatprep.subr.mxu0 0.0
    %1689 = vmatpush2.msra.mxu0 0.0
    %1690 = vmatprep.mubr.f32.mxu0 0.0
    %1691 = vmatmul.mubr.f32.gmra.mxu0 %v1624
    %v1692 = vpop.f32.mrf.mxu0
    %v1693 = vadd.f32 0.0, %v1692
    %v1694 = vpop.f32.mrf.mxu0
    %1695 = vdwg.mxu0
    %1696 = vrot.lane.b32.xlu0 %v205, 40
    %v1697 = vpop.permute.xlu0 %1696
    %v1700 = vsel %vm211, %v1619, 0
    %1702 = vmatprep.subr.mxu0 0.0
    %1703 = vmatpush1.msra.mxu0 0.0
    %1704 = vmatprep.subr.mxu0 0.0
    %1705 = vmatpush1.msra.mxu0 0.0
    %1706 = vmatprep.subr.mxu0 0.0
    %1707 = vmatpush1.msra.mxu0 0.0
    %1708 = vmatprep.subr.mxu0 0.0
    %1709 = vmatpush1.msra.mxu0 0.0
    %1710 = vmatprep.subr.mxu0 0.0
    %1711 = vmatpush1.msra.mxu0 0.0
    %1712 = vmatprep.subr.mxu0 0.0
    %1713 = vmatpush1.msra.mxu0 0.0
    %1714 = vmatprep.subr.mxu0 0.0
    %1715 = vmatpush1.msra.mxu0 0.0
    %1716 = vmatprep.subr.mxu0 0.0
    %1717 = vmatpush1.msra.mxu0 0.0
    %1718 = vmatprep.subr.mxu0 0.0
    %1719 = vmatpush1.msra.mxu0 0.0
    %1720 = vmatprep.subr.mxu0 0.0
    %1721 = vmatpush1.msra.mxu0 0.0
    %1722 = vmatprep.subr.mxu0 0.0
    %1723 = vmatpush1.msra.mxu0 0.0
    %1724 = vmatprep.subr.mxu0 0.0
    %1725 = vmatpush1.msra.mxu0 0.0
    %1726 = vmatprep.subr.mxu0 0.0
    %1727 = vmatpush1.msra.mxu0 0.0
    %1728 = vmatprep.subr.mxu0 0.0
    %1729 = vmatpush1.msra.mxu0 0.0
    %1730 = vmatprep.subr.mxu0 0.0
    %1731 = vmatpush1.msra.mxu0 0.0
    %1732 = vmatprep.subr.mxu0 0.0
    %1733 = vmatpush1.msra.mxu0 %v1697
    %1734 = vmatprep.subr.mxu0 0.0
    %1735 = vmatpush2.msra.mxu0 0.0
    %1736 = vmatprep.subr.mxu0 0.0
    %1737 = vmatpush2.msra.mxu0 0.0
    %1738 = vmatprep.subr.mxu0 0.0
    %1739 = vmatpush2.msra.mxu0 0.0
    %1740 = vmatprep.subr.mxu0 0.0
    %1741 = vmatpush2.msra.mxu0 0.0
    %1742 = vmatprep.subr.mxu0 0.0
    %1743 = vmatpush2.msra.mxu0 0.0
    %1744 = vmatprep.subr.mxu0 0.0
    %1745 = vmatpush2.msra.mxu0 0.0
    %1746 = vmatprep.subr.mxu0 0.0
    %1747 = vmatpush2.msra.mxu0 0.0
    %1748 = vmatprep.subr.mxu0 0.0
    %1749 = vmatpush2.msra.mxu0 0.0
    %1750 = vmatprep.subr.mxu0 0.0
    %1751 = vmatpush2.msra.mxu0 0.0
    %1752 = vmatprep.subr.mxu0 0.0
    %1753 = vmatpush2.msra.mxu0 0.0
    %1754 = vmatprep.subr.mxu0 0.0
    %1755 = vmatpush2.msra.mxu0 0.0
    %1756 = vmatprep.subr.mxu0 0.0
    %1757 = vmatpush2.msra.mxu0 0.0
    %1758 = vmatprep.subr.mxu0 0.0
    %1759 = vmatpush2.msra.mxu0 0.0
    %1760 = vmatprep.subr.mxu0 0.0
    %1761 = vmatpush2.msra.mxu0 0.0
    %1762 = vmatprep.subr.mxu0 0.0
    %1763 = vmatpush2.msra.mxu0 0.0
    %1764 = vmatprep.subr.mxu0 0.0
    %1765 = vmatpush2.msra.mxu0 0.0
    %1766 = vmatprep.mubr.f32.mxu0 0.0
    %1767 = vmatmul.mubr.f32.gmra.mxu0 %v1700
    %v1768 = vpop.f32.mrf.mxu0
    %v1769 = vadd.f32 0.0, %v1768
    %v1770 = vpop.f32.mrf.mxu0
    %1771 = vdwg.mxu0
    %v1773 = vsel %vm211, %v1693, 0
    %v1776 = vsel %vm211, %v1769, 0
    %1778 = vmatprep.subr.mxu0 0.0
    %1779 = vmatpush1.msra.mxu0 0.0
    %1780 = vmatprep.subr.mxu0 0.0
    %1781 = vmatpush1.msra.mxu0 0.0
    %1782 = vmatprep.subr.mxu0 0.0
    %1783 = vmatpush1.msra.mxu0 0.0
    %1784 = vmatprep.subr.mxu0 0.0
    %1785 = vmatpush1.msra.mxu0 0.0
    %1786 = vmatprep.subr.mxu0 0.0
    %1787 = vmatpush1.msra.mxu0 0.0
    %1788 = vmatprep.subr.mxu0 0.0
    %1789 = vmatpush1.msra.mxu0 0.0
    %1790 = vmatprep.subr.mxu0 0.0
    %1791 = vmatpush1.msra.mxu0 0.0
    %1792 = vmatprep.subr.mxu0 0.0
    %1793 = vmatpush1.msra.mxu0 0.0
    %1794 = vmatprep.subr.mxu0 0.0
    %1795 = vmatpush1.msra.mxu0 0.0
    %1796 = vmatprep.subr.mxu0 0.0
    %1797 = vmatpush1.msra.mxu0 0.0
    %1798 = vmatprep.subr.mxu0 0.0
    %1799 = vmatpush1.msra.mxu0 0.0
    %1800 = vmatprep.subr.mxu0 0.0
    %1801 = vmatpush1.msra.mxu0 0.0
    %1802 = vmatprep.subr.mxu0 0.0
    %1803 = vmatpush1.msra.mxu0 0.0
    %1804 = vmatprep.subr.mxu0 0.0
    %1805 = vmatpush1.msra.mxu0 0.0
    %1806 = vmatprep.subr.mxu0 0.0
    %1807 = vmatpush1.msra.mxu0 0.0
    %1808 = vmatprep.subr.mxu0 0.0
    %1809 = vmatpush1.msra.mxu0 %v55
    %1810 = vmatprep.subr.mxu0 0.0
    %1811 = vmatpush2.msra.mxu0 0.0
    %1812 = vmatprep.subr.mxu0 0.0
    %1813 = vmatpush2.msra.mxu0 0.0
    %1814 = vmatprep.subr.mxu0 0.0
    %1815 = vmatpush2.msra.mxu0 0.0
    %1816 = vmatprep.subr.mxu0 0.0
    %1817 = vmatpush2.msra.mxu0 0.0
    %1818 = vmatprep.subr.mxu0 0.0
    %1819 = vmatpush2.msra.mxu0 0.0
    %1820 = vmatprep.subr.mxu0 0.0
    %1821 = vmatpush2.msra.mxu0 0.0
    %1822 = vmatprep.subr.mxu0 0.0
    %1823 = vmatpush2.msra.mxu0 0.0
    %1824 = vmatprep.subr.mxu0 0.0
    %1825 = vmatpush2.msra.mxu0 0.0
    %1826 = vmatprep.subr.mxu0 0.0
    %1827 = vmatpush2.msra.mxu0 0.0
    %1828 = vmatprep.subr.mxu0 0.0
    %1829 = vmatpush2.msra.mxu0 0.0
    %1830 = vmatprep.subr.mxu0 0.0
    %1831 = vmatpush2.msra.mxu0 0.0
    %1832 = vmatprep.subr.mxu0 0.0
    %1833 = vmatpush2.msra.mxu0 0.0
    %1834 = vmatprep.subr.mxu0 0.0
    %1835 = vmatpush2.msra.mxu0 0.0
    %1836 = vmatprep.subr.mxu0 0.0
    %1837 = vmatpush2.msra.mxu0 0.0
    %1838 = vmatprep.subr.mxu0 0.0
    %1839 = vmatpush2.msra.mxu0 0.0
    %1840 = vmatprep.subr.mxu0 0.0
    %1841 = vmatpush2.msra.mxu0 0.0
    %1842 = vmatprep.mubr.f32.mxu0 0.0
    %1843 = vmatmul.mubr.f32.gmra.mxu0 %v1773
    %v1844 = vpop.f32.mrf.mxu0
    %v1845 = vadd.f32 0.0, %v1844
    %v1846 = vpop.f32.mrf.mxu0
    %1847 = vmatprep.mubr.f32.mxu0 0.0
    %1848 = vmatmul.mubr.f32.gmra.mxu0 %v1776
    %v1849 = vpop.f32.mrf.mxu0
    %v1850 = vadd.f32 0.0, %v1849
    %v1851 = vpop.f32.mrf.mxu0
    %1852 = vdwg.mxu0
    %v1853 = vadd.f32 %v1440, %v1845
    %v1854 = vadd.f32 %v1441, %v1850
    %v1855 = vld [vmem:[%s5] sm:$0x1]
    %v1857 = vlaneseq
    %v1858 = vshrl.u32 %v1857, 7
    %v1859 = vsub.s32 0, %v1858
    %v1860 = vrot.slane %v1855, %v1859
    %v1862 = vadd.f32 %v1853, %v1860
    %v1863 = vadd.f32 %v1854, %v1860
    %v1864 = vadd.f32 %v48, %v1862
    %v1865 = vadd.f32 %v49, %v1863
    %v1866 = vld [vmem:[%s8] sm:$0x1]
    %v1867 = vld [vmem:[%s9] sm:$0x1]
    %v1868 = vsel %vm58, %v1864, 0.0
    %1869 = vadd.xlane.f32.xlu0 %v1868
    %v1870 = vpop.xlane.xlu0 %1869
    %v1871 = vsel %vm58, %v1865, 0.0
    %1872 = vadd.xlane.f32.xlu0 %v1871
    %v1873 = vpop.xlane.xlu0 %1872
    %v1874 = vmul.f32 %v1870, %v65
    %v1875 = vmul.f32 %v1873, %v65
    %v1876 = vsub.f32 %v1864, %v1874
    %v1877 = vsub.f32 %v1865, %v1875
    %v1878 = vmul.f32 %v1876, %v1876
    %v1879 = vmul.f32 %v1877, %v1877
    %v1880 = vsel %vm58, %v1878, 0.0
    %1881 = vadd.xlane.f32.xlu0 %v1880
    %v1882 = vpop.xlane.xlu0 %1881
    %v1883 = vsel %vm58, %v1879, 0.0
    %1884 = vadd.xlane.f32.xlu0 %v1883
    %v1885 = vpop.xlane.xlu0 %1884
    %v1886 = vmul.f32 %v1882, 0.032258064
    %v1887 = vmul.f32 %v1885, 0.032258064
    %v1888 = vrsqrt.pop %v1886
    %v1889 = vmul.f32 %v1886, %v1888
    %vm1890 = vcmp.eq.f32.partialorder %v1886, inf
    %v1891 = vsel %vm1890, %v1886, %v1889
    %vm1892 = vcmp.eq.f32.partialorder %v1886, 0.0
    %v1893 = vand.u32 %v1886, 2147483648
    %v1894 = vsel %vm1892, %v1893, %v1891
    %v1895 = vrsqrt.pop %v1887
    %v1896 = vmul.f32 %v1887, %v1895
    %vm1897 = vcmp.eq.f32.partialorder %v1887, inf
    %v1898 = vsel %vm1897, %v1887, %v1896
    %vm1899 = vcmp.eq.f32.partialorder %v1887, 0.0
    %v1900 = vand.u32 %v1887, 2147483648
    %v1901 = vsel %vm1899, %v1900, %v1898
    %v1902 = vadd.f32 %v1894, 1e-06
    %v1903 = vadd.f32 %v1901, 1e-06
    %v1904 = vrcp.pop %v1902
    %v1905 = vrcp.pop %v1903
    %v1907 = vlaneseq
    %v1908 = vshrl.u32 %v1907, 7
    %v1909 = vsub.s32 0, %v1908
    %v1910 = vrot.slane %v1866, %v1909
    %v1912 = vmul.f32 %v1910, %v1876
    %v1913 = vmul.f32 %v1910, %v1877
    %v1914 = vmul.f32 %v1912, %v1904
    %v1915 = vmul.f32 %v1913, %v1905
    %v1917 = vlaneseq
    %v1918 = vshrl.u32 %v1917, 7
    %v1919 = vsub.s32 0, %v1918
    %v1920 = vrot.slane %v1867, %v1919
    %v1922 = vadd.f32 %v1914, %v1920
    %v1923 = vadd.f32 %v1915, %v1920
    %v1924 = vld [vmem:[%s10] sm:$0xff]
    %v1925 = vld [vmem:[%s10 + $0x8] sm:$0xff]
    %v1926 = vld [vmem:[%s10 + $0x10] sm:$0xff]
    %v1927 = vld [vmem:[%s10 + $0x18] sm:$0xff]
    %v1928 = vld [vmem:[%s10 + $0x20] sm:$0xff]
    %v1929 = vld [vmem:[%s10 + $0x28] sm:$0xff]
    %v1930 = vld [vmem:[%s10 + $0x30] sm:$0xff]
    %v1931 = vld [vmem:[%s10 + $0x38] sm:$0xff]
    %v1932 = vld [vmem:[%s10 + $0x40] sm:$0xff]
    %v1933 = vld [vmem:[%s10 + $0x48] sm:$0xff]
    %v1934 = vld [vmem:[%s10 + $0x50] sm:$0xff]
    %v1935 = vld [vmem:[%s10 + $0x58] sm:$0xff]
    %v1936 = vld [vmem:[%s10 + $0x60] sm:$0xff]
    %v1937 = vld [vmem:[%s10 + $0x68] sm:$0xff]
    %v1938 = vld [vmem:[%s10 + $0x70] sm:$0xff]
    %v1939 = vld [vmem:[%s10 + $0x78] sm:$0xff]
    %v1940 = vld [vmem:[%s10 + $0x80] sm:$0xff]
    %v1941 = vld [vmem:[%s10 + $0x88] sm:$0xff]
    %v1942 = vld [vmem:[%s10 + $0x90] sm:$0xff]
    %v1943 = vld [vmem:[%s10 + $0x98] sm:$0xff]
    %v1944 = vld [vmem:[%s10 + $0xa0] sm:$0xff]
    %v1945 = vld [vmem:[%s10 + $0xa8] sm:$0xff]
    %v1946 = vld [vmem:[%s10 + $0xb0] sm:$0xff]
    %v1947 = vld [vmem:[%s10 + $0xb8] sm:$0xff]
    %v1948 = vld [vmem:[%s10 + $0xc0] sm:$0xff]
    %v1949 = vld [vmem:[%s10 + $0xc8] sm:$0xff]
    %v1950 = vld [vmem:[%s10 + $0xd0] sm:$0xff]
    %v1951 = vld [vmem:[%s10 + $0xd8] sm:$0xff]
    %v1952 = vld [vmem:[%s10 + $0xe0] sm:$0xff]
    %v1953 = vld [vmem:[%s10 + $0xe8] sm:$0xff]
    %v1954 = vld [vmem:[%s10 + $0xf0] sm:$0xff]
    %v1955 = vld [vmem:[%s10 + $0xf8] sm:$0xff]
    %v1956 = vld [vmem:[%s10 + $0x100] sm:$0xff]
    %v1957 = vld [vmem:[%s10 + $0x108] sm:$0xff]
    %v1958 = vld [vmem:[%s10 + $0x110] sm:$0xff]
    %v1959 = vld [vmem:[%s10 + $0x118] sm:$0xff]
    %v1960 = vld [vmem:[%s10 + $0x120] sm:$0xff]
    %v1961 = vld [vmem:[%s10 + $0x128] sm:$0xff]
    %v1962 = vld [vmem:[%s10 + $0x130] sm:$0xff]
    %v1963 = vld [vmem:[%s10 + $0x138] sm:$0xff]
    %v1964 = vld [vmem:[%s10 + $0x140] sm:$0xff]
    %v1965 = vld [vmem:[%s10 + $0x148] sm:$0xff]
    %v1966 = vld [vmem:[%s10 + $0x150] sm:$0xff]
    %v1967 = vld [vmem:[%s10 + $0x158] sm:$0xff]
    %v1968 = vld [vmem:[%s10 + $0x160] sm:$0xff]
    %v1969 = vld [vmem:[%s10 + $0x168] sm:$0xff]
    %v1970 = vld [vmem:[%s10 + $0x170] sm:$0xff]
    %v1971 = vld [vmem:[%s10 + $0x178] sm:$0xff]
    %v1972 = vld [vmem:[%s10 + $0x180] sm:$0xff]
    %v1973 = vld [vmem:[%s10 + $0x188] sm:$0xff]
    %v1974 = vld [vmem:[%s10 + $0x190] sm:$0xff]
    %v1975 = vld [vmem:[%s10 + $0x198] sm:$0xff]
    %v1976 = vld [vmem:[%s10 + $0x1a0] sm:$0xff]
    %v1977 = vld [vmem:[%s10 + $0x1a8] sm:$0xff]
    %v1978 = vld [vmem:[%s10 + $0x1b0] sm:$0xff]
    %v1979 = vld [vmem:[%s10 + $0x1b8] sm:$0xff]
    %v1980 = vld [vmem:[%s10 + $0x1c0] sm:$0xff]
    %v1981 = vld [vmem:[%s10 + $0x1c8] sm:$0xff]
    %v1982 = vld [vmem:[%s10 + $0x1d0] sm:$0xff]
    %v1983 = vld [vmem:[%s10 + $0x1d8] sm:$0xff]
    %v1984 = vld [vmem:[%s10 + $0x1e0] sm:$0xff]
    %v1985 = vld [vmem:[%s10 + $0x1e8] sm:$0xff]
    %v1986 = vld [vmem:[%s10 + $0x1f0] sm:$0xff]
    %v1987 = vld [vmem:[%s10 + $0x1f8] sm:$0xff]
    %v1988 = vld [vmem:[%s11] sm:$0xff]
    %v1989 = vld [vmem:[%s11 + $0x8] sm:$0xff]
    %v1992 = vlaneseq
    %v1993 = vshrl.u32 %v1992, 7
    %v1994 = vsub.s32 0, %v1993
    %v1995 = vrot.slane %v1988, %v1994
    %v1996 = vlaneseq
    %v1997 = vshrl.u32 %v1996, 7
    %v1998 = vsub.s32 1, %v1997
    %v1999 = vrot.slane %v1988, %v1998
    %v2000 = vlaneseq
    %v2001 = vshrl.u32 %v2000, 7
    %v2002 = vsub.s32 2, %v2001
    %v2003 = vrot.slane %v1988, %v2002
    %v2004 = vlaneseq
    %v2005 = vshrl.u32 %v2004, 7
    %v2006 = vsub.s32 3, %v2005
    %v2007 = vrot.slane %v1988, %v2006
    %v2008 = vlaneseq
    %v2009 = vshrl.u32 %v2008, 7
    %v2010 = vsub.s32 4, %v2009
    %v2011 = vrot.slane %v1988, %v2010
    %v2012 = vlaneseq
    %v2013 = vshrl.u32 %v2012, 7
    %v2014 = vsub.s32 5, %v2013
    %v2015 = vrot.slane %v1988, %v2014
    %v2016 = vlaneseq
    %v2017 = vshrl.u32 %v2016, 7
    %v2018 = vsub.s32 6, %v2017
    %v2019 = vrot.slane %v1988, %v2018
    %v2020 = vlaneseq
    %v2021 = vshrl.u32 %v2020, 7
    %v2022 = vsub.s32 7, %v2021
    %v2023 = vrot.slane %v1988, %v2022
    %v2024 = vlaneseq
    %v2025 = vshrl.u32 %v2024, 7
    %v2026 = vsub.s32 0, %v2025
    %v2027 = vrot.slane %v1989, %v2026
    %v2028 = vlaneseq
    %v2029 = vshrl.u32 %v2028, 7
    %v2030 = vsub.s32 1, %v2029
    %v2031 = vrot.slane %v1989, %v2030
    %v2032 = vlaneseq
    %v2033 = vshrl.u32 %v2032, 7
    %v2034 = vsub.s32 2, %v2033
    %v2035 = vrot.slane %v1989, %v2034
    %v2036 = vlaneseq
    %v2037 = vshrl.u32 %v2036, 7
    %v2038 = vsub.s32 3, %v2037
    %v2039 = vrot.slane %v1989, %v2038
    %v2040 = vlaneseq
    %v2041 = vshrl.u32 %v2040, 7
    %v2042 = vsub.s32 4, %v2041
    %v2043 = vrot.slane %v1989, %v2042
    %v2044 = vlaneseq
    %v2045 = vshrl.u32 %v2044, 7
    %v2046 = vsub.s32 5, %v2045
    %v2047 = vrot.slane %v1989, %v2046
    %v2048 = vlaneseq
    %v2049 = vshrl.u32 %v2048, 7
    %v2050 = vsub.s32 6, %v2049
    %v2051 = vrot.slane %v1989, %v2050
    %v2052 = vlaneseq
    %v2053 = vshrl.u32 %v2052, 7
    %v2054 = vsub.s32 7, %v2053
    %v2055 = vrot.slane %v1989, %v2054
    %v2073 = vsel %vm58, %v1922, 0
    %v2076 = vsel %vm58, %v1923, 0
    %2078 = vmatprep.subr.mxu0 0.0
    %2079 = vmatpush1.msra.mxu0 0.0
    %2080 = vmatprep.subr.mxu0 0.0
    %2081 = vmatpush1.msra.mxu0 0.0
    %2082 = vmatprep.subr.mxu0 0.0
    %2083 = vmatpush1.msra.mxu0 0.0
    %2084 = vmatprep.subr.mxu0 0.0
    %2085 = vmatpush1.msra.mxu0 0.0
    %2086 = vmatprep.subr.mxu0 0.0
    %2087 = vmatpush1.msra.mxu0 0.0
    %2088 = vmatprep.subr.mxu0 0.0
    %2089 = vmatpush1.msra.mxu0 0.0
    %2090 = vmatprep.subr.mxu0 0.0
    %2091 = vmatpush1.msra.mxu0 0.0
    %2092 = vmatprep.subr.mxu0 0.0
    %2093 = vmatpush1.msra.mxu0 0.0
    %2094 = vmatprep.subr.mxu0 0.0
    %2095 = vmatpush1.msra.mxu0 0.0
    %2096 = vmatprep.subr.mxu0 0.0
    %2097 = vmatpush1.msra.mxu0 0.0
    %2098 = vmatprep.subr.mxu0 0.0
    %2099 = vmatpush1.msra.mxu0 0.0
    %2100 = vmatprep.subr.mxu0 0.0
    %2101 = vmatpush1.msra.mxu0 0.0
    %2102 = vmatprep.subr.mxu0 %v1973
    %2103 = vmatpush1.msra.mxu0 %v1972
    %2104 = vmatprep.subr.mxu0 %v1957
    %2105 = vmatpush1.msra.mxu0 %v1956
    %2106 = vmatprep.subr.mxu0 %v1941
    %2107 = vmatpush1.msra.mxu0 %v1940
    %2108 = vmatprep.subr.mxu0 %v1925
    %2109 = vmatpush1.msra.mxu0 %v1924
    %2110 = vmatprep.subr.mxu0 0.0
    %2111 = vmatpush2.msra.mxu0 0.0
    %2112 = vmatprep.subr.mxu0 0.0
    %2113 = vmatpush2.msra.mxu0 0.0
    %2114 = vmatprep.subr.mxu0 0.0
    %2115 = vmatpush2.msra.mxu0 0.0
    %2116 = vmatprep.subr.mxu0 0.0
    %2117 = vmatpush2.msra.mxu0 0.0
    %2118 = vmatprep.subr.mxu0 0.0
    %2119 = vmatpush2.msra.mxu0 0.0
    %2120 = vmatprep.subr.mxu0 0.0
    %2121 = vmatpush2.msra.mxu0 0.0
    %2122 = vmatprep.subr.mxu0 0.0
    %2123 = vmatpush2.msra.mxu0 0.0
    %2124 = vmatprep.subr.mxu0 0.0
    %2125 = vmatpush2.msra.mxu0 0.0
    %2126 = vmatprep.subr.mxu0 0.0
    %2127 = vmatpush2.msra.mxu0 0.0
    %2128 = vmatprep.subr.mxu0 0.0
    %2129 = vmatpush2.msra.mxu0 0.0
    %2130 = vmatprep.subr.mxu0 0.0
    %2131 = vmatpush2.msra.mxu0 0.0
    %2132 = vmatprep.subr.mxu0 0.0
    %2133 = vmatpush2.msra.mxu0 0.0
    %2134 = vmatprep.subr.mxu0 0.0
    %2135 = vmatpush2.msra.mxu0 0.0
    %2136 = vmatprep.subr.mxu0 0.0
    %2137 = vmatpush2.msra.mxu0 0.0
    %2138 = vmatprep.subr.mxu0 0.0
    %2139 = vmatpush2.msra.mxu0 0.0
    %2140 = vmatprep.subr.mxu0 0.0
    %2141 = vmatpush2.msra.mxu0 0.0
    %2142 = vmatprep.mubr.f32.mxu0 0.0
    %2143 = vmatmul.mubr.f32.gmra.mxu0 %v2073
    %v2144 = vpop.f32.mrf.mxu0
    %v2145 = vadd.f32 %v1995, %v2144
    %v2146 = vpop.f32.mrf.mxu0
    %v2147 = vadd.f32 %v1999, %v2146
    %2148 = vmatprep.mubr.f32.mxu0 0.0
    %2149 = vmatmul.mubr.f32.gmra.mxu0 %v2076
    %v2150 = vpop.f32.mrf.mxu0
    %v2151 = vadd.f32 %v1995, %v2150
    %v2152 = vpop.f32.mrf.mxu0
    %v2153 = vadd.f32 %v1999, %v2152
    %2154 = vdwg.mxu0
    %2155 = vmatprep.subr.mxu0 0.0
    %2156 = vmatpush1.msra.mxu0 0.0
    %2157 = vmatprep.subr.mxu0 0.0
    %2158 = vmatpush1.msra.mxu0 0.0
    %2159 = vmatprep.subr.mxu0 0.0
    %2160 = vmatpush1.msra.mxu0 0.0
    %2161 = vmatprep.subr.mxu0 0.0
    %2162 = vmatpush1.msra.mxu0 0.0
    %2163 = vmatprep.subr.mxu0 0.0
    %2164 = vmatpush1.msra.mxu0 0.0
    %2165 = vmatprep.subr.mxu0 0.0
    %2166 = vmatpush1.msra.mxu0 0.0
    %2167 = vmatprep.subr.mxu0 0.0
    %2168 = vmatpush1.msra.mxu0 0.0
    %2169 = vmatprep.subr.mxu0 0.0
    %2170 = vmatpush1.msra.mxu0 0.0
    %2171 = vmatprep.subr.mxu0 0.0
    %2172 = vmatpush1.msra.mxu0 0.0
    %2173 = vmatprep.subr.mxu0 0.0
    %2174 = vmatpush1.msra.mxu0 0.0
    %2175 = vmatprep.subr.mxu0 0.0
    %2176 = vmatpush1.msra.mxu0 0.0
    %2177 = vmatprep.subr.mxu0 0.0
    %2178 = vmatpush1.msra.mxu0 0.0
    %2179 = vmatprep.subr.mxu0 %v1975
    %2180 = vmatpush1.msra.mxu0 %v1974
    %2181 = vmatprep.subr.mxu0 %v1959
    %2182 = vmatpush1.msra.mxu0 %v1958
    %2183 = vmatprep.subr.mxu0 %v1943
    %2184 = vmatpush1.msra.mxu0 %v1942
    %2185 = vmatprep.subr.mxu0 %v1927
    %2186 = vmatpush1.msra.mxu0 %v1926
    %2187 = vmatprep.subr.mxu0 0.0
    %2188 = vmatpush2.msra.mxu0 0.0
    %2189 = vmatprep.subr.mxu0 0.0
    %2190 = vmatpush2.msra.mxu0 0.0
    %2191 = vmatprep.subr.mxu0 0.0
    %2192 = vmatpush2.msra.mxu0 0.0
    %2193 = vmatprep.subr.mxu0 0.0
    %2194 = vmatpush2.msra.mxu0 0.0
    %2195 = vmatprep.subr.mxu0 0.0
    %2196 = vmatpush2.msra.mxu0 0.0
    %2197 = vmatprep.subr.mxu0 0.0
    %2198 = vmatpush2.msra.mxu0 0.0
    %2199 = vmatprep.subr.mxu0 0.0
    %2200 = vmatpush2.msra.mxu0 0.0
    %2201 = vmatprep.subr.mxu0 0.0
    %2202 = vmatpush2.msra.mxu0 0.0
    %2203 = vmatprep.subr.mxu0 0.0
    %2204 = vmatpush2.msra.mxu0 0.0
    %2205 = vmatprep.subr.mxu0 0.0
    %2206 = vmatpush2.msra.mxu0 0.0
    %2207 = vmatprep.subr.mxu0 0.0
    %2208 = vmatpush2.msra.mxu0 0.0
    %2209 = vmatprep.subr.mxu0 0.0
    %2210 = vmatpush2.msra.mxu0 0.0
    %2211 = vmatprep.subr.mxu0 0.0
    %2212 = vmatpush2.msra.mxu0 0.0
    %2213 = vmatprep.subr.mxu0 0.0
    %2214 = vmatpush2.msra.mxu0 0.0
    %2215 = vmatprep.subr.mxu0 0.0
    %2216 = vmatpush2.msra.mxu0 0.0
    %2217 = vmatprep.subr.mxu0 0.0
    %2218 = vmatpush2.msra.mxu0 0.0
    %2219 = vmatprep.mubr.f32.mxu0 0.0
    %2220 = vmatmul.mubr.f32.gmra.mxu0 %v2073
    %v2221 = vpop.f32.mrf.mxu0
    %v2222 = vadd.f32 %v2003, %v2221
    %v2223 = vpop.f32.mrf.mxu0
    %v2224 = vadd.f32 %v2007, %v2223
    %2225 = vmatprep.mubr.f32.mxu0 0.0
    %2226 = vmatmul.mubr.f32.gmra.mxu0 %v2076
    %v2227 = vpop.f32.mrf.mxu0
    %v2228 = vadd.f32 %v2003, %v2227
    %v2229 = vpop.f32.mrf.mxu0
    %v2230 = vadd.f32 %v2007, %v2229
    %2231 = vdwg.mxu0
    %2232 = vmatprep.subr.mxu0 0.0
    %2233 = vmatpush1.msra.mxu0 0.0
    %2234 = vmatprep.subr.mxu0 0.0
    %2235 = vmatpush1.msra.mxu0 0.0
    %2236 = vmatprep.subr.mxu0 0.0
    %2237 = vmatpush1.msra.mxu0 0.0
    %2238 = vmatprep.subr.mxu0 0.0
    %2239 = vmatpush1.msra.mxu0 0.0
    %2240 = vmatprep.subr.mxu0 0.0
    %2241 = vmatpush1.msra.mxu0 0.0
    %2242 = vmatprep.subr.mxu0 0.0
    %2243 = vmatpush1.msra.mxu0 0.0
    %2244 = vmatprep.subr.mxu0 0.0
    %2245 = vmatpush1.msra.mxu0 0.0
    %2246 = vmatprep.subr.mxu0 0.0
    %2247 = vmatpush1.msra.mxu0 0.0
    %2248 = vmatprep.subr.mxu0 0.0
    %2249 = vmatpush1.msra.mxu0 0.0
    %2250 = vmatprep.subr.mxu0 0.0
    %2251 = vmatpush1.msra.mxu0 0.0
    %2252 = vmatprep.subr.mxu0 0.0
    %2253 = vmatpush1.msra.mxu0 0.0
    %2254 = vmatprep.subr.mxu0 0.0
    %2255 = vmatpush1.msra.mxu0 0.0
    %2256 = vmatprep.subr.mxu0 %v1977
    %2257 = vmatpush1.msra.mxu0 %v1976
    %2258 = vmatprep.subr.mxu0 %v1961
    %2259 = vmatpush1.msra.mxu0 %v1960
    %2260 = vmatprep.subr.mxu0 %v1945
    %2261 = vmatpush1.msra.mxu0 %v1944
    %2262 = vmatprep.subr.mxu0 %v1929
    %2263 = vmatpush1.msra.mxu0 %v1928
    %2264 = vmatprep.subr.mxu0 0.0
    %2265 = vmatpush2.msra.mxu0 0.0
    %2266 = vmatprep.subr.mxu0 0.0
    %2267 = vmatpush2.msra.mxu0 0.0
    %2268 = vmatprep.subr.mxu0 0.0
    %2269 = vmatpush2.msra.mxu0 0.0
    %2270 = vmatprep.subr.mxu0 0.0
    %2271 = vmatpush2.msra.mxu0 0.0
    %2272 = vmatprep.subr.mxu0 0.0
    %2273 = vmatpush2.msra.mxu0 0.0
    %2274 = vmatprep.subr.mxu0 0.0
    %2275 = vmatpush2.msra.mxu0 0.0
    %2276 = vmatprep.subr.mxu0 0.0
    %2277 = vmatpush2.msra.mxu0 0.0
    %2278 = vmatprep.subr.mxu0 0.0
    %2279 = vmatpush2.msra.mxu0 0.0
    %2280 = vmatprep.subr.mxu0 0.0
    %2281 = vmatpush2.msra.mxu0 0.0
    %2282 = vmatprep.subr.mxu0 0.0
    %2283 = vmatpush2.msra.mxu0 0.0
    %2284 = vmatprep.subr.mxu0 0.0
    %2285 = vmatpush2.msra.mxu0 0.0
    %2286 = vmatprep.subr.mxu0 0.0
    %2287 = vmatpush2.msra.mxu0 0.0
    %2288 = vmatprep.subr.mxu0 0.0
    %2289 = vmatpush2.msra.mxu0 0.0
    %2290 = vmatprep.subr.mxu0 0.0
    %2291 = vmatpush2.msra.mxu0 0.0
    %2292 = vmatprep.subr.mxu0 0.0
    %2293 = vmatpush2.msra.mxu0 0.0
    %2294 = vmatprep.subr.mxu0 0.0
    %2295 = vmatpush2.msra.mxu0 0.0
    %2296 = vmatprep.mubr.f32.mxu0 0.0
    %2297 = vmatmul.mubr.f32.gmra.mxu0 %v2073
    %v2298 = vpop.f32.mrf.mxu0
    %v2299 = vadd.f32 %v2011, %v2298
    %v2300 = vpop.f32.mrf.mxu0
    %v2301 = vadd.f32 %v2015, %v2300
    %2302 = vmatprep.mubr.f32.mxu0 0.0
    %2303 = vmatmul.mubr.f32.gmra.mxu0 %v2076
    %v2304 = vpop.f32.mrf.mxu0
    %v2305 = vadd.f32 %v2011, %v2304
    %v2306 = vpop.f32.mrf.mxu0
    %v2307 = vadd.f32 %v2015, %v2306
    %2308 = vdwg.mxu0
    %2309 = vmatprep.subr.mxu0 0.0
    %2310 = vmatpush1.msra.mxu0 0.0
    %2311 = vmatprep.subr.mxu0 0.0
    %2312 = vmatpush1.msra.mxu0 0.0
    %2313 = vmatprep.subr.mxu0 0.0
    %2314 = vmatpush1.msra.mxu0 0.0
    %2315 = vmatprep.subr.mxu0 0.0
    %2316 = vmatpush1.msra.mxu0 0.0
    %2317 = vmatprep.subr.mxu0 0.0
    %2318 = vmatpush1.msra.mxu0 0.0
    %2319 = vmatprep.subr.mxu0 0.0
    %2320 = vmatpush1.msra.mxu0 0.0
    %2321 = vmatprep.subr.mxu0 0.0
    %2322 = vmatpush1.msra.mxu0 0.0
    %2323 = vmatprep.subr.mxu0 0.0
    %2324 = vmatpush1.msra.mxu0 0.0
    %2325 = vmatprep.subr.mxu0 0.0
    %2326 = vmatpush1.msra.mxu0 0.0
    %2327 = vmatprep.subr.mxu0 0.0
    %2328 = vmatpush1.msra.mxu0 0.0
    %2329 = vmatprep.subr.mxu0 0.0
    %2330 = vmatpush1.msra.mxu0 0.0
    %2331 = vmatprep.subr.mxu0 0.0
    %2332 = vmatpush1.msra.mxu0 0.0
    %2333 = vmatprep.subr.mxu0 %v1979
    %2334 = vmatpush1.msra.mxu0 %v1978
    %2335 = vmatprep.subr.mxu0 %v1963
    %2336 = vmatpush1.msra.mxu0 %v1962
    %2337 = vmatprep.subr.mxu0 %v1947
    %2338 = vmatpush1.msra.mxu0 %v1946
    %2339 = vmatprep.subr.mxu0 %v1931
    %2340 = vmatpush1.msra.mxu0 %v1930
    %2341 = vmatprep.subr.mxu0 0.0
    %2342 = vmatpush2.msra.mxu0 0.0
    %2343 = vmatprep.subr.mxu0 0.0
    %2344 = vmatpush2.msra.mxu0 0.0
    %2345 = vmatprep.subr.mxu0 0.0
    %2346 = vmatpush2.msra.mxu0 0.0
    %2347 = vmatprep.subr.mxu0 0.0
    %2348 = vmatpush2.msra.mxu0 0.0
    %2349 = vmatprep.subr.mxu0 0.0
    %2350 = vmatpush2.msra.mxu0 0.0
    %2351 = vmatprep.subr.mxu0 0.0
    %2352 = vmatpush2.msra.mxu0 0.0
    %2353 = vmatprep.subr.mxu0 0.0
    %2354 = vmatpush2.msra.mxu0 0.0
    %2355 = vmatprep.subr.mxu0 0.0
    %2356 = vmatpush2.msra.mxu0 0.0
    %2357 = vmatprep.subr.mxu0 0.0
    %2358 = vmatpush2.msra.mxu0 0.0
    %2359 = vmatprep.subr.mxu0 0.0
    %2360 = vmatpush2.msra.mxu0 0.0
    %2361 = vmatprep.subr.mxu0 0.0
    %2362 = vmatpush2.msra.mxu0 0.0
    %2363 = vmatprep.subr.mxu0 0.0
    %2364 = vmatpush2.msra.mxu0 0.0
    %2365 = vmatprep.subr.mxu0 0.0
    %2366 = vmatpush2.msra.mxu0 0.0
    %2367 = vmatprep.subr.mxu0 0.0
    %2368 = vmatpush2.msra.mxu0 0.0
    %2369 = vmatprep.subr.mxu0 0.0
    %2370 = vmatpush2.msra.mxu0 0.0
    %2371 = vmatprep.subr.mxu0 0.0
    %2372 = vmatpush2.msra.mxu0 0.0
    %2373 = vmatprep.mubr.f32.mxu0 0.0
    %2374 = vmatmul.mubr.f32.gmra.mxu0 %v2073
    %v2375 = vpop.f32.mrf.mxu0
    %v2376 = vadd.f32 %v2019, %v2375
    %v2377 = vpop.f32.mrf.mxu0
    %v2378 = vadd.f32 %v2023, %v2377
    %2379 = vmatprep.mubr.f32.mxu0 0.0
    %2380 = vmatmul.mubr.f32.gmra.mxu0 %v2076
    %v2381 = vpop.f32.mrf.mxu0
    %v2382 = vadd.f32 %v2019, %v2381
    %v2383 = vpop.f32.mrf.mxu0
    %v2384 = vadd.f32 %v2023, %v2383
    %2385 = vdwg.mxu0
    %2386 = vmatprep.subr.mxu0 0.0
    %2387 = vmatpush1.msra.mxu0 0.0
    %2388 = vmatprep.subr.mxu0 0.0
    %2389 = vmatpush1.msra.mxu0 0.0
    %2390 = vmatprep.subr.mxu0 0.0
    %2391 = vmatpush1.msra.mxu0 0.0
    %2392 = vmatprep.subr.mxu0 0.0
    %2393 = vmatpush1.msra.mxu0 0.0
    %2394 = vmatprep.subr.mxu0 0.0
    %2395 = vmatpush1.msra.mxu0 0.0
    %2396 = vmatprep.subr.mxu0 0.0
    %2397 = vmatpush1.msra.mxu0 0.0
    %2398 = vmatprep.subr.mxu0 0.0
    %2399 = vmatpush1.msra.mxu0 0.0
    %2400 = vmatprep.subr.mxu0 0.0
    %2401 = vmatpush1.msra.mxu0 0.0
    %2402 = vmatprep.subr.mxu0 0.0
    %2403 = vmatpush1.msra.mxu0 0.0
    %2404 = vmatprep.subr.mxu0 0.0
    %2405 = vmatpush1.msra.mxu0 0.0
    %2406 = vmatprep.subr.mxu0 0.0
    %2407 = vmatpush1.msra.mxu0 0.0
    %2408 = vmatprep.subr.mxu0 0.0
    %2409 = vmatpush1.msra.mxu0 0.0
    %2410 = vmatprep.subr.mxu0 %v1981
    %2411 = vmatpush1.msra.mxu0 %v1980
    %2412 = vmatprep.subr.mxu0 %v1965
    %2413 = vmatpush1.msra.mxu0 %v1964
    %2414 = vmatprep.subr.mxu0 %v1949
    %2415 = vmatpush1.msra.mxu0 %v1948
    %2416 = vmatprep.subr.mxu0 %v1933
    %2417 = vmatpush1.msra.mxu0 %v1932
    %2418 = vmatprep.subr.mxu0 0.0
    %2419 = vmatpush2.msra.mxu0 0.0
    %2420 = vmatprep.subr.mxu0 0.0
    %2421 = vmatpush2.msra.mxu0 0.0
    %2422 = vmatprep.subr.mxu0 0.0
    %2423 = vmatpush2.msra.mxu0 0.0
    %2424 = vmatprep.subr.mxu0 0.0
    %2425 = vmatpush2.msra.mxu0 0.0
    %2426 = vmatprep.subr.mxu0 0.0
    %2427 = vmatpush2.msra.mxu0 0.0
    %2428 = vmatprep.subr.mxu0 0.0
    %2429 = vmatpush2.msra.mxu0 0.0
    %2430 = vmatprep.subr.mxu0 0.0
    %2431 = vmatpush2.msra.mxu0 0.0
    %2432 = vmatprep.subr.mxu0 0.0
    %2433 = vmatpush2.msra.mxu0 0.0
    %2434 = vmatprep.subr.mxu0 0.0
    %2435 = vmatpush2.msra.mxu0 0.0
    %2436 = vmatprep.subr.mxu0 0.0
    %2437 = vmatpush2.msra.mxu0 0.0
    %2438 = vmatprep.subr.mxu0 0.0
    %2439 = vmatpush2.msra.mxu0 0.0
    %2440 = vmatprep.subr.mxu0 0.0
    %2441 = vmatpush2.msra.mxu0 0.0
    %2442 = vmatprep.subr.mxu0 0.0
    %2443 = vmatpush2.msra.mxu0 0.0
    %2444 = vmatprep.subr.mxu0 0.0
    %2445 = vmatpush2.msra.mxu0 0.0
    %2446 = vmatprep.subr.mxu0 0.0
    %2447 = vmatpush2.msra.mxu0 0.0
    %2448 = vmatprep.subr.mxu0 0.0
    %2449 = vmatpush2.msra.mxu0 0.0
    %2450 = vmatprep.mubr.f32.mxu0 0.0
    %2451 = vmatmul.mubr.f32.gmra.mxu0 %v2073
    %v2452 = vpop.f32.mrf.mxu0
    %v2453 = vadd.f32 %v2027, %v2452
    %v2454 = vpop.f32.mrf.mxu0
    %v2455 = vadd.f32 %v2031, %v2454
    %2456 = vmatprep.mubr.f32.mxu0 0.0
    %2457 = vmatmul.mubr.f32.gmra.mxu0 %v2076
    %v2458 = vpop.f32.mrf.mxu0
    %v2459 = vadd.f32 %v2027, %v2458
    %v2460 = vpop.f32.mrf.mxu0
    %v2461 = vadd.f32 %v2031, %v2460
    %2462 = vdwg.mxu0
    %2463 = vmatprep.subr.mxu0 0.0
    %2464 = vmatpush1.msra.mxu0 0.0
    %2465 = vmatprep.subr.mxu0 0.0
    %2466 = vmatpush1.msra.mxu0 0.0
    %2467 = vmatprep.subr.mxu0 0.0
    %2468 = vmatpush1.msra.mxu0 0.0
    %2469 = vmatprep.subr.mxu0 0.0
    %2470 = vmatpush1.msra.mxu0 0.0
    %2471 = vmatprep.subr.mxu0 0.0
    %2472 = vmatpush1.msra.mxu0 0.0
    %2473 = vmatprep.subr.mxu0 0.0
    %2474 = vmatpush1.msra.mxu0 0.0
    %2475 = vmatprep.subr.mxu0 0.0
    %2476 = vmatpush1.msra.mxu0 0.0
    %2477 = vmatprep.subr.mxu0 0.0
    %2478 = vmatpush1.msra.mxu0 0.0
    %2479 = vmatprep.subr.mxu0 0.0
    %2480 = vmatpush1.msra.mxu0 0.0
    %2481 = vmatprep.subr.mxu0 0.0
    %2482 = vmatpush1.msra.mxu0 0.0
    %2483 = vmatprep.subr.mxu0 0.0
    %2484 = vmatpush1.msra.mxu0 0.0
    %2485 = vmatprep.subr.mxu0 0.0
    %2486 = vmatpush1.msra.mxu0 0.0
    %2487 = vmatprep.subr.mxu0 %v1983
    %2488 = vmatpush1.msra.mxu0 %v1982
    %2489 = vmatprep.subr.mxu0 %v1967
    %2490 = vmatpush1.msra.mxu0 %v1966
    %2491 = vmatprep.subr.mxu0 %v1951
    %2492 = vmatpush1.msra.mxu0 %v1950
    %2493 = vmatprep.subr.mxu0 %v1935
    %2494 = vmatpush1.msra.mxu0 %v1934
    %2495 = vmatprep.subr.mxu0 0.0
    %2496 = vmatpush2.msra.mxu0 0.0
    %2497 = vmatprep.subr.mxu0 0.0
    %2498 = vmatpush2.msra.mxu0 0.0
    %2499 = vmatprep.subr.mxu0 0.0
    %2500 = vmatpush2.msra.mxu0 0.0
    %2501 = vmatprep.subr.mxu0 0.0
    %2502 = vmatpush2.msra.mxu0 0.0
    %2503 = vmatprep.subr.mxu0 0.0
    %2504 = vmatpush2.msra.mxu0 0.0
    %2505 = vmatprep.subr.mxu0 0.0
    %2506 = vmatpush2.msra.mxu0 0.0
    %2507 = vmatprep.subr.mxu0 0.0
    %2508 = vmatpush2.msra.mxu0 0.0
    %2509 = vmatprep.subr.mxu0 0.0
    %2510 = vmatpush2.msra.mxu0 0.0
    %2511 = vmatprep.subr.mxu0 0.0
    %2512 = vmatpush2.msra.mxu0 0.0
    %2513 = vmatprep.subr.mxu0 0.0
    %2514 = vmatpush2.msra.mxu0 0.0
    %2515 = vmatprep.subr.mxu0 0.0
    %2516 = vmatpush2.msra.mxu0 0.0
    %2517 = vmatprep.subr.mxu0 0.0
    %2518 = vmatpush2.msra.mxu0 0.0
    %2519 = vmatprep.subr.mxu0 0.0
    %2520 = vmatpush2.msra.mxu0 0.0
    %2521 = vmatprep.subr.mxu0 0.0
    %2522 = vmatpush2.msra.mxu0 0.0
    %2523 = vmatprep.subr.mxu0 0.0
    %2524 = vmatpush2.msra.mxu0 0.0
    %2525 = vmatprep.subr.mxu0 0.0
    %2526 = vmatpush2.msra.mxu0 0.0
    %2527 = vmatprep.mubr.f32.mxu0 0.0
    %2528 = vmatmul.mubr.f32.gmra.mxu0 %v2073
    %v2529 = vpop.f32.mrf.mxu0
    %v2530 = vadd.f32 %v2035, %v2529
    %v2531 = vpop.f32.mrf.mxu0
    %v2532 = vadd.f32 %v2039, %v2531
    %2533 = vmatprep.mubr.f32.mxu0 0.0
    %2534 = vmatmul.mubr.f32.gmra.mxu0 %v2076
    %v2535 = vpop.f32.mrf.mxu0
    %v2536 = vadd.f32 %v2035, %v2535
    %v2537 = vpop.f32.mrf.mxu0
    %v2538 = vadd.f32 %v2039, %v2537
    %2539 = vdwg.mxu0
    %2540 = vmatprep.subr.mxu0 0.0
    %2541 = vmatpush1.msra.mxu0 0.0
    %2542 = vmatprep.subr.mxu0 0.0
    %2543 = vmatpush1.msra.mxu0 0.0
    %2544 = vmatprep.subr.mxu0 0.0
    %2545 = vmatpush1.msra.mxu0 0.0
    %2546 = vmatprep.subr.mxu0 0.0
    %2547 = vmatpush1.msra.mxu0 0.0
    %2548 = vmatprep.subr.mxu0 0.0
    %2549 = vmatpush1.msra.mxu0 0.0
    %2550 = vmatprep.subr.mxu0 0.0
    %2551 = vmatpush1.msra.mxu0 0.0
    %2552 = vmatprep.subr.mxu0 0.0
    %2553 = vmatpush1.msra.mxu0 0.0
    %2554 = vmatprep.subr.mxu0 0.0
    %2555 = vmatpush1.msra.mxu0 0.0
    %2556 = vmatprep.subr.mxu0 0.0
    %2557 = vmatpush1.msra.mxu0 0.0
    %2558 = vmatprep.subr.mxu0 0.0
    %2559 = vmatpush1.msra.mxu0 0.0
    %2560 = vmatprep.subr.mxu0 0.0
    %2561 = vmatpush1.msra.mxu0 0.0
    %2562 = vmatprep.subr.mxu0 0.0
    %2563 = vmatpush1.msra.mxu0 0.0
    %2564 = vmatprep.subr.mxu0 %v1985
    %2565 = vmatpush1.msra.mxu0 %v1984
    %2566 = vmatprep.subr.mxu0 %v1969
    %2567 = vmatpush1.msra.mxu0 %v1968
    %2568 = vmatprep.subr.mxu0 %v1953
    %2569 = vmatpush1.msra.mxu0 %v1952
    %2570 = vmatprep.subr.mxu0 %v1937
    %2571 = vmatpush1.msra.mxu0 %v1936
    %2572 = vmatprep.subr.mxu0 0.0
    %2573 = vmatpush2.msra.mxu0 0.0
    %2574 = vmatprep.subr.mxu0 0.0
    %2575 = vmatpush2.msra.mxu0 0.0
    %2576 = vmatprep.subr.mxu0 0.0
    %2577 = vmatpush2.msra.mxu0 0.0
    %2578 = vmatprep.subr.mxu0 0.0
    %2579 = vmatpush2.msra.mxu0 0.0
    %2580 = vmatprep.subr.mxu0 0.0
    %2581 = vmatpush2.msra.mxu0 0.0
    %2582 = vmatprep.subr.mxu0 0.0
    %2583 = vmatpush2.msra.mxu0 0.0
    %2584 = vmatprep.subr.mxu0 0.0
    %2585 = vmatpush2.msra.mxu0 0.0
    %2586 = vmatprep.subr.mxu0 0.0
    %2587 = vmatpush2.msra.mxu0 0.0
    %2588 = vmatprep.subr.mxu0 0.0
    %2589 = vmatpush2.msra.mxu0 0.0
    %2590 = vmatprep.subr.mxu0 0.0
    %2591 = vmatpush2.msra.mxu0 0.0
    %2592 = vmatprep.subr.mxu0 0.0
    %2593 = vmatpush2.msra.mxu0 0.0
    %2594 = vmatprep.subr.mxu0 0.0
    %2595 = vmatpush2.msra.mxu0 0.0
    %2596 = vmatprep.subr.mxu0 0.0
    %2597 = vmatpush2.msra.mxu0 0.0
    %2598 = vmatprep.subr.mxu0 0.0
    %2599 = vmatpush2.msra.mxu0 0.0
    %2600 = vmatprep.subr.mxu0 0.0
    %2601 = vmatpush2.msra.mxu0 0.0
    %2602 = vmatprep.subr.mxu0 0.0
    %2603 = vmatpush2.msra.mxu0 0.0
    %2604 = vmatprep.mubr.f32.mxu0 0.0
    %2605 = vmatmul.mubr.f32.gmra.mxu0 %v2073
    %v2606 = vpop.f32.mrf.mxu0
    %v2607 = vadd.f32 %v2043, %v2606
    %v2608 = vpop.f32.mrf.mxu0
    %v2609 = vadd.f32 %v2047, %v2608
    %2610 = vmatprep.mubr.f32.mxu0 0.0
    %2611 = vmatmul.mubr.f32.gmra.mxu0 %v2076
    %v2612 = vpop.f32.mrf.mxu0
    %v2613 = vadd.f32 %v2043, %v2612
    %v2614 = vpop.f32.mrf.mxu0
    %v2615 = vadd.f32 %v2047, %v2614
    %2616 = vdwg.mxu0
    %2617 = vmatprep.subr.mxu0 0.0
    %2618 = vmatpush1.msra.mxu0 0.0
    %2619 = vmatprep.subr.mxu0 0.0
    %2620 = vmatpush1.msra.mxu0 0.0
    %2621 = vmatprep.subr.mxu0 0.0
    %2622 = vmatpush1.msra.mxu0 0.0
    %2623 = vmatprep.subr.mxu0 0.0
    %2624 = vmatpush1.msra.mxu0 0.0
    %2625 = vmatprep.subr.mxu0 0.0
    %2626 = vmatpush1.msra.mxu0 0.0
    %2627 = vmatprep.subr.mxu0 0.0
    %2628 = vmatpush1.msra.mxu0 0.0
    %2629 = vmatprep.subr.mxu0 0.0
    %2630 = vmatpush1.msra.mxu0 0.0
    %2631 = vmatprep.subr.mxu0 0.0
    %2632 = vmatpush1.msra.mxu0 0.0
    %2633 = vmatprep.subr.mxu0 0.0
    %2634 = vmatpush1.msra.mxu0 0.0
    %2635 = vmatprep.subr.mxu0 0.0
    %2636 = vmatpush1.msra.mxu0 0.0
    %2637 = vmatprep.subr.mxu0 0.0
    %2638 = vmatpush1.msra.mxu0 0.0
    %2639 = vmatprep.subr.mxu0 0.0
    %2640 = vmatpush1.msra.mxu0 0.0
    %2641 = vmatprep.subr.mxu0 %v1987
    %2642 = vmatpush1.msra.mxu0 %v1986
    %2643 = vmatprep.subr.mxu0 %v1971
    %2644 = vmatpush1.msra.mxu0 %v1970
    %2645 = vmatprep.subr.mxu0 %v1955
    %2646 = vmatpush1.msra.mxu0 %v1954
    %2647 = vmatprep.subr.mxu0 %v1939
    %2648 = vmatpush1.msra.mxu0 %v1938
    %2649 = vmatprep.subr.mxu0 0.0
    %2650 = vmatpush2.msra.mxu0 0.0
    %2651 = vmatprep.subr.mxu0 0.0
    %2652 = vmatpush2.msra.mxu0 0.0
    %2653 = vmatprep.subr.mxu0 0.0
    %2654 = vmatpush2.msra.mxu0 0.0
    %2655 = vmatprep.subr.mxu0 0.0
    %2656 = vmatpush2.msra.mxu0 0.0
    %2657 = vmatprep.subr.mxu0 0.0
    %2658 = vmatpush2.msra.mxu0 0.0
    %2659 = vmatprep.subr.mxu0 0.0
    %2660 = vmatpush2.msra.mxu0 0.0
    %2661 = vmatprep.subr.mxu0 0.0
    %2662 = vmatpush2.msra.mxu0 0.0
    %2663 = vmatprep.subr.mxu0 0.0
    %2664 = vmatpush2.msra.mxu0 0.0
    %2665 = vmatprep.subr.mxu0 0.0
    %2666 = vmatpush2.msra.mxu0 0.0
    %2667 = vmatprep.subr.mxu0 0.0
    %2668 = vmatpush2.msra.mxu0 0.0
    %2669 = vmatprep.subr.mxu0 0.0
    %2670 = vmatpush2.msra.mxu0 0.0
    %2671 = vmatprep.subr.mxu0 0.0
    %2672 = vmatpush2.msra.mxu0 0.0
    %2673 = vmatprep.subr.mxu0 0.0
    %2674 = vmatpush2.msra.mxu0 0.0
    %2675 = vmatprep.subr.mxu0 0.0
    %2676 = vmatpush2.msra.mxu0 0.0
    %2677 = vmatprep.subr.mxu0 0.0
    %2678 = vmatpush2.msra.mxu0 0.0
    %2679 = vmatprep.subr.mxu0 0.0
    %2680 = vmatpush2.msra.mxu0 0.0
    %2681 = vmatprep.mubr.f32.mxu0 0.0
    %2682 = vmatmul.mubr.f32.gmra.mxu0 %v2073
    %v2683 = vpop.f32.mrf.mxu0
    %v2684 = vadd.f32 %v2051, %v2683
    %v2685 = vpop.f32.mrf.mxu0
    %v2686 = vadd.f32 %v2055, %v2685
    %2687 = vmatprep.mubr.f32.mxu0 0.0
    %2688 = vmatmul.mubr.f32.gmra.mxu0 %v2076
    %v2689 = vpop.f32.mrf.mxu0
    %v2690 = vadd.f32 %v2051, %v2689
    %v2691 = vpop.f32.mrf.mxu0
    %v2692 = vadd.f32 %v2055, %v2691
    %2693 = vdwg.mxu0
    %v2694 = vmax.f32 %v2145, 0.0
    %v2695 = vmax.f32 %v2147, 0.0
    %v2696 = vmax.f32 %v2222, 0.0
    %v2697 = vmax.f32 %v2224, 0.0
    %v2698 = vmax.f32 %v2299, 0.0
    %v2699 = vmax.f32 %v2301, 0.0
    %v2700 = vmax.f32 %v2376, 0.0
    %v2701 = vmax.f32 %v2378, 0.0
    %v2702 = vmax.f32 %v2453, 0.0
    %v2703 = vmax.f32 %v2455, 0.0
    %v2704 = vmax.f32 %v2530, 0.0
    %v2705 = vmax.f32 %v2532, 0.0
    %v2706 = vmax.f32 %v2607, 0.0
    %v2707 = vmax.f32 %v2609, 0.0
    %v2708 = vmax.f32 %v2684, 0.0
    %v2709 = vmax.f32 %v2686, 0.0
    %v2710 = vmax.f32 %v2151, 0.0
    %v2711 = vmax.f32 %v2153, 0.0
    %v2712 = vmax.f32 %v2228, 0.0
    %v2713 = vmax.f32 %v2230, 0.0
    %v2714 = vmax.f32 %v2305, 0.0
    %v2715 = vmax.f32 %v2307, 0.0
    %v2716 = vmax.f32 %v2382, 0.0
    %v2717 = vmax.f32 %v2384, 0.0
    %v2718 = vmax.f32 %v2459, 0.0
    %v2719 = vmax.f32 %v2461, 0.0
    %v2720 = vmax.f32 %v2536, 0.0
    %v2721 = vmax.f32 %v2538, 0.0
    %v2722 = vmax.f32 %v2613, 0.0
    %v2723 = vmax.f32 %v2615, 0.0
    %v2724 = vmax.f32 %v2690, 0.0
    %v2725 = vmax.f32 %v2692, 0.0
    %v2726 = vld [vmem:[%s12] sm:$0xff]
    %v2727 = vld [vmem:[%s12 + $0x8] sm:$0xff]
    %v2728 = vld [vmem:[%s12 + $0x10] sm:$0xff]
    %v2729 = vld [vmem:[%s12 + $0x18] sm:$0xff]
    %v2730 = vld [vmem:[%s12 + $0x20] sm:$0xff]
    %v2731 = vld [vmem:[%s12 + $0x28] sm:$0xff]
    %v2732 = vld [vmem:[%s12 + $0x30] sm:$0xff]
    %v2733 = vld [vmem:[%s12 + $0x38] sm:$0xff]
    %v2734 = vld [vmem:[%s12 + $0x40] sm:$0xff]
    %v2735 = vld [vmem:[%s12 + $0x48] sm:$0xff]
    %v2736 = vld [vmem:[%s12 + $0x50] sm:$0xff]
    %v2737 = vld [vmem:[%s12 + $0x58] sm:$0xff]
    %v2738 = vld [vmem:[%s12 + $0x60] sm:$0xff]
    %v2739 = vld [vmem:[%s12 + $0x68] sm:$0xff]
    %v2740 = vld [vmem:[%s12 + $0x70] sm:$0xff]
    %v2741 = vld [vmem:[%s12 + $0x78] sm:$0xff]
    %v2742 = vld [vmem:[%s12 + $0x80] sm:$0xff]
    %v2743 = vld [vmem:[%s12 + $0x88] sm:$0xff]
    %v2744 = vld [vmem:[%s12 + $0x90] sm:$0xff]
    %v2745 = vld [vmem:[%s12 + $0x98] sm:$0xff]
    %v2746 = vld [vmem:[%s12 + $0xa0] sm:$0xff]
    %v2747 = vld [vmem:[%s12 + $0xa8] sm:$0xff]
    %v2748 = vld [vmem:[%s12 + $0xb0] sm:$0xff]
    %v2749 = vld [vmem:[%s12 + $0xb8] sm:$0xff]
    %v2750 = vld [vmem:[%s12 + $0xc0] sm:$0xff]
    %v2751 = vld [vmem:[%s12 + $0xc8] sm:$0xff]
    %v2752 = vld [vmem:[%s12 + $0xd0] sm:$0xff]
    %v2753 = vld [vmem:[%s12 + $0xd8] sm:$0xff]
    %v2754 = vld [vmem:[%s12 + $0xe0] sm:$0xff]
    %v2755 = vld [vmem:[%s12 + $0xe8] sm:$0xff]
    %v2756 = vld [vmem:[%s12 + $0xf0] sm:$0xff]
    %v2757 = vld [vmem:[%s12 + $0xf8] sm:$0xff]
    %v2758 = vld [vmem:[%s12 + $0x100] sm:$0xff]
    %v2759 = vld [vmem:[%s12 + $0x108] sm:$0xff]
    %v2760 = vld [vmem:[%s12 + $0x110] sm:$0xff]
    %v2761 = vld [vmem:[%s12 + $0x118] sm:$0xff]
    %v2762 = vld [vmem:[%s12 + $0x120] sm:$0xff]
    %v2763 = vld [vmem:[%s12 + $0x128] sm:$0xff]
    %v2764 = vld [vmem:[%s12 + $0x130] sm:$0xff]
    %v2765 = vld [vmem:[%s12 + $0x138] sm:$0xff]
    %v2766 = vld [vmem:[%s12 + $0x140] sm:$0xff]
    %v2767 = vld [vmem:[%s12 + $0x148] sm:$0xff]
    %v2768 = vld [vmem:[%s12 + $0x150] sm:$0xff]
    %v2769 = vld [vmem:[%s12 + $0x158] sm:$0xff]
    %v2770 = vld [vmem:[%s12 + $0x160] sm:$0xff]
    %v2771 = vld [vmem:[%s12 + $0x168] sm:$0xff]
    %v2772 = vld [vmem:[%s12 + $0x170] sm:$0xff]
    %v2773 = vld [vmem:[%s12 + $0x178] sm:$0xff]
    %v2774 = vld [vmem:[%s12 + $0x180] sm:$0xff]
    %v2775 = vld [vmem:[%s12 + $0x188] sm:$0xff]
    %v2776 = vld [vmem:[%s12 + $0x190] sm:$0xff]
    %v2777 = vld [vmem:[%s12 + $0x198] sm:$0xff]
    %v2778 = vld [vmem:[%s12 + $0x1a0] sm:$0xff]
    %v2779 = vld [vmem:[%s12 + $0x1a8] sm:$0xff]
    %v2780 = vld [vmem:[%s12 + $0x1b0] sm:$0xff]
    %v2781 = vld [vmem:[%s12 + $0x1b8] sm:$0xff]
    %v2782 = vld [vmem:[%s12 + $0x1c0] sm:$0xff]
    %v2783 = vld [vmem:[%s12 + $0x1c8] sm:$0xff]
    %v2784 = vld [vmem:[%s12 + $0x1d0] sm:$0xff]
    %v2785 = vld [vmem:[%s12 + $0x1d8] sm:$0xff]
    %v2786 = vld [vmem:[%s12 + $0x1e0] sm:$0xff]
    %v2787 = vld [vmem:[%s12 + $0x1e8] sm:$0xff]
    %v2788 = vld [vmem:[%s12 + $0x1f0] sm:$0xff]
    %v2789 = vld [vmem:[%s12 + $0x1f8] sm:$0xff]
    %v2790 = vld [vmem:[%s12 + $0x200] sm:$0xff]
    %v2791 = vld [vmem:[%s12 + $0x208] sm:$0xff]
    %v2792 = vld [vmem:[%s12 + $0x210] sm:$0xff]
    %v2793 = vld [vmem:[%s12 + $0x218] sm:$0xff]
    %v2794 = vld [vmem:[%s12 + $0x220] sm:$0xff]
    %v2795 = vld [vmem:[%s12 + $0x228] sm:$0xff]
    %v2796 = vld [vmem:[%s12 + $0x230] sm:$0xff]
    %v2797 = vld [vmem:[%s12 + $0x238] sm:$0xff]
    %v2798 = vld [vmem:[%s12 + $0x240] sm:$0xff]
    %v2799 = vld [vmem:[%s12 + $0x248] sm:$0xff]
    %v2800 = vld [vmem:[%s12 + $0x250] sm:$0xff]
    %v2801 = vld [vmem:[%s12 + $0x258] sm:$0xff]
    %v2802 = vld [vmem:[%s12 + $0x260] sm:$0xff]
    %v2803 = vld [vmem:[%s12 + $0x268] sm:$0xff]
    %v2804 = vld [vmem:[%s12 + $0x270] sm:$0xff]
    %v2805 = vld [vmem:[%s12 + $0x278] sm:$0xff]
    %v2806 = vld [vmem:[%s12 + $0x280] sm:$0xff]
    %v2807 = vld [vmem:[%s12 + $0x288] sm:$0xff]
    %v2808 = vld [vmem:[%s12 + $0x290] sm:$0xff]
    %v2809 = vld [vmem:[%s12 + $0x298] sm:$0xff]
    %v2810 = vld [vmem:[%s12 + $0x2a0] sm:$0xff]
    %v2811 = vld [vmem:[%s12 + $0x2a8] sm:$0xff]
    %v2812 = vld [vmem:[%s12 + $0x2b0] sm:$0xff]
    %v2813 = vld [vmem:[%s12 + $0x2b8] sm:$0xff]
    %v2814 = vld [vmem:[%s12 + $0x2c0] sm:$0xff]
    %v2815 = vld [vmem:[%s12 + $0x2c8] sm:$0xff]
    %v2816 = vld [vmem:[%s12 + $0x2d0] sm:$0xff]
    %v2817 = vld [vmem:[%s12 + $0x2d8] sm:$0xff]
    %v2818 = vld [vmem:[%s12 + $0x2e0] sm:$0xff]
    %v2819 = vld [vmem:[%s12 + $0x2e8] sm:$0xff]
    %v2820 = vld [vmem:[%s12 + $0x2f0] sm:$0xff]
    %v2821 = vld [vmem:[%s12 + $0x2f8] sm:$0xff]
    %v2822 = vld [vmem:[%s12 + $0x300] sm:$0xff]
    %v2823 = vld [vmem:[%s12 + $0x308] sm:$0xff]
    %v2824 = vld [vmem:[%s12 + $0x310] sm:$0xff]
    %v2825 = vld [vmem:[%s12 + $0x318] sm:$0xff]
    %v2826 = vld [vmem:[%s12 + $0x320] sm:$0xff]
    %v2827 = vld [vmem:[%s12 + $0x328] sm:$0xff]
    %v2828 = vld [vmem:[%s12 + $0x330] sm:$0xff]
    %v2829 = vld [vmem:[%s12 + $0x338] sm:$0xff]
    %v2830 = vld [vmem:[%s12 + $0x340] sm:$0xff]
    %v2831 = vld [vmem:[%s12 + $0x348] sm:$0xff]
    %v2832 = vld [vmem:[%s12 + $0x350] sm:$0xff]
    %v2833 = vld [vmem:[%s12 + $0x358] sm:$0xff]
    %v2834 = vld [vmem:[%s12 + $0x360] sm:$0xff]
    %v2835 = vld [vmem:[%s12 + $0x368] sm:$0xff]
    %v2836 = vld [vmem:[%s12 + $0x370] sm:$0xff]
    %v2837 = vld [vmem:[%s12 + $0x378] sm:$0xff]
    %v2838 = vld [vmem:[%s12 + $0x380] sm:$0xff]
    %v2839 = vld [vmem:[%s12 + $0x388] sm:$0xff]
    %v2840 = vld [vmem:[%s12 + $0x390] sm:$0xff]
    %v2841 = vld [vmem:[%s12 + $0x398] sm:$0xff]
    %v2842 = vld [vmem:[%s12 + $0x3a0] sm:$0xff]
    %v2843 = vld [vmem:[%s12 + $0x3a8] sm:$0xff]
    %v2844 = vld [vmem:[%s12 + $0x3b0] sm:$0xff]
    %v2845 = vld [vmem:[%s12 + $0x3b8] sm:$0xff]
    %v2846 = vld [vmem:[%s12 + $0x3c0] sm:$0xff]
    %v2847 = vld [vmem:[%s12 + $0x3c8] sm:$0xff]
    %v2848 = vld [vmem:[%s12 + $0x3d0] sm:$0xff]
    %v2849 = vld [vmem:[%s12 + $0x3d8] sm:$0xff]
    %v2850 = vld [vmem:[%s12 + $0x3e0] sm:$0xff]
    %v2851 = vld [vmem:[%s12 + $0x3e8] sm:$0xff]
    %v2852 = vld [vmem:[%s12 + $0x3f0] sm:$0xff]
    %v2853 = vld [vmem:[%s12 + $0x3f8] sm:$0xff]
    %v2854 = vld [vmem:[%s12 + $0x400] sm:$0xff]
    %v2855 = vld [vmem:[%s12 + $0x408] sm:$0xff]
    %v2856 = vld [vmem:[%s12 + $0x410] sm:$0xff]
    %v2857 = vld [vmem:[%s12 + $0x418] sm:$0xff]
    %v2858 = vld [vmem:[%s12 + $0x420] sm:$0xff]
    %v2859 = vld [vmem:[%s12 + $0x428] sm:$0xff]
    %v2860 = vld [vmem:[%s12 + $0x430] sm:$0xff]
    %v2861 = vld [vmem:[%s12 + $0x438] sm:$0xff]
    %v2862 = vld [vmem:[%s12 + $0x440] sm:$0xff]
    %v2863 = vld [vmem:[%s12 + $0x448] sm:$0xff]
    %v2864 = vld [vmem:[%s12 + $0x450] sm:$0xff]
    %v2865 = vld [vmem:[%s12 + $0x458] sm:$0xff]
    %v2866 = vld [vmem:[%s12 + $0x460] sm:$0xff]
    %v2867 = vld [vmem:[%s12 + $0x468] sm:$0xff]
    %v2868 = vld [vmem:[%s12 + $0x470] sm:$0xff]
    %v2869 = vld [vmem:[%s12 + $0x478] sm:$0xff]
    %v2870 = vld [vmem:[%s12 + $0x480] sm:$0xff]
    %v2871 = vld [vmem:[%s12 + $0x488] sm:$0xff]
    %v2872 = vld [vmem:[%s12 + $0x490] sm:$0xff]
    %v2873 = vld [vmem:[%s12 + $0x498] sm:$0xff]
    %v2874 = vld [vmem:[%s12 + $0x4a0] sm:$0xff]
    %v2875 = vld [vmem:[%s12 + $0x4a8] sm:$0xff]
    %v2876 = vld [vmem:[%s12 + $0x4b0] sm:$0xff]
    %v2877 = vld [vmem:[%s12 + $0x4b8] sm:$0xff]
    %v2878 = vld [vmem:[%s12 + $0x4c0] sm:$0xff]
    %v2879 = vld [vmem:[%s12 + $0x4c8] sm:$0xff]
    %v2880 = vld [vmem:[%s12 + $0x4d0] sm:$0xff]
    %v2881 = vld [vmem:[%s12 + $0x4d8] sm:$0xff]
    %v2882 = vld [vmem:[%s12 + $0x4e0] sm:$0xff]
    %v2883 = vld [vmem:[%s12 + $0x4e8] sm:$0xff]
    %v2884 = vld [vmem:[%s12 + $0x4f0] sm:$0xff]
    %v2885 = vld [vmem:[%s12 + $0x4f8] sm:$0xff]
    %v2886 = vld [vmem:[%s12 + $0x500] sm:$0xff]
    %v2887 = vld [vmem:[%s12 + $0x508] sm:$0xff]
    %v2888 = vld [vmem:[%s12 + $0x510] sm:$0xff]
    %v2889 = vld [vmem:[%s12 + $0x518] sm:$0xff]
    %v2890 = vld [vmem:[%s12 + $0x520] sm:$0xff]
    %v2891 = vld [vmem:[%s12 + $0x528] sm:$0xff]
    %v2892 = vld [vmem:[%s12 + $0x530] sm:$0xff]
    %v2893 = vld [vmem:[%s12 + $0x538] sm:$0xff]
    %v2894 = vld [vmem:[%s12 + $0x540] sm:$0xff]
    %v2895 = vld [vmem:[%s12 + $0x548] sm:$0xff]
    %v2896 = vld [vmem:[%s12 + $0x550] sm:$0xff]
    %v2897 = vld [vmem:[%s12 + $0x558] sm:$0xff]
    %v2898 = vld [vmem:[%s12 + $0x560] sm:$0xff]
    %v2899 = vld [vmem:[%s12 + $0x568] sm:$0xff]
    %v2900 = vld [vmem:[%s12 + $0x570] sm:$0xff]
    %v2901 = vld [vmem:[%s12 + $0x578] sm:$0xff]
    %v2902 = vld [vmem:[%s12 + $0x580] sm:$0xff]
    %v2903 = vld [vmem:[%s12 + $0x588] sm:$0xff]
    %v2904 = vld [vmem:[%s12 + $0x590] sm:$0xff]
    %v2905 = vld [vmem:[%s12 + $0x598] sm:$0xff]
    %v2906 = vld [vmem:[%s12 + $0x5a0] sm:$0xff]
    %v2907 = vld [vmem:[%s12 + $0x5a8] sm:$0xff]
    %v2908 = vld [vmem:[%s12 + $0x5b0] sm:$0xff]
    %v2909 = vld [vmem:[%s12 + $0x5b8] sm:$0xff]
    %v2910 = vld [vmem:[%s12 + $0x5c0] sm:$0xff]
    %v2911 = vld [vmem:[%s12 + $0x5c8] sm:$0xff]
    %v2912 = vld [vmem:[%s12 + $0x5d0] sm:$0xff]
    %v2913 = vld [vmem:[%s12 + $0x5d8] sm:$0xff]
    %v2914 = vld [vmem:[%s12 + $0x5e0] sm:$0xff]
    %v2915 = vld [vmem:[%s12 + $0x5e8] sm:$0xff]
    %v2916 = vld [vmem:[%s12 + $0x5f0] sm:$0xff]
    %v2917 = vld [vmem:[%s12 + $0x5f8] sm:$0xff]
    %v2918 = vld [vmem:[%s12 + $0x600] sm:$0xff]
    %v2919 = vld [vmem:[%s12 + $0x608] sm:$0xff]
    %v2920 = vld [vmem:[%s12 + $0x610] sm:$0xff]
    %v2921 = vld [vmem:[%s12 + $0x618] sm:$0xff]
    %v2922 = vld [vmem:[%s12 + $0x620] sm:$0xff]
    %v2923 = vld [vmem:[%s12 + $0x628] sm:$0xff]
    %v2924 = vld [vmem:[%s12 + $0x630] sm:$0xff]
    %v2925 = vld [vmem:[%s12 + $0x638] sm:$0xff]
    %v2926 = vld [vmem:[%s12 + $0x640] sm:$0xff]
    %v2927 = vld [vmem:[%s12 + $0x648] sm:$0xff]
    %v2928 = vld [vmem:[%s12 + $0x650] sm:$0xff]
    %v2929 = vld [vmem:[%s12 + $0x658] sm:$0xff]
    %v2930 = vld [vmem:[%s12 + $0x660] sm:$0xff]
    %v2931 = vld [vmem:[%s12 + $0x668] sm:$0xff]
    %v2932 = vld [vmem:[%s12 + $0x670] sm:$0xff]
    %v2933 = vld [vmem:[%s12 + $0x678] sm:$0xff]
    %v2934 = vld [vmem:[%s12 + $0x680] sm:$0xff]
    %v2935 = vld [vmem:[%s12 + $0x688] sm:$0xff]
    %v2936 = vld [vmem:[%s12 + $0x690] sm:$0xff]
    %v2937 = vld [vmem:[%s12 + $0x698] sm:$0xff]
    %v2938 = vld [vmem:[%s12 + $0x6a0] sm:$0xff]
    %v2939 = vld [vmem:[%s12 + $0x6a8] sm:$0xff]
    %v2940 = vld [vmem:[%s12 + $0x6b0] sm:$0xff]
    %v2941 = vld [vmem:[%s12 + $0x6b8] sm:$0xff]
    %v2942 = vld [vmem:[%s12 + $0x6c0] sm:$0xff]
    %v2943 = vld [vmem:[%s12 + $0x6c8] sm:$0xff]
    %v2944 = vld [vmem:[%s12 + $0x6d0] sm:$0xff]
    %v2945 = vld [vmem:[%s12 + $0x6d8] sm:$0xff]
    %v2946 = vld [vmem:[%s12 + $0x6e0] sm:$0xff]
    %v2947 = vld [vmem:[%s12 + $0x6e8] sm:$0xff]
    %v2948 = vld [vmem:[%s12 + $0x6f0] sm:$0xff]
    %v2949 = vld [vmem:[%s12 + $0x6f8] sm:$0xff]
    %v2950 = vld [vmem:[%s12 + $0x700] sm:$0xff]
    %v2951 = vld [vmem:[%s12 + $0x708] sm:$0xff]
    %v2952 = vld [vmem:[%s12 + $0x710] sm:$0xff]
    %v2953 = vld [vmem:[%s12 + $0x718] sm:$0xff]
    %v2954 = vld [vmem:[%s12 + $0x720] sm:$0xff]
    %v2955 = vld [vmem:[%s12 + $0x728] sm:$0xff]
    %v2956 = vld [vmem:[%s12 + $0x730] sm:$0xff]
    %v2957 = vld [vmem:[%s12 + $0x738] sm:$0xff]
    %v2958 = vld [vmem:[%s12 + $0x740] sm:$0xff]
    %v2959 = vld [vmem:[%s12 + $0x748] sm:$0xff]
    %v2960 = vld [vmem:[%s12 + $0x750] sm:$0xff]
    %v2961 = vld [vmem:[%s12 + $0x758] sm:$0xff]
    %v2962 = vld [vmem:[%s12 + $0x760] sm:$0xff]
    %v2963 = vld [vmem:[%s12 + $0x768] sm:$0xff]
    %v2964 = vld [vmem:[%s12 + $0x770] sm:$0xff]
    %v2965 = vld [vmem:[%s12 + $0x778] sm:$0xff]
    %v2966 = vld [vmem:[%s12 + $0x780] sm:$0xff]
    %v2967 = vld [vmem:[%s12 + $0x788] sm:$0xff]
    %v2968 = vld [vmem:[%s12 + $0x790] sm:$0xff]
    %v2969 = vld [vmem:[%s12 + $0x798] sm:$0xff]
    %v2970 = vld [vmem:[%s12 + $0x7a0] sm:$0xff]
    %v2971 = vld [vmem:[%s12 + $0x7a8] sm:$0xff]
    %v2972 = vld [vmem:[%s12 + $0x7b0] sm:$0xff]
    %v2973 = vld [vmem:[%s12 + $0x7b8] sm:$0xff]
    %v2974 = vld [vmem:[%s12 + $0x7c0] sm:$0xff]
    %v2975 = vld [vmem:[%s12 + $0x7c8] sm:$0xff]
    %v2976 = vld [vmem:[%s12 + $0x7d0] sm:$0xff]
    %v2977 = vld [vmem:[%s12 + $0x7d8] sm:$0xff]
    %v2978 = vld [vmem:[%s12 + $0x7e0] sm:$0xff]
    %v2979 = vld [vmem:[%s12 + $0x7e8] sm:$0xff]
    %v2980 = vld [vmem:[%s12 + $0x7f0] sm:$0xff]
    %v2981 = vld [vmem:[%s12 + $0x7f8] sm:$0xff]
    %v2982 = vld [vmem:[%s13] sm:$0x1]
    %v2984 = vlaneseq
    %v2985 = vshrl.u32 %v2984, 7
    %v2986 = vsub.s32 0, %v2985
    %v2987 = vrot.slane %v2982, %v2986
    %2989 = vmatprep.subr.mxu0 0.0
    %2990 = vmatpush1.msra.mxu0 %v2741
    %2991 = vmatprep.subr.mxu0 0.0
    %2992 = vmatpush1.msra.mxu0 %v2740
    %2993 = vmatprep.subr.mxu0 0.0
    %2994 = vmatpush1.msra.mxu0 %v2739
    %2995 = vmatprep.subr.mxu0 0.0
    %2996 = vmatpush1.msra.mxu0 %v2738
    %2997 = vmatprep.subr.mxu0 0.0
    %2998 = vmatpush1.msra.mxu0 %v2737
    %2999 = vmatprep.subr.mxu0 0.0
    %3000 = vmatpush1.msra.mxu0 %v2736
    %3001 = vmatprep.subr.mxu0 0.0
    %3002 = vmatpush1.msra.mxu0 %v2735
    %3003 = vmatprep.subr.mxu0 0.0
    %3004 = vmatpush1.msra.mxu0 %v2734
    %3005 = vmatprep.subr.mxu0 0.0
    %3006 = vmatpush1.msra.mxu0 %v2733
    %3007 = vmatprep.subr.mxu0 0.0
    %3008 = vmatpush1.msra.mxu0 %v2732
    %3009 = vmatprep.subr.mxu0 0.0
    %3010 = vmatpush1.msra.mxu0 %v2731
    %3011 = vmatprep.subr.mxu0 0.0
    %3012 = vmatpush1.msra.mxu0 %v2730
    %3013 = vmatprep.subr.mxu0 0.0
    %3014 = vmatpush1.msra.mxu0 %v2729
    %3015 = vmatprep.subr.mxu0 0.0
    %3016 = vmatpush1.msra.mxu0 %v2728
    %3017 = vmatprep.subr.mxu0 0.0
    %3018 = vmatpush1.msra.mxu0 %v2727
    %3019 = vmatprep.subr.mxu0 0.0
    %3020 = vmatpush1.msra.mxu0 %v2726
    %3021 = vmatprep.subr.mxu0 0.0
    %3022 = vmatpush2.msra.mxu0 %v2757
    %3023 = vmatprep.subr.mxu0 0.0
    %3024 = vmatpush2.msra.mxu0 %v2756
    %3025 = vmatprep.subr.mxu0 0.0
    %3026 = vmatpush2.msra.mxu0 %v2755
    %3027 = vmatprep.subr.mxu0 0.0
    %3028 = vmatpush2.msra.mxu0 %v2754
    %3029 = vmatprep.subr.mxu0 0.0
    %3030 = vmatpush2.msra.mxu0 %v2753
    %3031 = vmatprep.subr.mxu0 0.0
    %3032 = vmatpush2.msra.mxu0 %v2752
    %3033 = vmatprep.subr.mxu0 0.0
    %3034 = vmatpush2.msra.mxu0 %v2751
    %3035 = vmatprep.subr.mxu0 0.0
    %3036 = vmatpush2.msra.mxu0 %v2750
    %3037 = vmatprep.subr.mxu0 0.0
    %3038 = vmatpush2.msra.mxu0 %v2749
    %3039 = vmatprep.subr.mxu0 0.0
    %3040 = vmatpush2.msra.mxu0 %v2748
    %3041 = vmatprep.subr.mxu0 0.0
    %3042 = vmatpush2.msra.mxu0 %v2747
    %3043 = vmatprep.subr.mxu0 0.0
    %3044 = vmatpush2.msra.mxu0 %v2746
    %3045 = vmatprep.subr.mxu0 0.0
    %3046 = vmatpush2.msra.mxu0 %v2745
    %3047 = vmatprep.subr.mxu0 0.0
    %3048 = vmatpush2.msra.mxu0 %v2744
    %3049 = vmatprep.subr.mxu0 0.0
    %3050 = vmatpush2.msra.mxu0 %v2743
    %3051 = vmatprep.subr.mxu0 0.0
    %3052 = vmatpush2.msra.mxu0 %v2742
    %3053 = vmatprep.mubr.f32.mxu0 %v2695
    %3054 = vmatmul.mubr.f32.gmra.mxu0 %v2694
    %v3055 = vpop.f32.mrf.mxu0
    %v3056 = vadd.f32 %v2987, %v3055
    %v3057 = vpop.f32.mrf.mxu0
    %3058 = vmatprep.mubr.f32.mxu0 %v2711
    %3059 = vmatmul.mubr.f32.gmra.mxu0 %v2710
    %v3060 = vpop.f32.mrf.mxu0
    %v3061 = vadd.f32 %v2987, %v3060
    %v3062 = vpop.f32.mrf.mxu0
    %3063 = vdwg.mxu0
    %3064 = vmatprep.subr.mxu0 0.0
    %3065 = vmatpush1.msra.mxu0 %v2773
    %3066 = vmatprep.subr.mxu0 0.0
    %3067 = vmatpush1.msra.mxu0 %v2772
    %3068 = vmatprep.subr.mxu0 0.0
    %3069 = vmatpush1.msra.mxu0 %v2771
    %3070 = vmatprep.subr.mxu0 0.0
    %3071 = vmatpush1.msra.mxu0 %v2770
    %3072 = vmatprep.subr.mxu0 0.0
    %3073 = vmatpush1.msra.mxu0 %v2769
    %3074 = vmatprep.subr.mxu0 0.0
    %3075 = vmatpush1.msra.mxu0 %v2768
    %3076 = vmatprep.subr.mxu0 0.0
    %3077 = vmatpush1.msra.mxu0 %v2767
    %3078 = vmatprep.subr.mxu0 0.0
    %3079 = vmatpush1.msra.mxu0 %v2766
    %3080 = vmatprep.subr.mxu0 0.0
    %3081 = vmatpush1.msra.mxu0 %v2765
    %3082 = vmatprep.subr.mxu0 0.0
    %3083 = vmatpush1.msra.mxu0 %v2764
    %3084 = vmatprep.subr.mxu0 0.0
    %3085 = vmatpush1.msra.mxu0 %v2763
    %3086 = vmatprep.subr.mxu0 0.0
    %3087 = vmatpush1.msra.mxu0 %v2762
    %3088 = vmatprep.subr.mxu0 0.0
    %3089 = vmatpush1.msra.mxu0 %v2761
    %3090 = vmatprep.subr.mxu0 0.0
    %3091 = vmatpush1.msra.mxu0 %v2760
    %3092 = vmatprep.subr.mxu0 0.0
    %3093 = vmatpush1.msra.mxu0 %v2759
    %3094 = vmatprep.subr.mxu0 0.0
    %3095 = vmatpush1.msra.mxu0 %v2758
    %3096 = vmatprep.subr.mxu0 0.0
    %3097 = vmatpush2.msra.mxu0 %v2789
    %3098 = vmatprep.subr.mxu0 0.0
    %3099 = vmatpush2.msra.mxu0 %v2788
    %3100 = vmatprep.subr.mxu0 0.0
    %3101 = vmatpush2.msra.mxu0 %v2787
    %3102 = vmatprep.subr.mxu0 0.0
    %3103 = vmatpush2.msra.mxu0 %v2786
    %3104 = vmatprep.subr.mxu0 0.0
    %3105 = vmatpush2.msra.mxu0 %v2785
    %3106 = vmatprep.subr.mxu0 0.0
    %3107 = vmatpush2.msra.mxu0 %v2784
    %3108 = vmatprep.subr.mxu0 0.0
    %3109 = vmatpush2.msra.mxu0 %v2783
    %3110 = vmatprep.subr.mxu0 0.0
    %3111 = vmatpush2.msra.mxu0 %v2782
    %3112 = vmatprep.subr.mxu0 0.0
    %3113 = vmatpush2.msra.mxu0 %v2781
    %3114 = vmatprep.subr.mxu0 0.0
    %3115 = vmatpush2.msra.mxu0 %v2780
    %3116 = vmatprep.subr.mxu0 0.0
    %3117 = vmatpush2.msra.mxu0 %v2779
    %3118 = vmatprep.subr.mxu0 0.0
    %3119 = vmatpush2.msra.mxu0 %v2778
    %3120 = vmatprep.subr.mxu0 0.0
    %3121 = vmatpush2.msra.mxu0 %v2777
    %3122 = vmatprep.subr.mxu0 0.0
    %3123 = vmatpush2.msra.mxu0 %v2776
    %3124 = vmatprep.subr.mxu0 0.0
    %3125 = vmatpush2.msra.mxu0 %v2775
    %3126 = vmatprep.subr.mxu0 0.0
    %3127 = vmatpush2.msra.mxu0 %v2774
    %3128 = vmatprep.mubr.f32.mxu0 %v2697
    %3129 = vmatmul.mubr.f32.gmra.mxu0 %v2696
    %v3130 = vpop.f32.mrf.mxu0
    %v3131 = vadd.f32 %v3056, %v3130
    %v3132 = vpop.f32.mrf.mxu0
    %3133 = vmatprep.mubr.f32.mxu0 %v2713
    %3134 = vmatmul.mubr.f32.gmra.mxu0 %v2712
    %v3135 = vpop.f32.mrf.mxu0
    %v3136 = vadd.f32 %v3061, %v3135
    %v3137 = vpop.f32.mrf.mxu0
    %3138 = vdwg.mxu0
    %3139 = vmatprep.subr.mxu0 0.0
    %3140 = vmatpush1.msra.mxu0 %v2805
    %3141 = vmatprep.subr.mxu0 0.0
    %3142 = vmatpush1.msra.mxu0 %v2804
    %3143 = vmatprep.subr.mxu0 0.0
    %3144 = vmatpush1.msra.mxu0 %v2803
    %3145 = vmatprep.subr.mxu0 0.0
    %3146 = vmatpush1.msra.mxu0 %v2802
    %3147 = vmatprep.subr.mxu0 0.0
    %3148 = vmatpush1.msra.mxu0 %v2801
    %3149 = vmatprep.subr.mxu0 0.0
    %3150 = vmatpush1.msra.mxu0 %v2800
    %3151 = vmatprep.subr.mxu0 0.0
    %3152 = vmatpush1.msra.mxu0 %v2799
    %3153 = vmatprep.subr.mxu0 0.0
    %3154 = vmatpush1.msra.mxu0 %v2798
    %3155 = vmatprep.subr.mxu0 0.0
    %3156 = vmatpush1.msra.mxu0 %v2797
    %3157 = vmatprep.subr.mxu0 0.0
    %3158 = vmatpush1.msra.mxu0 %v2796
    %3159 = vmatprep.subr.mxu0 0.0
    %3160 = vmatpush1.msra.mxu0 %v2795
    %3161 = vmatprep.subr.mxu0 0.0
    %3162 = vmatpush1.msra.mxu0 %v2794
    %3163 = vmatprep.subr.mxu0 0.0
    %3164 = vmatpush1.msra.mxu0 %v2793
    %3165 = vmatprep.subr.mxu0 0.0
    %3166 = vmatpush1.msra.mxu0 %v2792
    %3167 = vmatprep.subr.mxu0 0.0
    %3168 = vmatpush1.msra.mxu0 %v2791
    %3169 = vmatprep.subr.mxu0 0.0
    %3170 = vmatpush1.msra.mxu0 %v2790
    %3171 = vmatprep.subr.mxu0 0.0
    %3172 = vmatpush2.msra.mxu0 %v2821
    %3173 = vmatprep.subr.mxu0 0.0
    %3174 = vmatpush2.msra.mxu0 %v2820
    %3175 = vmatprep.subr.mxu0 0.0
    %3176 = vmatpush2.msra.mxu0 %v2819
    %3177 = vmatprep.subr.mxu0 0.0
    %3178 = vmatpush2.msra.mxu0 %v2818
    %3179 = vmatprep.subr.mxu0 0.0
    %3180 = vmatpush2.msra.mxu0 %v2817
    %3181 = vmatprep.subr.mxu0 0.0
    %3182 = vmatpush2.msra.mxu0 %v2816
    %3183 = vmatprep.subr.mxu0 0.0
    %3184 = vmatpush2.msra.mxu0 %v2815
    %3185 = vmatprep.subr.mxu0 0.0
    %3186 = vmatpush2.msra.mxu0 %v2814
    %3187 = vmatprep.subr.mxu0 0.0
    %3188 = vmatpush2.msra.mxu0 %v2813
    %3189 = vmatprep.subr.mxu0 0.0
    %3190 = vmatpush2.msra.mxu0 %v2812
    %3191 = vmatprep.subr.mxu0 0.0
    %3192 = vmatpush2.msra.mxu0 %v2811
    %3193 = vmatprep.subr.mxu0 0.0
    %3194 = vmatpush2.msra.mxu0 %v2810
    %3195 = vmatprep.subr.mxu0 0.0
    %3196 = vmatpush2.msra.mxu0 %v2809
    %3197 = vmatprep.subr.mxu0 0.0
    %3198 = vmatpush2.msra.mxu0 %v2808
    %3199 = vmatprep.subr.mxu0 0.0
    %3200 = vmatpush2.msra.mxu0 %v2807
    %3201 = vmatprep.subr.mxu0 0.0
    %3202 = vmatpush2.msra.mxu0 %v2806
    %3203 = vmatprep.mubr.f32.mxu0 %v2699
    %3204 = vmatmul.mubr.f32.gmra.mxu0 %v2698
    %v3205 = vpop.f32.mrf.mxu0
    %v3206 = vadd.f32 %v3131, %v3205
    %v3207 = vpop.f32.mrf.mxu0
    %3208 = vmatprep.mubr.f32.mxu0 %v2715
    %3209 = vmatmul.mubr.f32.gmra.mxu0 %v2714
    %v3210 = vpop.f32.mrf.mxu0
    %v3211 = vadd.f32 %v3136, %v3210
    %v3212 = vpop.f32.mrf.mxu0
    %3213 = vdwg.mxu0
    %3214 = vmatprep.subr.mxu0 0.0
    %3215 = vmatpush1.msra.mxu0 %v2837
    %3216 = vmatprep.subr.mxu0 0.0
    %3217 = vmatpush1.msra.mxu0 %v2836
    %3218 = vmatprep.subr.mxu0 0.0
    %3219 = vmatpush1.msra.mxu0 %v2835
    %3220 = vmatprep.subr.mxu0 0.0
    %3221 = vmatpush1.msra.mxu0 %v2834
    %3222 = vmatprep.subr.mxu0 0.0
    %3223 = vmatpush1.msra.mxu0 %v2833
    %3224 = vmatprep.subr.mxu0 0.0
    %3225 = vmatpush1.msra.mxu0 %v2832
    %3226 = vmatprep.subr.mxu0 0.0
    %3227 = vmatpush1.msra.mxu0 %v2831
    %3228 = vmatprep.subr.mxu0 0.0
    %3229 = vmatpush1.msra.mxu0 %v2830
    %3230 = vmatprep.subr.mxu0 0.0
    %3231 = vmatpush1.msra.mxu0 %v2829
    %3232 = vmatprep.subr.mxu0 0.0
    %3233 = vmatpush1.msra.mxu0 %v2828
    %3234 = vmatprep.subr.mxu0 0.0
    %3235 = vmatpush1.msra.mxu0 %v2827
    %3236 = vmatprep.subr.mxu0 0.0
    %3237 = vmatpush1.msra.mxu0 %v2826
    %3238 = vmatprep.subr.mxu0 0.0
    %3239 = vmatpush1.msra.mxu0 %v2825
    %3240 = vmatprep.subr.mxu0 0.0
    %3241 = vmatpush1.msra.mxu0 %v2824
    %3242 = vmatprep.subr.mxu0 0.0
    %3243 = vmatpush1.msra.mxu0 %v2823
    %3244 = vmatprep.subr.mxu0 0.0
    %3245 = vmatpush1.msra.mxu0 %v2822
    %3246 = vmatprep.subr.mxu0 0.0
    %3247 = vmatpush2.msra.mxu0 %v2853
    %3248 = vmatprep.subr.mxu0 0.0
    %3249 = vmatpush2.msra.mxu0 %v2852
    %3250 = vmatprep.subr.mxu0 0.0
    %3251 = vmatpush2.msra.mxu0 %v2851
    %3252 = vmatprep.subr.mxu0 0.0
    %3253 = vmatpush2.msra.mxu0 %v2850
    %3254 = vmatprep.subr.mxu0 0.0
    %3255 = vmatpush2.msra.mxu0 %v2849
    %3256 = vmatprep.subr.mxu0 0.0
    %3257 = vmatpush2.msra.mxu0 %v2848
    %3258 = vmatprep.subr.mxu0 0.0
    %3259 = vmatpush2.msra.mxu0 %v2847
    %3260 = vmatprep.subr.mxu0 0.0
    %3261 = vmatpush2.msra.mxu0 %v2846
    %3262 = vmatprep.subr.mxu0 0.0
    %3263 = vmatpush2.msra.mxu0 %v2845
    %3264 = vmatprep.subr.mxu0 0.0
    %3265 = vmatpush2.msra.mxu0 %v2844
    %3266 = vmatprep.subr.mxu0 0.0
    %3267 = vmatpush2.msra.mxu0 %v2843
    %3268 = vmatprep.subr.mxu0 0.0
    %3269 = vmatpush2.msra.mxu0 %v2842
    %3270 = vmatprep.subr.mxu0 0.0
    %3271 = vmatpush2.msra.mxu0 %v2841
    %3272 = vmatprep.subr.mxu0 0.0
    %3273 = vmatpush2.msra.mxu0 %v2840
    %3274 = vmatprep.subr.mxu0 0.0
    %3275 = vmatpush2.msra.mxu0 %v2839
    %3276 = vmatprep.subr.mxu0 0.0
    %3277 = vmatpush2.msra.mxu0 %v2838
    %3278 = vmatprep.mubr.f32.mxu0 %v2701
    %3279 = vmatmul.mubr.f32.gmra.mxu0 %v2700
    %v3280 = vpop.f32.mrf.mxu0
    %v3281 = vadd.f32 %v3206, %v3280
    %v3282 = vpop.f32.mrf.mxu0
    %3283 = vmatprep.mubr.f32.mxu0 %v2717
    %3284 = vmatmul.mubr.f32.gmra.mxu0 %v2716
    %v3285 = vpop.f32.mrf.mxu0
    %v3286 = vadd.f32 %v3211, %v3285
    %v3287 = vpop.f32.mrf.mxu0
    %3288 = vdwg.mxu0
    %3289 = vmatprep.subr.mxu0 0.0
    %3290 = vmatpush1.msra.mxu0 %v2869
    %3291 = vmatprep.subr.mxu0 0.0
    %3292 = vmatpush1.msra.mxu0 %v2868
    %3293 = vmatprep.subr.mxu0 0.0
    %3294 = vmatpush1.msra.mxu0 %v2867
    %3295 = vmatprep.subr.mxu0 0.0
    %3296 = vmatpush1.msra.mxu0 %v2866
    %3297 = vmatprep.subr.mxu0 0.0
    %3298 = vmatpush1.msra.mxu0 %v2865
    %3299 = vmatprep.subr.mxu0 0.0
    %3300 = vmatpush1.msra.mxu0 %v2864
    %3301 = vmatprep.subr.mxu0 0.0
    %3302 = vmatpush1.msra.mxu0 %v2863
    %3303 = vmatprep.subr.mxu0 0.0
    %3304 = vmatpush1.msra.mxu0 %v2862
    %3305 = vmatprep.subr.mxu0 0.0
    %3306 = vmatpush1.msra.mxu0 %v2861
    %3307 = vmatprep.subr.mxu0 0.0
    %3308 = vmatpush1.msra.mxu0 %v2860
    %3309 = vmatprep.subr.mxu0 0.0
    %3310 = vmatpush1.msra.mxu0 %v2859
    %3311 = vmatprep.subr.mxu0 0.0
    %3312 = vmatpush1.msra.mxu0 %v2858
    %3313 = vmatprep.subr.mxu0 0.0
    %3314 = vmatpush1.msra.mxu0 %v2857
    %3315 = vmatprep.subr.mxu0 0.0
    %3316 = vmatpush1.msra.mxu0 %v2856
    %3317 = vmatprep.subr.mxu0 0.0
    %3318 = vmatpush1.msra.mxu0 %v2855
    %3319 = vmatprep.subr.mxu0 0.0
    %3320 = vmatpush1.msra.mxu0 %v2854
    %3321 = vmatprep.subr.mxu0 0.0
    %3322 = vmatpush2.msra.mxu0 %v2885
    %3323 = vmatprep.subr.mxu0 0.0
    %3324 = vmatpush2.msra.mxu0 %v2884
    %3325 = vmatprep.subr.mxu0 0.0
    %3326 = vmatpush2.msra.mxu0 %v2883
    %3327 = vmatprep.subr.mxu0 0.0
    %3328 = vmatpush2.msra.mxu0 %v2882
    %3329 = vmatprep.subr.mxu0 0.0
    %3330 = vmatpush2.msra.mxu0 %v2881
    %3331 = vmatprep.subr.mxu0 0.0
    %3332 = vmatpush2.msra.mxu0 %v2880
    %3333 = vmatprep.subr.mxu0 0.0
    %3334 = vmatpush2.msra.mxu0 %v2879
    %3335 = vmatprep.subr.mxu0 0.0
    %3336 = vmatpush2.msra.mxu0 %v2878
    %3337 = vmatprep.subr.mxu0 0.0
    %3338 = vmatpush2.msra.mxu0 %v2877
    %3339 = vmatprep.subr.mxu0 0.0
    %3340 = vmatpush2.msra.mxu0 %v2876
    %3341 = vmatprep.subr.mxu0 0.0
    %3342 = vmatpush2.msra.mxu0 %v2875
    %3343 = vmatprep.subr.mxu0 0.0
    %3344 = vmatpush2.msra.mxu0 %v2874
    %3345 = vmatprep.subr.mxu0 0.0
    %3346 = vmatpush2.msra.mxu0 %v2873
    %3347 = vmatprep.subr.mxu0 0.0
    %3348 = vmatpush2.msra.mxu0 %v2872
    %3349 = vmatprep.subr.mxu0 0.0
    %3350 = vmatpush2.msra.mxu0 %v2871
    %3351 = vmatprep.subr.mxu0 0.0
    %3352 = vmatpush2.msra.mxu0 %v2870
    %3353 = vmatprep.mubr.f32.mxu0 %v2703
    %3354 = vmatmul.mubr.f32.gmra.mxu0 %v2702
    %v3355 = vpop.f32.mrf.mxu0
    %v3356 = vadd.f32 %v3281, %v3355
    %v3357 = vpop.f32.mrf.mxu0
    %3358 = vmatprep.mubr.f32.mxu0 %v2719
    %3359 = vmatmul.mubr.f32.gmra.mxu0 %v2718
    %v3360 = vpop.f32.mrf.mxu0
    %v3361 = vadd.f32 %v3286, %v3360
    %v3362 = vpop.f32.mrf.mxu0
    %3363 = vdwg.mxu0
    %3364 = vmatprep.subr.mxu0 0.0
    %3365 = vmatpush1.msra.mxu0 %v2901
    %3366 = vmatprep.subr.mxu0 0.0
    %3367 = vmatpush1.msra.mxu0 %v2900
    %3368 = vmatprep.subr.mxu0 0.0
    %3369 = vmatpush1.msra.mxu0 %v2899
    %3370 = vmatprep.subr.mxu0 0.0
    %3371 = vmatpush1.msra.mxu0 %v2898
    %3372 = vmatprep.subr.mxu0 0.0
    %3373 = vmatpush1.msra.mxu0 %v2897
    %3374 = vmatprep.subr.mxu0 0.0
    %3375 = vmatpush1.msra.mxu0 %v2896
    %3376 = vmatprep.subr.mxu0 0.0
    %3377 = vmatpush1.msra.mxu0 %v2895
    %3378 = vmatprep.subr.mxu0 0.0
    %3379 = vmatpush1.msra.mxu0 %v2894
    %3380 = vmatprep.subr.mxu0 0.0
    %3381 = vmatpush1.msra.mxu0 %v2893
    %3382 = vmatprep.subr.mxu0 0.0
    %3383 = vmatpush1.msra.mxu0 %v2892
    %3384 = vmatprep.subr.mxu0 0.0
    %3385 = vmatpush1.msra.mxu0 %v2891
    %3386 = vmatprep.subr.mxu0 0.0
    %3387 = vmatpush1.msra.mxu0 %v2890
    %3388 = vmatprep.subr.mxu0 0.0
    %3389 = vmatpush1.msra.mxu0 %v2889
    %3390 = vmatprep.subr.mxu0 0.0
    %3391 = vmatpush1.msra.mxu0 %v2888
    %3392 = vmatprep.subr.mxu0 0.0
    %3393 = vmatpush1.msra.mxu0 %v2887
    %3394 = vmatprep.subr.mxu0 0.0
    %3395 = vmatpush1.msra.mxu0 %v2886
    %3396 = vmatprep.subr.mxu0 0.0
    %3397 = vmatpush2.msra.mxu0 %v2917
    %3398 = vmatprep.subr.mxu0 0.0
    %3399 = vmatpush2.msra.mxu0 %v2916
    %3400 = vmatprep.subr.mxu0 0.0
    %3401 = vmatpush2.msra.mxu0 %v2915
    %3402 = vmatprep.subr.mxu0 0.0
    %3403 = vmatpush2.msra.mxu0 %v2914
    %3404 = vmatprep.subr.mxu0 0.0
    %3405 = vmatpush2.msra.mxu0 %v2913
    %3406 = vmatprep.subr.mxu0 0.0
    %3407 = vmatpush2.msra.mxu0 %v2912
    %3408 = vmatprep.subr.mxu0 0.0
    %3409 = vmatpush2.msra.mxu0 %v2911
    %3410 = vmatprep.subr.mxu0 0.0
    %3411 = vmatpush2.msra.mxu0 %v2910
    %3412 = vmatprep.subr.mxu0 0.0
    %3413 = vmatpush2.msra.mxu0 %v2909
    %3414 = vmatprep.subr.mxu0 0.0
    %3415 = vmatpush2.msra.mxu0 %v2908
    %3416 = vmatprep.subr.mxu0 0.0
    %3417 = vmatpush2.msra.mxu0 %v2907
    %3418 = vmatprep.subr.mxu0 0.0
    %3419 = vmatpush2.msra.mxu0 %v2906
    %3420 = vmatprep.subr.mxu0 0.0
    %3421 = vmatpush2.msra.mxu0 %v2905
    %3422 = vmatprep.subr.mxu0 0.0
    %3423 = vmatpush2.msra.mxu0 %v2904
    %3424 = vmatprep.subr.mxu0 0.0
    %3425 = vmatpush2.msra.mxu0 %v2903
    %3426 = vmatprep.subr.mxu0 0.0
    %3427 = vmatpush2.msra.mxu0 %v2902
    %3428 = vmatprep.mubr.f32.mxu0 %v2705
    %3429 = vmatmul.mubr.f32.gmra.mxu0 %v2704
    %v3430 = vpop.f32.mrf.mxu0
    %v3431 = vadd.f32 %v3356, %v3430
    %v3432 = vpop.f32.mrf.mxu0
    %3433 = vmatprep.mubr.f32.mxu0 %v2721
    %3434 = vmatmul.mubr.f32.gmra.mxu0 %v2720
    %v3435 = vpop.f32.mrf.mxu0
    %v3436 = vadd.f32 %v3361, %v3435
    %v3437 = vpop.f32.mrf.mxu0
    %3438 = vdwg.mxu0
    %3439 = vmatprep.subr.mxu0 0.0
    %3440 = vmatpush1.msra.mxu0 %v2933
    %3441 = vmatprep.subr.mxu0 0.0
    %3442 = vmatpush1.msra.mxu0 %v2932
    %3443 = vmatprep.subr.mxu0 0.0
    %3444 = vmatpush1.msra.mxu0 %v2931
    %3445 = vmatprep.subr.mxu0 0.0
    %3446 = vmatpush1.msra.mxu0 %v2930
    %3447 = vmatprep.subr.mxu0 0.0
    %3448 = vmatpush1.msra.mxu0 %v2929
    %3449 = vmatprep.subr.mxu0 0.0
    %3450 = vmatpush1.msra.mxu0 %v2928
    %3451 = vmatprep.subr.mxu0 0.0
    %3452 = vmatpush1.msra.mxu0 %v2927
    %3453 = vmatprep.subr.mxu0 0.0
    %3454 = vmatpush1.msra.mxu0 %v2926
    %3455 = vmatprep.subr.mxu0 0.0
    %3456 = vmatpush1.msra.mxu0 %v2925
    %3457 = vmatprep.subr.mxu0 0.0
    %3458 = vmatpush1.msra.mxu0 %v2924
    %3459 = vmatprep.subr.mxu0 0.0
    %3460 = vmatpush1.msra.mxu0 %v2923
    %3461 = vmatprep.subr.mxu0 0.0
    %3462 = vmatpush1.msra.mxu0 %v2922
    %3463 = vmatprep.subr.mxu0 0.0
    %3464 = vmatpush1.msra.mxu0 %v2921
    %3465 = vmatprep.subr.mxu0 0.0
    %3466 = vmatpush1.msra.mxu0 %v2920
    %3467 = vmatprep.subr.mxu0 0.0
    %3468 = vmatpush1.msra.mxu0 %v2919
    %3469 = vmatprep.subr.mxu0 0.0
    %3470 = vmatpush1.msra.mxu0 %v2918
    %3471 = vmatprep.subr.mxu0 0.0
    %3472 = vmatpush2.msra.mxu0 %v2949
    %3473 = vmatprep.subr.mxu0 0.0
    %3474 = vmatpush2.msra.mxu0 %v2948
    %3475 = vmatprep.subr.mxu0 0.0
    %3476 = vmatpush2.msra.mxu0 %v2947
    %3477 = vmatprep.subr.mxu0 0.0
    %3478 = vmatpush2.msra.mxu0 %v2946
    %3479 = vmatprep.subr.mxu0 0.0
    %3480 = vmatpush2.msra.mxu0 %v2945
    %3481 = vmatprep.subr.mxu0 0.0
    %3482 = vmatpush2.msra.mxu0 %v2944
    %3483 = vmatprep.subr.mxu0 0.0
    %3484 = vmatpush2.msra.mxu0 %v2943
    %3485 = vmatprep.subr.mxu0 0.0
    %3486 = vmatpush2.msra.mxu0 %v2942
    %3487 = vmatprep.subr.mxu0 0.0
    %3488 = vmatpush2.msra.mxu0 %v2941
    %3489 = vmatprep.subr.mxu0 0.0
    %3490 = vmatpush2.msra.mxu0 %v2940
    %3491 = vmatprep.subr.mxu0 0.0
    %3492 = vmatpush2.msra.mxu0 %v2939
    %3493 = vmatprep.subr.mxu0 0.0
    %3494 = vmatpush2.msra.mxu0 %v2938
    %3495 = vmatprep.subr.mxu0 0.0
    %3496 = vmatpush2.msra.mxu0 %v2937
    %3497 = vmatprep.subr.mxu0 0.0
    %3498 = vmatpush2.msra.mxu0 %v2936
    %3499 = vmatprep.subr.mxu0 0.0
    %3500 = vmatpush2.msra.mxu0 %v2935
    %3501 = vmatprep.subr.mxu0 0.0
    %3502 = vmatpush2.msra.mxu0 %v2934
    %3503 = vmatprep.mubr.f32.mxu0 %v2707
    %3504 = vmatmul.mubr.f32.gmra.mxu0 %v2706
    %v3505 = vpop.f32.mrf.mxu0
    %v3506 = vadd.f32 %v3431, %v3505
    %v3507 = vpop.f32.mrf.mxu0
    %3508 = vmatprep.mubr.f32.mxu0 %v2723
    %3509 = vmatmul.mubr.f32.gmra.mxu0 %v2722
    %v3510 = vpop.f32.mrf.mxu0
    %v3511 = vadd.f32 %v3436, %v3510
    %v3512 = vpop.f32.mrf.mxu0
    %3513 = vdwg.mxu0
    %3514 = vmatprep.subr.mxu0 0.0
    %3515 = vmatpush1.msra.mxu0 %v2965
    %3516 = vmatprep.subr.mxu0 0.0
    %3517 = vmatpush1.msra.mxu0 %v2964
    %3518 = vmatprep.subr.mxu0 0.0
    %3519 = vmatpush1.msra.mxu0 %v2963
    %3520 = vmatprep.subr.mxu0 0.0
    %3521 = vmatpush1.msra.mxu0 %v2962
    %3522 = vmatprep.subr.mxu0 0.0
    %3523 = vmatpush1.msra.mxu0 %v2961
    %3524 = vmatprep.subr.mxu0 0.0
    %3525 = vmatpush1.msra.mxu0 %v2960
    %3526 = vmatprep.subr.mxu0 0.0
    %3527 = vmatpush1.msra.mxu0 %v2959
    %3528 = vmatprep.subr.mxu0 0.0
    %3529 = vmatpush1.msra.mxu0 %v2958
    %3530 = vmatprep.subr.mxu0 0.0
    %3531 = vmatpush1.msra.mxu0 %v2957
    %3532 = vmatprep.subr.mxu0 0.0
    %3533 = vmatpush1.msra.mxu0 %v2956
    %3534 = vmatprep.subr.mxu0 0.0
    %3535 = vmatpush1.msra.mxu0 %v2955
    %3536 = vmatprep.subr.mxu0 0.0
    %3537 = vmatpush1.msra.mxu0 %v2954
    %3538 = vmatprep.subr.mxu0 0.0
    %3539 = vmatpush1.msra.mxu0 %v2953
    %3540 = vmatprep.subr.mxu0 0.0
    %3541 = vmatpush1.msra.mxu0 %v2952
    %3542 = vmatprep.subr.mxu0 0.0
    %3543 = vmatpush1.msra.mxu0 %v2951
    %3544 = vmatprep.subr.mxu0 0.0
    %3545 = vmatpush1.msra.mxu0 %v2950
    %3546 = vmatprep.subr.mxu0 0.0
    %3547 = vmatpush2.msra.mxu0 %v2981
    %3548 = vmatprep.subr.mxu0 0.0
    %3549 = vmatpush2.msra.mxu0 %v2980
    %3550 = vmatprep.subr.mxu0 0.0
    %3551 = vmatpush2.msra.mxu0 %v2979
    %3552 = vmatprep.subr.mxu0 0.0
    %3553 = vmatpush2.msra.mxu0 %v2978
    %3554 = vmatprep.subr.mxu0 0.0
    %3555 = vmatpush2.msra.mxu0 %v2977
    %3556 = vmatprep.subr.mxu0 0.0
    %3557 = vmatpush2.msra.mxu0 %v2976
    %3558 = vmatprep.subr.mxu0 0.0
    %3559 = vmatpush2.msra.mxu0 %v2975
    %3560 = vmatprep.subr.mxu0 0.0
    %3561 = vmatpush2.msra.mxu0 %v2974
    %3562 = vmatprep.subr.mxu0 0.0
    %3563 = vmatpush2.msra.mxu0 %v2973
    %3564 = vmatprep.subr.mxu0 0.0
    %3565 = vmatpush2.msra.mxu0 %v2972
    %3566 = vmatprep.subr.mxu0 0.0
    %3567 = vmatpush2.msra.mxu0 %v2971
    %3568 = vmatprep.subr.mxu0 0.0
    %3569 = vmatpush2.msra.mxu0 %v2970
    %3570 = vmatprep.subr.mxu0 0.0
    %3571 = vmatpush2.msra.mxu0 %v2969
    %3572 = vmatprep.subr.mxu0 0.0
    %3573 = vmatpush2.msra.mxu0 %v2968
    %3574 = vmatprep.subr.mxu0 0.0
    %3575 = vmatpush2.msra.mxu0 %v2967
    %3576 = vmatprep.subr.mxu0 0.0
    %3577 = vmatpush2.msra.mxu0 %v2966
    %3578 = vmatprep.mubr.f32.mxu0 %v2709
    %3579 = vmatmul.mubr.f32.gmra.mxu0 %v2708
    %v3580 = vpop.f32.mrf.mxu0
    %v3581 = vadd.f32 %v3506, %v3580
    %v3582 = vpop.f32.mrf.mxu0
    %3583 = vmatprep.mubr.f32.mxu0 %v2725
    %3584 = vmatmul.mubr.f32.gmra.mxu0 %v2724
    %v3585 = vpop.f32.mrf.mxu0
    %v3586 = vadd.f32 %v3511, %v3585
    %v3587 = vpop.f32.mrf.mxu0
    %3588 = vdwg.mxu0
    %v3589 = vadd.f32 %v1864, %v3581
    %v3590 = vadd.f32 %v1865, %v3586
    %3591 = vst.msk [vmem:[#allocation2] sm:$0xff] %vm58, %v3589
    %3592 = vst.msk [vmem:[#allocation2 + $0x8] sm:$0xff] %vm58, %v3590
    // Predicated region
    $region58: #{tpu_custom_call.1} parent=1 // pred_check
      _
    $region59: #{tpu_custom_call.1} parent=1 // pred_check_branch
      %3594 = sbr.rel (0) target = $region61
    $region60: #{tpu_custom_call.1} parent=1 // pred_region
      %s3596 = ssub.s32 256, 256
      %3597 = vsyncadd [#allocation3], %s3596
      %s3598 = sshll.u32 [#allocation2], 4
      %s3599 = int_to_ptr.vmem [resolvable:$true] %s3598
      %3604 = dma.vmem_to_hbm [thread:$0]  %s3599, 256, %s14, [#allocation3], 128, 128, 8
    $region61: #{tpu_custom_call.1} parent=1 // pred_fallthru
      _
    // Predicated region
    $region62: #{tpu_custom_call.1} parent=1 // pred_check
      _
    $region63: #{tpu_custom_call.1} parent=1 // pred_check_branch
      %3606 = sbr.rel (0) target = $region65
    $region64: #{tpu_custom_call.1} parent=1 // pred_region
      %3607 = dma.done [#allocation3], 256
    $region65: #{tpu_custom_call.1} parent=1 // pred_fallthru
      _
    %3608 = vsyncpa [#allocation3], 1

</llo_original>
